<compile_context>
chip_gen: v5e
topology: v5e:2x2
jax: 0.10.0
libtpu: 0.0.40
codegen_flags: <defaults>
</compile_context>

<pallas_src>
import jax
import jax.numpy as jnp
from jax import lax
from jax.experimental import pallas as pl
from jax.experimental.pallas import tpu as pltpu

BN_EPS = 1e-5


# ---------------------------------------------------------------------------
# Fused kernel
# ---------------------------------------------------------------------------
def _make_kernel(meta):
    TB = meta["tb"]
    L0 = meta["l0"]
    stem = meta["stem"]
    blocks = meta["blocks"]
    pool = meta["pool"]
    gate = meta["gate"]
    mask_col = meta["mask_col"]
    scratch_index = meta["scratch_index"]

    def kernel(x_ref, w_ref, b_ref, mk_ref, o_ref, *scr):
        def weight(off, rows, cols):                      # bf16 (rows, cols), static slice
            return w_ref[off:off + rows, :cols]

        def bias(row, cols):                              # f32 (1, cols)
            return b_ref[row:row + 1, :cols]

        def bmask(rows, length, which):                   # f32 (rows, 1), 0/1 boundary mask
            c = mask_col[length] + which
            return mk_ref[:rows, c:c + 1]

        def shift_down(x):                                # out[i] = x[i-1], out[0] = 0
            z = jnp.zeros((1, x.shape[1]), x.dtype)
            return jnp.concatenate([z, x[:-1, :]], axis=0)

        def shift_up(x):                                  # out[i] = x[i+1], out[-1] = 0
            z = jnp.zeros((1, x.shape[1]), x.dtype)
            return jnp.concatenate([x[1:, :], z], axis=0)

        def conv_k3(x, length, w_off, cin, cout, b_row, residual=None, relu=True):
            """k=3 / pad=1 / stride=1 conv as ONE bf16 matmul on a lane-concatenated
            [x[i-1] | x[i] | x[i+1]] operand (sample-boundary rows zeroed by masks)."""
            m = x.shape[0]
            prev = shift_down(x) * bmask(m, length, 0)
            nxt = shift_up(x) * bmask(m, length, 1)
            wide = jnp.concatenate([prev, x, nxt], axis=1).astype(jnp.bfloat16)
            acc = jnp.dot(wide, weight(w_off, 3 * cin, cout),
                          preferred_element_type=jnp.float32)
            acc = acc + bias(b_row, cout)
            if residual is not None:
                acc = acc + residual
            return jnp.maximum(acc, 0.0) if relu else acc

        # ---- stem conv (operand pre-im2col'd on host -> (TB*L0, 3)) ----
        h = jnp.dot(x_ref[...], weight(stem["w"], 3, stem["cout"]),
                    preferred_element_type=jnp.float32)
        h = jnp.maximum(h + bias(stem["b"], stem["cout"]), 0.0)
        length = L0

        # ---- BasicBlocks (all activations stay in VMEM / vregs) ----
        for blk in blocks:
            cin, cout, lout = blk["cin"], blk["cout"], blk["lout"]
            if blk["stride"] == 1:
                out = conv_k3(h, length, blk["w1"], cin, cout, blk["b1"])
                sc_in = h
            else:
                # stride-2: stage h once, read back even/odd rows with strided
                # slices -> only lout output rows are ever computed.
                m_out = TB * lout
                buf = scr[scratch_index[(h.shape[0], cin)]]
                buf[...] = h
                even = buf[pl.ds(0, m_out, stride=2), :]   # x[2i]
                odd = buf[pl.ds(1, m_out, stride=2), :]    # x[2i+1]
                prev = shift_down(odd) * bmask(m_out, lout, 0)   # x[2i-1]
                wide = jnp.concatenate([prev, even, odd], axis=1).astype(jnp.bfloat16)
                acc = jnp.dot(wide, weight(blk["w1"], 3 * cin, cout),
                              preferred_element_type=jnp.float32)
                out = jnp.maximum(acc + bias(blk["b1"], cout), 0.0)
                sc_in = even
            if blk["has_sc"]:
                sc = jnp.dot(sc_in.astype(jnp.bfloat16),
                             weight(blk["wsc"], cin, cout),
                             preferred_element_type=jnp.float32)
                sc = sc + bias(blk["bsc"], cout)
            else:
                sc = h
            h = conv_k3(out, lout, blk["w2"], cout, cout, blk["b2"],
                        residual=sc, relu=True)
            length = lout

        # ---- head: AdaptiveAvgPool1d(1) as a tiny matmul + Linear + softmax ----
        hb = h.astype(jnp.bfloat16)
        pooled = jnp.dot(weight(pool["w"], pool["rows"], pool["cols"]), hb,
                         preferred_element_type=jnp.float32)          # (TB, feat)
        logits = jnp.dot(pooled.astype(jnp.bfloat16),
                         weight(gate["w"], gate["rows"], gate["cout"]),
                         preferred_element_type=jnp.float32)
        logits = logits + bias(gate["b"], gate["cout"])
        mx = jnp.max(logits, axis=-1, keepdims=True)
        e = jnp.exp(logits - mx)
        o_ref[...] = e / jnp.sum(e, axis=-1, keepdims=True)

    return kernel


# ---------------------------------------------------------------------------
# Host-side parameter packing (BN folding, weight/bias blobs, masks)
# ---------------------------------------------------------------------------
def pack_params(params, seq_len, num_experts=4, rows_per_step=256):
    """Fold BN into conv weights and pack everything into one bf16 weight blob,
    one f32 bias blob and one f32 boundary-mask table.  rows_per_step sets the
    matmul M dimension per grid step (256 fills the v6e/v7x MXU; 128 is enough
    for v5e)."""
    L = int(seq_len)
    assert L % 8 == 0, "TODO(synk): general seq_len needs ragged-length handling"
    TB = max(1, rows_per_step // L)
    M0 = TB * L

    w_entries, w_next = [], [0]

    def add_w(a):
        a = jnp.asarray(a, jnp.float32)
        off = w_next[0]
        w_entries.append((off, a))
        w_next[0] = ((off + a.shape[0] + 15) // 16) * 16   # keep slices tile-aligned
        return off

    b_entries = []

    def add_b(v):
        b_entries.append(jnp.asarray(v, jnp.float32).reshape(-1))
        return len(b_entries) - 1

    def fold3(w, scale):                                   # torch (Cout,Cin,3) -> (3*Cin,Cout)
        wf = w * scale[:, None, None]
        return jnp.transpose(wf, (2, 1, 0)).reshape(-1, wf.shape[0])

    stem = {"w": add_w(fold3(params["conv1_w"], params["bn1_s"])),
            "b": add_b(params["bn1_b"]), "cout": int(params["conv1_w"].shape[0])}
    flops = 2 * M0 * 3 * stem["cout"]

    blocks, scratch_shapes, scratch_index = [], [], {}
    lengths = {L}
    cur_len = L
    for layer in ("layer1", "layer2", "layer3"):
        for bp in params[layer]:
            stride = int(bp["stride"])
            cout, cin, _ = (int(s) for s in bp["conv1_w"].shape)
            has_sc = "sc_w" in bp
            out_len = (cur_len - 1) // 2 + 1 if stride == 2 else cur_len
            m_in, m_out = TB * cur_len, TB * out_len
            blk = {"stride": stride, "cin": cin, "cout": cout, "lout": out_len,
                   "has_sc": has_sc,
                   "w1": add_w(fold3(bp["conv1_w"], bp["bn1_s"])),
                   "b1": add_b(bp["bn1_b"]),
                   "w2": add_w(fold3(bp["conv2_w"], bp["bn2_s"])),
                   "b2": add_b(bp["bn2_b"])}
            if has_sc:
                wsc = bp["sc_w"] * bp["sc_s"][:, None, None]          # (Cout, Cin, 1)
                blk["wsc"] = add_w(jnp.transpose(wsc[:, :, 0], (1, 0)))
                blk["bsc"] = add_b(bp["sc_b"])
            if stride == 2:
                assert has_sc and cur_len % 2 == 0
                key = (m_in, cin)
                if key not in scratch_index:
                    scratch_index[key] = len(scratch_shapes)
                    scratch_shapes.append(key)
            blocks.append(blk)
            lengths.add(out_len)
            flops += 2 * m_out * 3 * cin * cout + 2 * m_out * 3 * cout * cout
            if has_sc:
                flops += 2 * m_out * cin * cout
            cur_len = out_len

    feat = int(params["gate_w"].shape[1])
    assert feat == blocks[-1]["cout"]
    m3 = TB * cur_len
    pool = {"w": add_w(jnp.kron(jnp.eye(TB), jnp.ones((1, cur_len))) / cur_len),
            "rows": TB, "cols": m3}
    gate = {"w": add_w(jnp.transpose(params["gate_w"], (1, 0))),
            "b": add_b(params["gate_b"]), "rows": feat, "cout": int(num_experts)}
    flops += 2 * TB * m3 * feat + 2 * TB * feat * num_experts

    # -- pack blobs --
    wcols = max(a.shape[1] for _, a in w_entries)
    wrows = max(off + a.shape[0] for off, a in w_entries)
    wblob = jnp.zeros((wrows, wcols), jnp.float32)
    for off, a in w_entries:
        wblob = wblob.at[off:off + a.shape[0], :a.shape[1]].set(a)
    wblob = wblob.astype(jnp.bfloat16)

    bcols = max(v.shape[0] for v in b_entries)
    bblob = jnp.zeros((len(b_entries), bcols), jnp.float32)
    for i, v in enumerate(b_entries):
        bblob = bblob.at[i, :v.shape[0]].set(v)

    mask_col = {}
    masks = jnp.zeros((M0, 2 * len(lengths)), jnp.float32)
    for idx, l in enumerate(sorted(lengths, reverse=True)):
        rows = TB * l
        r = jnp.arange(rows)
        masks = masks.at[:rows, 2 * idx].set((r % l != 0).astype(jnp.float32))
        masks = masks.at[:rows, 2 * idx + 1].set((r % l != l - 1).astype(jnp.float32))
        mask_col[l] = 2 * idx

    meta = {"tb": TB, "l0": L, "stem": stem, "blocks": blocks, "pool": pool,
            "gate": gate, "mask_col": mask_col, "scratch_index": scratch_index,
            "scratch_shapes": scratch_shapes, "flops_per_step": int(flops)}
    const_bytes = int(wblob.size) * 2 + int(bblob.size) * 4 + int(masks.size) * 4
    return {"meta": meta, "wblob": wblob, "bblob": bblob, "masks": masks,
            "const_bytes": const_bytes}


# ---------------------------------------------------------------------------
# Forward wrapper
# ---------------------------------------------------------------------------
def nlpr_forward(x_ncl, packed):
    """x_ncl: (N, 1, L) PyTorch NCL layout.  Returns (N, 1, num_experts)."""
    meta = packed["meta"]
    TB, L = meta["tb"], meta["l0"]
    E = meta["gate"]["cout"]
    N, cin0, Lx = x_ncl.shape
    assert cin0 == 1 and Lx == L

    n_pad = ((N + TB - 1) // TB) * TB
    x2 = x_ncl[:, 0, :].astype(jnp.float32)
    if n_pad > N:
        x2 = jnp.concatenate([x2, jnp.zeros((n_pad - N, L), jnp.float32)], axis=0)
    # im2col of the raw 1-channel input only (tiny); all later convs build their
    # shifted operands inside the kernel.
    xp = jnp.pad(x2, ((0, 0), (1, 1)))
    xcols = jnp.stack([xp[:, d:d + L] for d in range(3)], axis=-1)
    xcols = xcols.reshape(n_pad * L, 3).astype(jnp.bfloat16)

    wblob, bblob, masks = packed["wblob"], packed["bblob"], packed["masks"]
    n_steps = n_pad // TB
    out = pl.pallas_call(
        _make_kernel(meta),
        grid=(n_steps,),
        out_shape=jax.ShapeDtypeStruct((n_pad, E), jnp.float32),
        in_specs=[
            pl.BlockSpec((TB * L, 3), lambda b: (b, 0)),
            pl.BlockSpec(wblob.shape, lambda b: (0, 0)),     # resident packed weights
            pl.BlockSpec(bblob.shape, lambda b: (0, 0)),     # resident packed biases
            pl.BlockSpec(masks.shape, lambda b: (0, 0)),     # resident boundary masks
        ],
        out_specs=pl.BlockSpec((TB, E), lambda b: (b, 0)),
        scratch_shapes=[pltpu.VMEM(s, jnp.float32) for s in meta["scratch_shapes"]],
        compiler_params=pltpu.CompilerParams(dimension_semantics=("parallel",)),
        cost_estimate=pl.CostEstimate(
            flops=n_steps * meta["flops_per_step"],
            transcendentals=n_pad * E,
            bytes_accessed=packed["const_bytes"] + int(xcols.size) * 2 + n_pad * E * 4),
    )(xcols, wblob, bblob, masks)
    return out[:N].reshape(N, 1, E)


# ---------------------------------------------------------------------------
# Pure-JAX reference (same semantics: BasicBlock, eval-mode BN folded scale/bias)
# ---------------------------------------------------------------------------
def _ref_conv1d(x, w, stride, padding):
    return lax.conv_general_dilated(
        x, w, window_strides=(stride,), padding=[(padding, padding)],
        dimension_numbers=("NCH", "OIH", "NCH"))


def nlpr_reference(x, params):
    def bn(y, s, b):
        return y * s[None, :, None] + b[None, :, None]

    h = jax.nn.relu(bn(_ref_conv1d(x, params["conv1_w"], 1, 1),
                       params["bn1_s"], params["bn1_b"]))
    for layer in ("layer1", "layer2", "layer3"):
        for bp in params[layer]:
            out = jax.nn.relu(bn(_ref_conv1d(h, bp["conv1_w"], bp["stride"], 1),
                                 bp["bn1_s"], bp["bn1_b"]))
            out = bn(_ref_conv1d(out, bp["conv2_w"], 1, 1), bp["bn2_s"], bp["bn2_b"])
            if "sc_w" in bp:
                sc = bn(_ref_conv1d(h, bp["sc_w"], bp["stride"], 0),
                        bp["sc_s"], bp["sc_b"])
            else:
                sc = h
            h = jax.nn.relu(out + sc)
    pooled = jnp.mean(h, axis=-1)
    logits = pooled @ params["gate_w"].T + params["gate_b"]
    return jax.nn.softmax(logits, axis=-1)[:, None, :]


# ---------------------------------------------------------------------------
# Parameter initialization (deterministic, synthetic)
# ---------------------------------------------------------------------------
def _conv_init(key, shape):
    cout, cin, k = shape
    fan_in = cin * k
    return jax.random.normal(key, shape, jnp.float32) * (2.0 / fan_in) ** 0.5


def _bn_init(key, c):
    k1, k2 = jax.random.split(key)
    gamma = 1.0 + 0.05 * jax.random.normal(k1, (c,), jnp.float32)
    beta = 0.05 * jax.random.normal(k2, (c,), jnp.float32)
    # eval-mode BatchNorm1d with fresh running stats (mean=0, var=1)
    return gamma / jnp.sqrt(1.0 + BN_EPS), beta


def _make_block_params(key, in_planes, planes, stride):
    ks = jax.random.split(key, 6)
    p = {"stride": stride,
         "conv1_w": _conv_init(ks[0], (planes, in_planes, 3)),
         "conv2_w": _conv_init(ks[2], (planes, planes, 3))}
    p["bn1_s"], p["bn1_b"] = _bn_init(ks[1], planes)
    p["bn2_s"], p["bn2_b"] = _bn_init(ks[3], planes)
    if stride != 1 or in_planes != planes:
        p["sc_w"] = _conv_init(ks[4], (planes, in_planes, 1))
        p["sc_s"], p["sc_b"] = _bn_init(ks[5], planes)
    return p


def init_params(key, num_blocks=(1, 1, 1), num_experts=4):
    keys = jax.random.split(key, 2 + sum(num_blocks) + 2)
    params = {"conv1_w": _conv_init(keys[0], (16, 1, 3))}
    params["bn1_s"], params["bn1_b"] = _bn_init(keys[1], 16)

    in_planes = 16
    kidx = 2
    layer_cfg = (("layer1", 16, 1), ("layer2", 32, 2), ("layer3", 64, 2))
    for li, (name, planes, stride) in enumerate(layer_cfg):
        strides = [stride] + [1] * (num_blocks[li] - 1)
        blocks = []
        for s in strides:
            blocks.append(_make_block_params(keys[kidx], in_planes, planes, s))
            in_planes = planes          # BasicBlock expansion = 1
            kidx += 1
        params[name] = blocks

    params["gate_w"] = (jax.random.normal(keys[kidx], (num_experts, 64), jnp.float32)
                        * (1.0 / 64.0) ** 0.5)
    params["gate_b"] = 0.01 * jax.random.normal(keys[kidx + 1], (num_experts,),
                                                jnp.float32)
    return params


# ---------------------------------------------------------------------------
if __name__ == "__main__":
    key = jax.random.PRNGKey(0)
    kp, kx = jax.random.split(key)

    params = init_params(kp, num_blocks=(1, 1, 1), num_experts=4)

    N, L = 2, 16
    x = jax.random.normal(kx, (N, 1, L), jnp.float32)   # PyTorch NCL input

    packed = pack_params(params, seq_len=L, num_experts=4)
    out = jax.block_until_ready(nlpr_forward(x, packed))

    assert out.shape == (N, 1, 4), out.shape
    # softmax rows sum to 1
    assert jnp.allclose(jnp.sum(out, axis=-1), 1.0, atol=1e-5)
    # tolerance check vs. pure-JAX reference (bf16 operands, f32 accumulation)
    ref = jax.block_until_ready(nlpr_reference(x, params))
    assert float(jnp.max(jnp.abs(out - ref))) < 5e-2, float(jnp.max(jnp.abs(out - ref)))
    print("KERNEL_OK")
</pallas_src>

<mosaic_0001>
module attributes {stable_mosaic.version = 11 : i64} {
  func.func @kernel(%arg0: i32, %arg1: memref<256x3xbf16, #tpu.memory_space<vmem>>, %arg2: memref<672x64xbf16, #tpu.memory_space<vmem>>, %arg3: memref<10x64xf32, #tpu.memory_space<vmem>>, %arg4: memref<256x6xf32, #tpu.memory_space<vmem>>, %arg5: memref<16x4xf32, #tpu.memory_space<vmem>>, %arg6: memref<256x16xf32, #tpu.memory_space<vmem>>, %arg7: memref<128x32xf32, #tpu.memory_space<vmem>>) attributes {dimension_semantics = [#tpu.dimension_semantics<parallel>], iteration_bounds = array<i64: 1>, scalar_prefetch = 0 : i64, scratch_operands = 2 : i64, tpu.core_type = #tpu.core_type<tc>, window_params = [{transform_indices = @transform_0, window_bounds = array<i64: 256, 3>}, {pipeline_mode = #tpu.pipeline_mode<synchronous>, transform_indices = @transform_1, window_bounds = array<i64: 672, 64>}, {pipeline_mode = #tpu.pipeline_mode<synchronous>, transform_indices = @transform_2, window_bounds = array<i64: 10, 64>}, {pipeline_mode = #tpu.pipeline_mode<synchronous>, transform_indices = @transform_3, window_bounds = array<i64: 256, 6>}, {transform_indices = @transform_4, window_bounds = array<i64: 16, 4>}]} {
    %c0 = arith.constant 0 : index
    %c0_0 = arith.constant 0 : index
    %0 = vector.load %arg1[%c0, %c0_0] : memref<256x3xbf16, #tpu.memory_space<vmem>>, vector<256x3xbf16>
    %c0_1 = arith.constant 0 : index
    %c0_2 = arith.constant 0 : index
    %1 = vector.load %arg2[%c0_1, %c0_2] : memref<672x64xbf16, #tpu.memory_space<vmem>>, vector<3x16xbf16>
    %cst = arith.constant dense<0.000000e+00> : vector<256x16xf32>
    %2 = tpu.matmul %0, %1, %cst {dimension_numbers = #tpu.dot_dimension_numbers<[1], [0], [0], [1], [0, 0, 1, 1], [], []>} : vector<256x3xbf16>, vector<3x16xbf16>, vector<256x16xf32> -> vector<256x16xf32>
    %c0_3 = arith.constant 0 : index
    %c0_4 = arith.constant 0 : index
    %3 = vector.load %arg3[%c0_3, %c0_4] : memref<10x64xf32, #tpu.memory_space<vmem>>, vector<1x16xf32>
    %4 = vector.broadcast %3 : vector<1x16xf32> to vector<256x16xf32>
    %5 = arith.addf %2, %4 : vector<256x16xf32>
    %cst_5 = arith.constant 0.000000e+00 : f32
    %6 = vector.broadcast %cst_5 : f32 to vector<256x16xf32>
    %7 = arith.maximumf %5, %6 : vector<256x16xf32>
    %cst_6 = arith.constant 0.000000e+00 : f32
    %8 = vector.broadcast %cst_6 : f32 to vector<1x16xf32>
    %9 = vector.extract_strided_slice %7 {offsets = [0, 0], sizes = [255, 16], strides = [1, 1]} : vector<256x16xf32> to vector<255x16xf32>
    %10 = tpu.concatenate %8, %9 in 0 : vector<1x16xf32>, vector<255x16xf32> -> vector<256x16xf32>
    %c0_7 = arith.constant 0 : index
    %c0_8 = arith.constant 0 : index
    %11 = vector.load %arg4[%c0_7, %c0_8] : memref<256x6xf32, #tpu.memory_space<vmem>>, vector<256x1xf32>
    %12 = vector.broadcast %11 : vector<256x1xf32> to vector<256x16xf32>
    %13 = arith.mulf %10, %12 : vector<256x16xf32>
    %cst_9 = arith.constant 0.000000e+00 : f32
    %14 = vector.broadcast %cst_9 : f32 to vector<1x16xf32>
    %15 = vector.extract_strided_slice %7 {offsets = [1, 0], sizes = [255, 16], strides = [1, 1]} : vector<256x16xf32> to vector<255x16xf32>
    %16 = tpu.concatenate %15, %14 in 0 : vector<255x16xf32>, vector<1x16xf32> -> vector<256x16xf32>
    %c0_10 = arith.constant 0 : index
    %c1 = arith.constant 1 : index
    %17 = vector.load %arg4[%c0_10, %c1] : memref<256x6xf32, #tpu.memory_space<vmem>>, vector<256x1xf32>
    %18 = vector.broadcast %17 : vector<256x1xf32> to vector<256x16xf32>
    %19 = arith.mulf %16, %18 : vector<256x16xf32>
    %20 = tpu.concatenate %13, %7, %19 in 1 : vector<256x16xf32>, vector<256x16xf32>, vector<256x16xf32> -> vector<256x48xf32>
    %21 = arith.truncf %20 : vector<256x48xf32> to vector<256x48xbf16>
    %c16 = arith.constant 16 : index
    %c0_11 = arith.constant 0 : index
    %22 = vector.load %arg2[%c16, %c0_11] : memref<672x64xbf16, #tpu.memory_space<vmem>>, vector<48x16xbf16>
    %cst_12 = arith.constant dense<0.000000e+00> : vector<256x16xf32>
    %23 = tpu.matmul %21, %22, %cst_12 {dimension_numbers = #tpu.dot_dimension_numbers<[1], [0], [0], [1], [0, 0, 1, 1], [], []>} : vector<256x48xbf16>, vector<48x16xbf16>, vector<256x16xf32> -> vector<256x16xf32>
    %c1_13 = arith.constant 1 : index
    %c0_14 = arith.constant 0 : index
    %24 = vector.load %arg3[%c1_13, %c0_14] : memref<10x64xf32, #tpu.memory_space<vmem>>, vector<1x16xf32>
    %25 = vector.broadcast %24 : vector<1x16xf32> to vector<256x16xf32>
    %26 = arith.addf %23, %25 : vector<256x16xf32>
    %cst_15 = arith.constant 0.000000e+00 : f32
    %27 = vector.broadcast %cst_15 : f32 to vector<256x16xf32>
    %28 = arith.maximumf %26, %27 : vector<256x16xf32>
    %cst_16 = arith.constant 0.000000e+00 : f32
    %29 = vector.broadcast %cst_16 : f32 to vector<1x16xf32>
    %30 = vector.extract_strided_slice %28 {offsets = [0, 0], sizes = [255, 16], strides = [1, 1]} : vector<256x16xf32> to vector<255x16xf32>
    %31 = tpu.concatenate %29, %30 in 0 : vector<1x16xf32>, vector<255x16xf32> -> vector<256x16xf32>
    %c0_17 = arith.constant 0 : index
    %c0_18 = arith.constant 0 : index
    %32 = vector.load %arg4[%c0_17, %c0_18] : memref<256x6xf32, #tpu.memory_space<vmem>>, vector<256x1xf32>
    %33 = vector.broadcast %32 : vector<256x1xf32> to vector<256x16xf32>
    %34 = arith.mulf %31, %33 : vector<256x16xf32>
    %cst_19 = arith.constant 0.000000e+00 : f32
    %35 = vector.broadcast %cst_19 : f32 to vector<1x16xf32>
    %36 = vector.extract_strided_slice %28 {offsets = [1, 0], sizes = [255, 16], strides = [1, 1]} : vector<256x16xf32> to vector<255x16xf32>
    %37 = tpu.concatenate %36, %35 in 0 : vector<255x16xf32>, vector<1x16xf32> -> vector<256x16xf32>
    %c0_20 = arith.constant 0 : index
    %c1_21 = arith.constant 1 : index
    %38 = vector.load %arg4[%c0_20, %c1_21] : memref<256x6xf32, #tpu.memory_space<vmem>>, vector<256x1xf32>
    %39 = vector.broadcast %38 : vector<256x1xf32> to vector<256x16xf32>
    %40 = arith.mulf %37, %39 : vector<256x16xf32>
    %41 = tpu.concatenate %34, %28, %40 in 1 : vector<256x16xf32>, vector<256x16xf32>, vector<256x16xf32> -> vector<256x48xf32>
    %42 = arith.truncf %41 : vector<256x48xf32> to vector<256x48xbf16>
    %c64 = arith.constant 64 : index
    %c0_22 = arith.constant 0 : index
    %43 = vector.load %arg2[%c64, %c0_22] : memref<672x64xbf16, #tpu.memory_space<vmem>>, vector<48x16xbf16>
    %cst_23 = arith.constant dense<0.000000e+00> : vector<256x16xf32>
    %44 = tpu.matmul %42, %43, %cst_23 {dimension_numbers = #tpu.dot_dimension_numbers<[1], [0], [0], [1], [0, 0, 1, 1], [], []>} : vector<256x48xbf16>, vector<48x16xbf16>, vector<256x16xf32> -> vector<256x16xf32>
    %c2 = arith.constant 2 : index
    %c0_24 = arith.constant 0 : index
    %45 = vector.load %arg3[%c2, %c0_24] : memref<10x64xf32, #tpu.memory_space<vmem>>, vector<1x16xf32>
    %46 = vector.broadcast %45 : vector<1x16xf32> to vector<256x16xf32>
    %47 = arith.addf %44, %46 : vector<256x16xf32>
    %48 = arith.addf %47, %7 : vector<256x16xf32>
    %cst_25 = arith.constant 0.000000e+00 : f32
    %49 = vector.broadcast %cst_25 : f32 to vector<256x16xf32>
    %50 = arith.maximumf %48, %49 : vector<256x16xf32>
    %c0_26 = arith.constant 0 : index
    %c0_27 = arith.constant 0 : index
    %51 = vector.load %arg6[%c0_26, %c0_27] : memref<256x16xf32, #tpu.memory_space<vmem>>, vector<256x16xf32>
    tpu.vector_store %arg6[%c0_26, %c0_27], %50 {strides = array<i32>} : memref<256x16xf32, #tpu.memory_space<vmem>>, vector<256x16xf32>,
    %c0_28 = arith.constant 0 : index
    %c0_29 = arith.constant 0 : index
    %52 = tpu.strided_load %arg6[%c0_28, %c0_29] {strides = array<i32: 2, 1>} : memref<256x16xf32, #tpu.memory_space<vmem>>, vector<128x16xf32>
    %c1_30 = arith.constant 1 : index
    %c0_31 = arith.constant 0 : index
    %53 = tpu.strided_load %arg6[%c1_30, %c0_31] {strides = array<i32: 2, 1>} : memref<256x16xf32, #tpu.memory_space<vmem>>, vector<128x16xf32>
    %cst_32 = arith.constant 0.000000e+00 : f32
    %54 = vector.broadcast %cst_32 : f32 to vector<1x16xf32>
    %55 = vector.extract_strided_slice %53 {offsets = [0, 0], sizes = [127, 16], strides = [1, 1]} : vector<128x16xf32> to vector<127x16xf32>
    %56 = tpu.concatenate %54, %55 in 0 : vector<1x16xf32>, vector<127x16xf32> -> vector<128x16xf32>
    %c0_33 = arith.constant 0 : index
    %c2_34 = arith.constant 2 : index
    %57 = vector.load %arg4[%c0_33, %c2_34] : memref<256x6xf32, #tpu.memory_space<vmem>>, vector<128x1xf32>
    %58 = vector.broadcast %57 : vector<128x1xf32> to vector<128x16xf32>
    %59 = arith.mulf %56, %58 : vector<128x16xf32>
    %60 = tpu.concatenate %59, %52, %53 in 1 : vector<128x16xf32>, vector<128x16xf32>, vector<128x16xf32> -> vector<128x48xf32>
    %61 = arith.truncf %60 : vector<128x48xf32> to vector<128x48xbf16>
    %c112 = arith.constant 112 : index
    %c0_35 = arith.constant 0 : index
    %62 = vector.load %arg2[%c112, %c0_35] : memref<672x64xbf16, #tpu.memory_space<vmem>>, vector<48x32xbf16>
    %cst_36 = arith.constant dense<0.000000e+00> : vector<128x32xf32>
    %63 = tpu.matmul %61, %62, %cst_36 {dimension_numbers = #tpu.dot_dimension_numbers<[1], [0], [0], [1], [0, 0, 1, 1], [], []>} : vector<128x48xbf16>, vector<48x32xbf16>, vector<128x32xf32> -> vector<128x32xf32>
    %c3 = arith.constant 3 : index
    %c0_37 = arith.constant 0 : index
    %64 = vector.load %arg3[%c3, %c0_37] : memref<10x64xf32, #tpu.memory_space<vmem>>, vector<1x32xf32>
    %65 = vector.broadcast %64 : vector<1x32xf32> to vector<128x32xf32>
    %66 = arith.addf %63, %65 : vector<128x32xf32>
    %cst_38 = arith.constant 0.000000e+00 : f32
    %67 = vector.broadcast %cst_38 : f32 to vector<128x32xf32>
    %68 = arith.maximumf %66, %67 : vector<128x32xf32>
    %69 = arith.truncf %52 : vector<128x16xf32> to vector<128x16xbf16>
    %c256 = arith.constant 256 : index
    %c0_39 = arith.constant 0 : index
    %70 = vector.load %arg2[%c256, %c0_39] : memref<672x64xbf16, #tpu.memory_space<vmem>>, vector<16x32xbf16>
    %cst_40 = arith.constant dense<0.000000e+00> : vector<128x32xf32>
    %71 = tpu.matmul %69, %70, %cst_40 {dimension_numbers = #tpu.dot_dimension_numbers<[1], [0], [0], [1], [0, 0, 1, 1], [], []>} : vector<128x16xbf16>, vector<16x32xbf16>, vector<128x32xf32> -> vector<128x32xf32>
    %c5 = arith.constant 5 : index
    %c0_41 = arith.constant 0 : index
    %72 = vector.load %arg3[%c5, %c0_41] : memref<10x64xf32, #tpu.memory_space<vmem>>, vector<1x32xf32>
    %73 = vector.broadcast %72 : vector<1x32xf32> to vector<128x32xf32>
    %74 = arith.addf %71, %73 : vector<128x32xf32>
    %cst_42 = arith.constant 0.000000e+00 : f32
    %75 = vector.broadcast %cst_42 : f32 to vector<1x32xf32>
    %76 = vector.extract_strided_slice %68 {offsets = [0, 0], sizes = [127, 32], strides = [1, 1]} : vector<128x32xf32> to vector<127x32xf32>
    %77 = tpu.concatenate %75, %76 in 0 : vector<1x32xf32>, vector<127x32xf32> -> vector<128x32xf32>
    %c0_43 = arith.constant 0 : index
    %c2_44 = arith.constant 2 : index
    %78 = vector.load %arg4[%c0_43, %c2_44] : memref<256x6xf32, #tpu.memory_space<vmem>>, vector<128x1xf32>
    %79 = vector.broadcast %78 : vector<128x1xf32> to vector<128x32xf32>
    %80 = arith.mulf %77, %79 : vector<128x32xf32>
    %cst_45 = arith.constant 0.000000e+00 : f32
    %81 = vector.broadcast %cst_45 : f32 to vector<1x32xf32>
    %82 = vector.extract_strided_slice %68 {offsets = [1, 0], sizes = [127, 32], strides = [1, 1]} : vector<128x32xf32> to vector<127x32xf32>
    %83 = tpu.concatenate %82, %81 in 0 : vector<127x32xf32>, vector<1x32xf32> -> vector<128x32xf32>
    %c0_46 = arith.constant 0 : index
    %c3_47 = arith.constant 3 : index
    %84 = vector.load %arg4[%c0_46, %c3_47] : memref<256x6xf32, #tpu.memory_space<vmem>>, vector<128x1xf32>
    %85 = vector.broadcast %84 : vector<128x1xf32> to vector<128x32xf32>
    %86 = arith.mulf %83, %85 : vector<128x32xf32>
    %87 = tpu.concatenate %80, %68, %86 in 1 : vector<128x32xf32>, vector<128x32xf32>, vector<128x32xf32> -> vector<128x96xf32>
    %88 = arith.truncf %87 : vector<128x96xf32> to vector<128x96xbf16>
    %c160 = arith.constant 160 : index
    %c0_48 = arith.constant 0 : index
    %89 = vector.load %arg2[%c160, %c0_48] : memref<672x64xbf16, #tpu.memory_space<vmem>>, vector<96x32xbf16>
    %cst_49 = arith.constant dense<0.000000e+00> : vector<128x32xf32>
    %90 = tpu.matmul %88, %89, %cst_49 {dimension_numbers = #tpu.dot_dimension_numbers<[1], [0], [0], [1], [0, 0, 1, 1], [], []>} : vector<128x96xbf16>, vector<96x32xbf16>, vector<128x32xf32> -> vector<128x32xf32>
    %c4 = arith.constant 4 : index
    %c0_50 = arith.constant 0 : index
    %91 = vector.load %arg3[%c4, %c0_50] : memref<10x64xf32, #tpu.memory_space<vmem>>, vector<1x32xf32>
    %92 = vector.broadcast %91 : vector<1x32xf32> to vector<128x32xf32>
    %93 = arith.addf %90, %92 : vector<128x32xf32>
    %94 = arith.addf %93, %74 : vector<128x32xf32>
    %cst_51 = arith.constant 0.000000e+00 : f32
    %95 = vector.broadcast %cst_51 : f32 to vector<128x32xf32>
    %96 = arith.maximumf %94, %95 : vector<128x32xf32>
    %c0_52 = arith.constant 0 : index
    %c0_53 = arith.constant 0 : index
    %97 = vector.load %arg7[%c0_52, %c0_53] : memref<128x32xf32, #tpu.memory_space<vmem>>, vector<128x32xf32>
    tpu.vector_store %arg7[%c0_52, %c0_53], %96 {strides = array<i32>} : memref<128x32xf32, #tpu.memory_space<vmem>>, vector<128x32xf32>,
    %c0_54 = arith.constant 0 : index
    %c0_55 = arith.constant 0 : index
    %98 = tpu.strided_load %arg7[%c0_54, %c0_55] {strides = array<i32: 2, 1>} : memref<128x32xf32, #tpu.memory_space<vmem>>, vector<64x32xf32>
    %c1_56 = arith.constant 1 : index
    %c0_57 = arith.constant 0 : index
    %99 = tpu.strided_load %arg7[%c1_56, %c0_57] {strides = array<i32: 2, 1>} : memref<128x32xf32, #tpu.memory_space<vmem>>, vector<64x32xf32>
    %cst_58 = arith.constant 0.000000e+00 : f32
    %100 = vector.broadcast %cst_58 : f32 to vector<1x32xf32>
    %101 = vector.extract_strided_slice %99 {offsets = [0, 0], sizes = [63, 32], strides = [1, 1]} : vector<64x32xf32> to vector<63x32xf32>
    %102 = tpu.concatenate %100, %101 in 0 : vector<1x32xf32>, vector<63x32xf32> -> vector<64x32xf32>
    %c0_59 = arith.constant 0 : index
    %c4_60 = arith.constant 4 : index
    %103 = vector.load %arg4[%c0_59, %c4_60] : memref<256x6xf32, #tpu.memory_space<vmem>>, vector<64x1xf32>
    %104 = vector.broadcast %103 : vector<64x1xf32> to vector<64x32xf32>
    %105 = arith.mulf %102, %104 : vector<64x32xf32>
    %106 = tpu.concatenate %105, %98, %99 in 1 : vector<64x32xf32>, vector<64x32xf32>, vector<64x32xf32> -> vector<64x96xf32>
    %107 = arith.truncf %106 : vector<64x96xf32> to vector<64x96xbf16>
    %c272 = arith.constant 272 : index
    %c0_61 = arith.constant 0 : index
    %108 = vector.load %arg2[%c272, %c0_61] : memref<672x64xbf16, #tpu.memory_space<vmem>>, vector<96x64xbf16>
    %cst_62 = arith.constant dense<0.000000e+00> : vector<64x64xf32>
    %109 = tpu.matmul %107, %108, %cst_62 {dimension_numbers = #tpu.dot_dimension_numbers<[1], [0], [0], [1], [0, 0, 1, 1], [], []>} : vector<64x96xbf16>, vector<96x64xbf16>, vector<64x64xf32> -> vector<64x64xf32>
    %c6 = arith.constant 6 : index
    %c0_63 = arith.constant 0 : index
    %110 = vector.load %arg3[%c6, %c0_63] : memref<10x64xf32, #tpu.memory_space<vmem>>, vector<1x64xf32>
    %111 = vector.broadcast %110 : vector<1x64xf32> to vector<64x64xf32>
    %112 = arith.addf %109, %111 : vector<64x64xf32>
    %cst_64 = arith.constant 0.000000e+00 : f32
    %113 = vector.broadcast %cst_64 : f32 to vector<64x64xf32>
    %114 = arith.maximumf %112, %113 : vector<64x64xf32>
    %115 = arith.truncf %98 : vector<64x32xf32> to vector<64x32xbf16>
    %c560 = arith.constant 560 : index
    %c0_65 = arith.constant 0 : index
    %116 = vector.load %arg2[%c560, %c0_65] : memref<672x64xbf16, #tpu.memory_space<vmem>>, vector<32x64xbf16>
    %cst_66 = arith.constant dense<0.000000e+00> : vector<64x64xf32>
    %117 = tpu.matmul %115, %116, %cst_66 {dimension_numbers = #tpu.dot_dimension_numbers<[1], [0], [0], [1], [0, 0, 1, 1], [], []>} : vector<64x32xbf16>, vector<32x64xbf16>, vector<64x64xf32> -> vector<64x64xf32>
    %c8 = arith.constant 8 : index
    %c0_67 = arith.constant 0 : index
    %118 = vector.load %arg3[%c8, %c0_67] : memref<10x64xf32, #tpu.memory_space<vmem>>, vector<1x64xf32>
    %119 = vector.broadcast %118 : vector<1x64xf32> to vector<64x64xf32>
    %120 = arith.addf %117, %119 : vector<64x64xf32>
    %cst_68 = arith.constant 0.000000e+00 : f32
    %121 = vector.broadcast %cst_68 : f32 to vector<1x64xf32>
    %122 = vector.extract_strided_slice %114 {offsets = [0, 0], sizes = [63, 64], strides = [1, 1]} : vector<64x64xf32> to vector<63x64xf32>
    %123 = tpu.concatenate %121, %122 in 0 : vector<1x64xf32>, vector<63x64xf32> -> vector<64x64xf32>
    %c0_69 = arith.constant 0 : index
    %c4_70 = arith.constant 4 : index
    %124 = vector.load %arg4[%c0_69, %c4_70] : memref<256x6xf32, #tpu.memory_space<vmem>>, vector<64x1xf32>
    %125 = vector.broadcast %124 : vector<64x1xf32> to vector<64x64xf32>
    %126 = arith.mulf %123, %125 : vector<64x64xf32>
    %cst_71 = arith.constant 0.000000e+00 : f32
    %127 = vector.broadcast %cst_71 : f32 to vector<1x64xf32>
    %128 = vector.extract_strided_slice %114 {offsets = [1, 0], sizes = [63, 64], strides = [1, 1]} : vector<64x64xf32> to vector<63x64xf32>
    %129 = tpu.concatenate %128, %127 in 0 : vector<63x64xf32>, vector<1x64xf32> -> vector<64x64xf32>
    %c0_72 = arith.constant 0 : index
    %c5_73 = arith.constant 5 : index
    %130 = vector.load %arg4[%c0_72, %c5_73] : memref<256x6xf32, #tpu.memory_space<vmem>>, vector<64x1xf32>
    %131 = vector.broadcast %130 : vector<64x1xf32> to vector<64x64xf32>
    %132 = arith.mulf %129, %131 : vector<64x64xf32>
    %133 = tpu.concatenate %126, %114, %132 in 1 : vector<64x64xf32>, vector<64x64xf32>, vector<64x64xf32> -> vector<64x192xf32>
    %134 = arith.truncf %133 : vector<64x192xf32> to vector<64x192xbf16>
    %c368 = arith.constant 368 : index
    %c0_74 = arith.constant 0 : index
    %135 = vector.load %arg2[%c368, %c0_74] : memref<672x64xbf16, #tpu.memory_space<vmem>>, vector<192x64xbf16>
    %cst_75 = arith.constant dense<0.000000e+00> : vector<64x64xf32>
    %136 = tpu.matmul %134, %135, %cst_75 {dimension_numbers = #tpu.dot_dimension_numbers<[1], [0], [0], [1], [0, 0, 1, 1], [], []>} : vector<64x192xbf16>, vector<192x64xbf16>, vector<64x64xf32> -> vector<64x64xf32>
    %c7 = arith.constant 7 : index
    %c0_76 = arith.constant 0 : index
    %137 = vector.load %arg3[%c7, %c0_76] : memref<10x64xf32, #tpu.memory_space<vmem>>, vector<1x64xf32>
    %138 = vector.broadcast %137 : vector<1x64xf32> to vector<64x64xf32>
    %139 = arith.addf %136, %138 : vector<64x64xf32>
    %140 = arith.addf %139, %120 : vector<64x64xf32>
    %cst_77 = arith.constant 0.000000e+00 : f32
    %141 = vector.broadcast %cst_77 : f32 to vector<64x64xf32>
    %142 = arith.maximumf %140, %141 : vector<64x64xf32>
    %143 = arith.truncf %142 : vector<64x64xf32> to vector<64x64xbf16>
    %c592 = arith.constant 592 : index
    %c0_78 = arith.constant 0 : index
    %144 = vector.load %arg2[%c592, %c0_78] : memref<672x64xbf16, #tpu.memory_space<vmem>>, vector<16x64xbf16>
    %cst_79 = arith.constant dense<0.000000e+00> : vector<16x64xf32>
    %145 = tpu.matmul %144, %143, %cst_79 {dimension_numbers = #tpu.dot_dimension_numbers<[1], [0], [0], [1], [0, 0, 1, 1], [], []>} : vector<16x64xbf16>, vector<64x64xbf16>, vector<16x64xf32> -> vector<16x64xf32>
    %146 = arith.truncf %145 : vector<16x64xf32> to vector<16x64xbf16>
    %c608 = arith.constant 608 : index
    %c0_80 = arith.constant 0 : index
    %147 = vector.load %arg2[%c608, %c0_80] : memref<672x64xbf16, #tpu.memory_space<vmem>>, vector<64x4xbf16>
    %cst_81 = arith.constant dense<0.000000e+00> : vector<16x4xf32>
    %148 = tpu.matmul %146, %147, %cst_81 {dimension_numbers = #tpu.dot_dimension_numbers<[1], [0], [0], [1], [0, 0, 1, 1], [], []>} : vector<16x64xbf16>, vector<64x4xbf16>, vector<16x4xf32> -> vector<16x4xf32>
    %c9 = arith.constant 9 : index
    %c0_82 = arith.constant 0 : index
    %149 = vector.load %arg3[%c9, %c0_82] : memref<10x64xf32, #tpu.memory_space<vmem>>, vector<1x4xf32>
    %150 = vector.broadcast %149 : vector<1x4xf32> to vector<16x4xf32>
    %151 = arith.addf %148, %150 : vector<16x4xf32>
    %cst_83 = arith.constant dense<0xFF800000> : vector<16xf32>
    %152 = vector.multi_reduction <maximumf>, %151, %cst_83 [1] : vector<16x4xf32> to vector<16xf32>
    %153 = vector.shape_cast %152 : vector<16xf32> to vector<16x1xf32>
    %154 = vector.broadcast %153 : vector<16x1xf32> to vector<16x4xf32>
    %155 = arith.subf %151, %154 : vector<16x4xf32>
    %156 = math.exp %155 : vector<16x4xf32>
    %cst_84 = arith.constant dense<0.000000e+00> : vector<16xf32>
    %157 = vector.multi_reduction <add>, %156, %cst_84 [1] : vector<16x4xf32> to vector<16xf32>
    %158 = vector.shape_cast %157 : vector<16xf32> to vector<16x1xf32>
    %159 = vector.broadcast %158 : vector<16x1xf32> to vector<16x4xf32>
    %160 = arith.divf %156, %159 : vector<16x4xf32>
    %c0_85 = arith.constant 0 : index
    %c0_86 = arith.constant 0 : index
    %161 = vector.load %arg5[%c0_85, %c0_86] : memref<16x4xf32, #tpu.memory_space<vmem>>, vector<16x4xf32>
    tpu.vector_store %arg5[%c0_85, %c0_86], %160 {strides = array<i32>} : memref<16x4xf32, #tpu.memory_space<vmem>>, vector<16x4xf32>,
    return
  }
  func.func @transform_0(%arg0: i32) -> (i32, i32) {
    %c0_i32 = arith.constant 0 : i32
    %c0_i32_0 = arith.constant 0 : i32
    return %arg0, %c0_i32 : i32, i32
  }
  func.func @transform_1(%arg0: i32) -> (i32, i32) {
    %c0_i32 = arith.constant 0 : i32
    %c0_i32_0 = arith.constant 0 : i32
    %c0_i32_1 = arith.constant 0 : i32
    return %c0_i32, %c0_i32_0 : i32, i32
  }
  func.func @transform_2(%arg0: i32) -> (i32, i32) {
    %c0_i32 = arith.constant 0 : i32
    %c0_i32_0 = arith.constant 0 : i32
    %c0_i32_1 = arith.constant 0 : i32
    return %c0_i32, %c0_i32_0 : i32, i32
  }
  func.func @transform_3(%arg0: i32) -> (i32, i32) {
    %c0_i32 = arith.constant 0 : i32
    %c0_i32_0 = arith.constant 0 : i32
    %c0_i32_1 = arith.constant 0 : i32
    return %c0_i32, %c0_i32_0 : i32, i32
  }
  func.func @transform_4(%arg0: i32) -> (i32, i32) {
    %c0_i32 = arith.constant 0 : i32
    %c0_i32_0 = arith.constant 0 : i32
    return %arg0, %c0_i32 : i32, i32
  }
}

</mosaic_0001>

<llo_original>
// kernel: tpu_custom_call.1
$region0: #{tpu_custom_call.1}
  #allocation0 [shape = 'u32[]', space=smem, size = 0x4, offset = 0x4, fixed_abs, tag = 'smem constant byte address 0x4 - core index']
  #allocation1 [shape = 'u32[72,128]{1,0:T(1,128)}', space=vmem, size = 0x9000, scoped, tag = 'internal scratch']
  #allocation2 [shape = 'f32[256,16]{1,0:T(8,128)}', space=vmem, size = 0x20000, scoped, tag = 'scratch operand']
  #allocation3 [shape = 'f32[128,32]{1,0:T(8,128)}', space=vmem, size = 0x10000, scoped, tag = 'scratch operand']
  %s0 = inlined_call_operand.vmem [shape: bf16[256,3], index: 0, kind: input, shape index: {}]
  %s1 = inlined_call_operand.vmem [shape: bf16[672,64], index: 1, kind: input, shape index: {}]
  %s2 = inlined_call_operand.vmem [shape: f32[10,64], index: 2, kind: input, shape index: {}]
  %s3 = inlined_call_operand.vmem [shape: f32[256,6], index: 3, kind: input, shape index: {}]
  %s4 = inlined_call_operand.vmem [shape: f32[16,4], index: 4, kind: output, shape index: {}]
  %s5 = sld [smem:[#allocation0]]
  $region26: #{tpu_custom_call.1} parent=0
    _
  %s7 = ssub.s32 1, %s5
  %s8 = scalar_select 0, %s7, %s5
  // Predicated region
  $region2: #{tpu_custom_call.1} parent=0 // pred_check
    _
  $region3: #{tpu_custom_call.1} parent=0 // pred_check_branch
    %10 = sbr.rel (0) target = $region5
  $region4: #{tpu_custom_call.1} parent=0 // pred_region
    _
  $region5: #{tpu_custom_call.1} parent=0 // pred_fallthru
    _
  // Predicated region
  $region6: #{tpu_custom_call.1} parent=0 // pred_check
    _
  $region7: #{tpu_custom_call.1} parent=0 // pred_check_branch
    %12 = sbr.rel (0) target = $region9
  $region8: #{tpu_custom_call.1} parent=0 // pred_region
    _
  $region9: #{tpu_custom_call.1} parent=0 // pred_fallthru
    _
  // Predicated region
  $region10: #{tpu_custom_call.1} parent=0 // pred_check
    _
  $region11: #{tpu_custom_call.1} parent=0 // pred_check_branch
    %14 = sbr.rel (0) target = $region13
  $region12: #{tpu_custom_call.1} parent=0 // pred_region
    _
  $region13: #{tpu_custom_call.1} parent=0 // pred_fallthru
    _
  // Predicated region
  $region14: #{tpu_custom_call.1} parent=0 // pred_check
    _
  $region15: #{tpu_custom_call.1} parent=0 // pred_check_branch
    %16 = sbr.rel (0) target = $region17
  $region16: #{tpu_custom_call.1} parent=0 // pred_region
    _
  $region17: #{tpu_custom_call.1} parent=0 // pred_fallthru
    _
  %v18 = vld [vmem:[%s0] sm:$0xf]
  %v19 = vld [vmem:[%s0 + $0x4] sm:$0xf]
  %v20 = vld [vmem:[%s0 + $0x8] sm:$0xf]
  %v21 = vld [vmem:[%s0 + $0xc] sm:$0xf]
  %v22 = vld [vmem:[%s0 + $0x10] sm:$0xf]
  %v23 = vld [vmem:[%s0 + $0x14] sm:$0xf]
  %v24 = vld [vmem:[%s0 + $0x18] sm:$0xf]
  %v25 = vld [vmem:[%s0 + $0x1c] sm:$0xf]
  %v26 = vld [vmem:[%s0 + $0x20] sm:$0xf]
  %v27 = vld [vmem:[%s0 + $0x24] sm:$0xf]
  %v28 = vld [vmem:[%s0 + $0x28] sm:$0xf]
  %v29 = vld [vmem:[%s0 + $0x2c] sm:$0xf]
  %v30 = vld [vmem:[%s0 + $0x30] sm:$0xf]
  %v31 = vld [vmem:[%s0 + $0x34] sm:$0xf]
  %v32 = vld [vmem:[%s0 + $0x38] sm:$0xf]
  %v33 = vld [vmem:[%s0 + $0x3c] sm:$0xf]
  %v34 = vld [vmem:[%s0 + $0x40] sm:$0xf]
  %v35 = vld [vmem:[%s0 + $0x44] sm:$0xf]
  %v36 = vld [vmem:[%s0 + $0x48] sm:$0xf]
  %v37 = vld [vmem:[%s0 + $0x4c] sm:$0xf]
  %v38 = vld [vmem:[%s0 + $0x50] sm:$0xf]
  %v39 = vld [vmem:[%s0 + $0x54] sm:$0xf]
  %v40 = vld [vmem:[%s0 + $0x58] sm:$0xf]
  %v41 = vld [vmem:[%s0 + $0x5c] sm:$0xf]
  %v42 = vld [vmem:[%s0 + $0x60] sm:$0xf]
  %v43 = vld [vmem:[%s0 + $0x64] sm:$0xf]
  %v44 = vld [vmem:[%s0 + $0x68] sm:$0xf]
  %v45 = vld [vmem:[%s0 + $0x6c] sm:$0xf]
  %v46 = vld [vmem:[%s0 + $0x70] sm:$0xf]
  %v47 = vld [vmem:[%s0 + $0x74] sm:$0xf]
  %v48 = vld [vmem:[%s0 + $0x78] sm:$0xf]
  %v49 = vld [vmem:[%s0 + $0x7c] sm:$0xf]
  %v50 = vld [vmem:[%s1] sm:$0x3]
  %v51 = vld [vmem:[%s2] sm:$0x1]
  %v52 = vperm.slane %v51, 0
  %v85 = vunpack.c.l.b16 %v18
  %v86 = vunpack.c.l.b16 %v19
  %v87 = vunpack.c.l.b16 %v20
  %v88 = vunpack.c.l.b16 %v21
  %v89 = vunpack.c.l.b16 %v22
  %v90 = vunpack.c.l.b16 %v23
  %v91 = vunpack.c.l.b16 %v24
  %v92 = vunpack.c.l.b16 %v25
  %v93 = vunpack.c.l.b16 %v26
  %v94 = vunpack.c.l.b16 %v27
  %v95 = vunpack.c.l.b16 %v28
  %v96 = vunpack.c.l.b16 %v29
  %v97 = vunpack.c.l.b16 %v30
  %v98 = vunpack.c.l.b16 %v31
  %v99 = vunpack.c.l.b16 %v32
  %v100 = vunpack.c.l.b16 %v33
  %v101 = vunpack.c.l.b16 %v34
  %v102 = vunpack.c.l.b16 %v35
  %v103 = vunpack.c.l.b16 %v36
  %v104 = vunpack.c.l.b16 %v37
  %v105 = vunpack.c.l.b16 %v38
  %v106 = vunpack.c.l.b16 %v39
  %v107 = vunpack.c.l.b16 %v40
  %v108 = vunpack.c.l.b16 %v41
  %v109 = vunpack.c.l.b16 %v42
  %v110 = vunpack.c.l.b16 %v43
  %v111 = vunpack.c.l.b16 %v44
  %v112 = vunpack.c.l.b16 %v45
  %v113 = vunpack.c.l.b16 %v46
  %v114 = vunpack.c.l.b16 %v47
  %v115 = vunpack.c.l.b16 %v48
  %v116 = vunpack.c.l.b16 %v49
  %v117 = vpack.c.b16 %v86, %v85
  %v118 = vpack.c.b16 %v88, %v87
  %v119 = vpack.c.b16 %v90, %v89
  %v120 = vpack.c.b16 %v92, %v91
  %v121 = vpack.c.b16 %v94, %v93
  %v122 = vpack.c.b16 %v96, %v95
  %v123 = vpack.c.b16 %v98, %v97
  %v124 = vpack.c.b16 %v100, %v99
  %v125 = vpack.c.b16 %v102, %v101
  %v126 = vpack.c.b16 %v104, %v103
  %v127 = vpack.c.b16 %v106, %v105
  %v128 = vpack.c.b16 %v108, %v107
  %v129 = vpack.c.b16 %v110, %v109
  %v130 = vpack.c.b16 %v112, %v111
  %v131 = vpack.c.b16 %v114, %v113
  %v132 = vpack.c.b16 %v116, %v115
  %vm133 = vcmask 23552
  %v135 = vsel %vm133, %v117, 0
  %v138 = vsel %vm133, %v118, 0
  %v141 = vsel %vm133, %v119, 0
  %v144 = vsel %vm133, %v120, 0
  %v147 = vsel %vm133, %v121, 0
  %v150 = vsel %vm133, %v122, 0
  %v153 = vsel %vm133, %v123, 0
  %v156 = vsel %vm133, %v124, 0
  %v159 = vsel %vm133, %v125, 0
  %v162 = vsel %vm133, %v126, 0
  %v165 = vsel %vm133, %v127, 0
  %v168 = vsel %vm133, %v128, 0
  %v171 = vsel %vm133, %v129, 0
  %v174 = vsel %vm133, %v130, 0
  %v177 = vsel %vm133, %v131, 0
  %v180 = vsel %vm133, %v132, 0
  %vm182 = vcmask 1040384
  %vm183 = vcmask 1041408
  %v184 = vsel %vm182, 4294967295, 65535
  %v185 = vsel %vm183, %v184, 0
  %v187 = vand.u32 %v50, %v185
  %189 = vmatpush.bf16.msra.mxu0 0
  %190 = vmatpush.bf16.msra.mxu0 0
  %191 = vmatpush.bf16.msra.mxu0 0
  %192 = vmatpush.bf16.msra.mxu0 0
  %193 = vmatpush.bf16.msra.mxu0 0
  %194 = vmatpush.bf16.msra.mxu0 0
  %195 = vmatpush.bf16.msra.mxu0 0
  %196 = vmatpush.bf16.msra.mxu0 %v187
  %197 = vmatmul.bf16.gmra.mxu0 %v135
  %v198 = vpop.f32.mrf.mxu0
  %v199 = vadd.f32 %v52, %v198
  %v200 = vpop.f32.mrf.mxu0
  %v201 = vadd.f32 %v52, %v200
  %202 = vmatmul.bf16.gmra.mxu0 %v138
  %v203 = vpop.f32.mrf.mxu0
  %v204 = vadd.f32 %v52, %v203
  %v205 = vpop.f32.mrf.mxu0
  %v206 = vadd.f32 %v52, %v205
  %207 = vmatmul.bf16.gmra.mxu0 %v141
  %v208 = vpop.f32.mrf.mxu0
  %v209 = vadd.f32 %v52, %v208
  %v210 = vpop.f32.mrf.mxu0
  %v211 = vadd.f32 %v52, %v210
  %212 = vmatmul.bf16.gmra.mxu0 %v144
  %v213 = vpop.f32.mrf.mxu0
  %v214 = vadd.f32 %v52, %v213
  %v215 = vpop.f32.mrf.mxu0
  %v216 = vadd.f32 %v52, %v215
  %217 = vmatmul.bf16.gmra.mxu0 %v147
  %v218 = vpop.f32.mrf.mxu0
  %v219 = vadd.f32 %v52, %v218
  %v220 = vpop.f32.mrf.mxu0
  %v221 = vadd.f32 %v52, %v220
  %222 = vmatmul.bf16.gmra.mxu0 %v150
  %v223 = vpop.f32.mrf.mxu0
  %v224 = vadd.f32 %v52, %v223
  %v225 = vpop.f32.mrf.mxu0
  %v226 = vadd.f32 %v52, %v225
  %227 = vmatmul.bf16.gmra.mxu0 %v153
  %v228 = vpop.f32.mrf.mxu0
  %v229 = vadd.f32 %v52, %v228
  %v230 = vpop.f32.mrf.mxu0
  %v231 = vadd.f32 %v52, %v230
  %232 = vmatmul.bf16.gmra.mxu0 %v156
  %v233 = vpop.f32.mrf.mxu0
  %v234 = vadd.f32 %v52, %v233
  %v235 = vpop.f32.mrf.mxu0
  %v236 = vadd.f32 %v52, %v235
  %237 = vmatmul.bf16.gmra.mxu0 %v159
  %v238 = vpop.f32.mrf.mxu0
  %v239 = vadd.f32 %v52, %v238
  %v240 = vpop.f32.mrf.mxu0
  %v241 = vadd.f32 %v52, %v240
  %242 = vmatmul.bf16.gmra.mxu0 %v162
  %v243 = vpop.f32.mrf.mxu0
  %v244 = vadd.f32 %v52, %v243
  %v245 = vpop.f32.mrf.mxu0
  %v246 = vadd.f32 %v52, %v245
  %247 = vmatmul.bf16.gmra.mxu0 %v165
  %v248 = vpop.f32.mrf.mxu0
  %v249 = vadd.f32 %v52, %v248
  %v250 = vpop.f32.mrf.mxu0
  %v251 = vadd.f32 %v52, %v250
  %252 = vmatmul.bf16.gmra.mxu0 %v168
  %v253 = vpop.f32.mrf.mxu0
  %v254 = vadd.f32 %v52, %v253
  %v255 = vpop.f32.mrf.mxu0
  %v256 = vadd.f32 %v52, %v255
  %257 = vmatmul.bf16.gmra.mxu0 %v171
  %v258 = vpop.f32.mrf.mxu0
  %v259 = vadd.f32 %v52, %v258
  %v260 = vpop.f32.mrf.mxu0
  %v261 = vadd.f32 %v52, %v260
  %262 = vmatmul.bf16.gmra.mxu0 %v174
  %v263 = vpop.f32.mrf.mxu0
  %v264 = vadd.f32 %v52, %v263
  %v265 = vpop.f32.mrf.mxu0
  %v266 = vadd.f32 %v52, %v265
  %267 = vmatmul.bf16.gmra.mxu0 %v177
  %v268 = vpop.f32.mrf.mxu0
  %v269 = vadd.f32 %v52, %v268
  %v270 = vpop.f32.mrf.mxu0
  %v271 = vadd.f32 %v52, %v270
  %272 = vmatmul.bf16.gmra.mxu0 %v180
  %v273 = vpop.f32.mrf.mxu0
  %v274 = vadd.f32 %v52, %v273
  %v275 = vpop.f32.mrf.mxu0
  %v276 = vadd.f32 %v52, %v275
  %277 = vdwg.mxu0
  %v278 = vmax.f32 %v199, 0.0
  %v279 = vmax.f32 %v201, 0.0
  %v280 = vmax.f32 %v204, 0.0
  %v281 = vmax.f32 %v206, 0.0
  %v282 = vmax.f32 %v209, 0.0
  %v283 = vmax.f32 %v211, 0.0
  %v284 = vmax.f32 %v214, 0.0
  %v285 = vmax.f32 %v216, 0.0
  %v286 = vmax.f32 %v219, 0.0
  %v287 = vmax.f32 %v221, 0.0
  %v288 = vmax.f32 %v224, 0.0
  %v289 = vmax.f32 %v226, 0.0
  %v290 = vmax.f32 %v229, 0.0
  %v291 = vmax.f32 %v231, 0.0
  %v292 = vmax.f32 %v234, 0.0
  %v293 = vmax.f32 %v236, 0.0
  %v294 = vmax.f32 %v239, 0.0
  %v295 = vmax.f32 %v241, 0.0
  %v296 = vmax.f32 %v244, 0.0
  %v297 = vmax.f32 %v246, 0.0
  %v298 = vmax.f32 %v249, 0.0
  %v299 = vmax.f32 %v251, 0.0
  %v300 = vmax.f32 %v254, 0.0
  %v301 = vmax.f32 %v256, 0.0
  %v302 = vmax.f32 %v259, 0.0
  %v303 = vmax.f32 %v261, 0.0
  %v304 = vmax.f32 %v264, 0.0
  %v305 = vmax.f32 %v266, 0.0
  %v306 = vmax.f32 %v269, 0.0
  %v307 = vmax.f32 %v271, 0.0
  %v308 = vmax.f32 %v274, 0.0
  %v309 = vmax.f32 %v276, 0.0
  %v342 = vrot.slane %v278, 7
  %v343 = vrot.slane %v279, 7
  %v344 = vsel %vm182, %v342, %v343
  %v345 = vrot.slane %v280, 7
  %v346 = vsel %vm182, %v343, %v345
  %v347 = vrot.slane %v281, 7
  %v348 = vsel %vm182, %v345, %v347
  %v349 = vrot.slane %v282, 7
  %v350 = vsel %vm182, %v347, %v349
  %v351 = vrot.slane %v283, 7
  %v352 = vsel %vm182, %v349, %v351
  %v353 = vrot.slane %v284, 7
  %v354 = vsel %vm182, %v351, %v353
  %v355 = vrot.slane %v285, 7
  %v356 = vsel %vm182, %v353, %v355
  %v357 = vrot.slane %v286, 7
  %v358 = vsel %vm182, %v355, %v357
  %v359 = vrot.slane %v287, 7
  %v360 = vsel %vm182, %v357, %v359
  %v361 = vrot.slane %v288, 7
  %v362 = vsel %vm182, %v359, %v361
  %v363 = vrot.slane %v289, 7
  %v364 = vsel %vm182, %v361, %v363
  %v365 = vrot.slane %v290, 7
  %v366 = vsel %vm182, %v363, %v365
  %v367 = vrot.slane %v291, 7
  %v368 = vsel %vm182, %v365, %v367
  %v369 = vrot.slane %v292, 7
  %v370 = vsel %vm182, %v367, %v369
  %v371 = vrot.slane %v293, 7
  %v372 = vsel %vm182, %v369, %v371
  %v373 = vrot.slane %v294, 7
  %v374 = vsel %vm182, %v371, %v373
  %v375 = vrot.slane %v295, 7
  %v376 = vsel %vm182, %v373, %v375
  %v377 = vrot.slane %v296, 7
  %v378 = vsel %vm182, %v375, %v377
  %v379 = vrot.slane %v297, 7
  %v380 = vsel %vm182, %v377, %v379
  %v381 = vrot.slane %v298, 7
  %v382 = vsel %vm182, %v379, %v381
  %v383 = vrot.slane %v299, 7
  %v384 = vsel %vm182, %v381, %v383
  %v385 = vrot.slane %v300, 7
  %v386 = vsel %vm182, %v383, %v385
  %v387 = vrot.slane %v301, 7
  %v388 = vsel %vm182, %v385, %v387
  %v389 = vrot.slane %v302, 7
  %v390 = vsel %vm182, %v387, %v389
  %v391 = vrot.slane %v303, 7
  %v392 = vsel %vm182, %v389, %v391
  %v393 = vrot.slane %v304, 7
  %v394 = vsel %vm182, %v391, %v393
  %v395 = vrot.slane %v305, 7
  %v396 = vsel %vm182, %v393, %v395
  %v397 = vrot.slane %v306, 7
  %v398 = vsel %vm182, %v395, %v397
  %v399 = vrot.slane %v307, 7
  %v400 = vsel %vm182, %v397, %v399
  %v401 = vrot.slane %v308, 7
  %v402 = vsel %vm182, %v399, %v401
  %v403 = vrot.slane %v309, 7
  %v404 = vsel %vm182, %v401, %v403
  %v437 = vsel %vm182, 0.0, %v342
  %v438 = vld [vmem:[%s3] sm:$0xff]
  %v439 = vld [vmem:[%s3 + $0x8] sm:$0xff]
  %v440 = vld [vmem:[%s3 + $0x10] sm:$0xff]
  %v441 = vld [vmem:[%s3 + $0x18] sm:$0xff]
  %v442 = vld [vmem:[%s3 + $0x20] sm:$0xff]
  %v443 = vld [vmem:[%s3 + $0x28] sm:$0xff]
  %v444 = vld [vmem:[%s3 + $0x30] sm:$0xff]
  %v445 = vld [vmem:[%s3 + $0x38] sm:$0xff]
  %v446 = vld [vmem:[%s3 + $0x40] sm:$0xff]
  %v447 = vld [vmem:[%s3 + $0x48] sm:$0xff]
  %v448 = vld [vmem:[%s3 + $0x50] sm:$0xff]
  %v449 = vld [vmem:[%s3 + $0x58] sm:$0xff]
  %v450 = vld [vmem:[%s3 + $0x60] sm:$0xff]
  %v451 = vld [vmem:[%s3 + $0x68] sm:$0xff]
  %v452 = vld [vmem:[%s3 + $0x70] sm:$0xff]
  %v453 = vld [vmem:[%s3 + $0x78] sm:$0xff]
  %v454 = vld [vmem:[%s3 + $0x80] sm:$0xff]
  %v455 = vld [vmem:[%s3 + $0x88] sm:$0xff]
  %v456 = vld [vmem:[%s3 + $0x90] sm:$0xff]
  %v457 = vld [vmem:[%s3 + $0x98] sm:$0xff]
  %v458 = vld [vmem:[%s3 + $0xa0] sm:$0xff]
  %v459 = vld [vmem:[%s3 + $0xa8] sm:$0xff]
  %v460 = vld [vmem:[%s3 + $0xb0] sm:$0xff]
  %v461 = vld [vmem:[%s3 + $0xb8] sm:$0xff]
  %v462 = vld [vmem:[%s3 + $0xc0] sm:$0xff]
  %v463 = vld [vmem:[%s3 + $0xc8] sm:$0xff]
  %v464 = vld [vmem:[%s3 + $0xd0] sm:$0xff]
  %v465 = vld [vmem:[%s3 + $0xd8] sm:$0xff]
  %v466 = vld [vmem:[%s3 + $0xe0] sm:$0xff]
  %v467 = vld [vmem:[%s3 + $0xe8] sm:$0xff]
  %v468 = vld [vmem:[%s3 + $0xf0] sm:$0xff]
  %v469 = vld [vmem:[%s3 + $0xf8] sm:$0xff]
  %471 = vset.pattern.permute.xlu0 0
  %472 = vperm.xlu0 %471, %v438
  %v473 = vpop.permute.xlu0 %472
  %476 = vset.pattern.permute.xlu0 0
  %477 = vperm.xlu0 %476, %v439
  %v478 = vpop.permute.xlu0 %477
  %481 = vset.pattern.permute.xlu0 0
  %482 = vperm.xlu0 %481, %v440
  %v483 = vpop.permute.xlu0 %482
  %486 = vset.pattern.permute.xlu0 0
  %487 = vperm.xlu0 %486, %v441
  %v488 = vpop.permute.xlu0 %487
  %491 = vset.pattern.permute.xlu0 0
  %492 = vperm.xlu0 %491, %v442
  %v493 = vpop.permute.xlu0 %492
  %496 = vset.pattern.permute.xlu0 0
  %497 = vperm.xlu0 %496, %v443
  %v498 = vpop.permute.xlu0 %497
  %501 = vset.pattern.permute.xlu0 0
  %502 = vperm.xlu0 %501, %v444
  %v503 = vpop.permute.xlu0 %502
  %506 = vset.pattern.permute.xlu0 0
  %507 = vperm.xlu0 %506, %v445
  %v508 = vpop.permute.xlu0 %507
  %511 = vset.pattern.permute.xlu0 0
  %512 = vperm.xlu0 %511, %v446
  %v513 = vpop.permute.xlu0 %512
  %516 = vset.pattern.permute.xlu0 0
  %517 = vperm.xlu0 %516, %v447
  %v518 = vpop.permute.xlu0 %517
  %521 = vset.pattern.permute.xlu0 0
  %522 = vperm.xlu0 %521, %v448
  %v523 = vpop.permute.xlu0 %522
  %526 = vset.pattern.permute.xlu0 0
  %527 = vperm.xlu0 %526, %v449
  %v528 = vpop.permute.xlu0 %527
  %531 = vset.pattern.permute.xlu0 0
  %532 = vperm.xlu0 %531, %v450
  %v533 = vpop.permute.xlu0 %532
  %536 = vset.pattern.permute.xlu0 0
  %537 = vperm.xlu0 %536, %v451
  %v538 = vpop.permute.xlu0 %537
  %541 = vset.pattern.permute.xlu0 0
  %542 = vperm.xlu0 %541, %v452
  %v543 = vpop.permute.xlu0 %542
  %546 = vset.pattern.permute.xlu0 0
  %547 = vperm.xlu0 %546, %v453
  %v548 = vpop.permute.xlu0 %547
  %551 = vset.pattern.permute.xlu0 0
  %552 = vperm.xlu0 %551, %v454
  %v553 = vpop.permute.xlu0 %552
  %556 = vset.pattern.permute.xlu0 0
  %557 = vperm.xlu0 %556, %v455
  %v558 = vpop.permute.xlu0 %557
  %561 = vset.pattern.permute.xlu0 0
  %562 = vperm.xlu0 %561, %v456
  %v563 = vpop.permute.xlu0 %562
  %566 = vset.pattern.permute.xlu0 0
  %567 = vperm.xlu0 %566, %v457
  %v568 = vpop.permute.xlu0 %567
  %571 = vset.pattern.permute.xlu0 0
  %572 = vperm.xlu0 %571, %v458
  %v573 = vpop.permute.xlu0 %572
  %576 = vset.pattern.permute.xlu0 0
  %577 = vperm.xlu0 %576, %v459
  %v578 = vpop.permute.xlu0 %577
  %581 = vset.pattern.permute.xlu0 0
  %582 = vperm.xlu0 %581, %v460
  %v583 = vpop.permute.xlu0 %582
  %586 = vset.pattern.permute.xlu0 0
  %587 = vperm.xlu0 %586, %v461
  %v588 = vpop.permute.xlu0 %587
  %591 = vset.pattern.permute.xlu0 0
  %592 = vperm.xlu0 %591, %v462
  %v593 = vpop.permute.xlu0 %592
  %596 = vset.pattern.permute.xlu0 0
  %597 = vperm.xlu0 %596, %v463
  %v598 = vpop.permute.xlu0 %597
  %601 = vset.pattern.permute.xlu0 0
  %602 = vperm.xlu0 %601, %v464
  %v603 = vpop.permute.xlu0 %602
  %606 = vset.pattern.permute.xlu0 0
  %607 = vperm.xlu0 %606, %v465
  %v608 = vpop.permute.xlu0 %607
  %611 = vset.pattern.permute.xlu0 0
  %612 = vperm.xlu0 %611, %v466
  %v613 = vpop.permute.xlu0 %612
  %616 = vset.pattern.permute.xlu0 0
  %617 = vperm.xlu0 %616, %v467
  %v618 = vpop.permute.xlu0 %617
  %621 = vset.pattern.permute.xlu0 0
  %622 = vperm.xlu0 %621, %v468
  %v623 = vpop.permute.xlu0 %622
  %626 = vset.pattern.permute.xlu0 0
  %627 = vperm.xlu0 %626, %v469
  %v628 = vpop.permute.xlu0 %627
  %v630 = vmul.f32 %v437, %v473
  %v631 = vmul.f32 %v344, %v478
  %v632 = vmul.f32 %v346, %v483
  %v633 = vmul.f32 %v348, %v488
  %v634 = vmul.f32 %v350, %v493
  %v635 = vmul.f32 %v352, %v498
  %v636 = vmul.f32 %v354, %v503
  %v637 = vmul.f32 %v356, %v508
  %v638 = vmul.f32 %v358, %v513
  %v639 = vmul.f32 %v360, %v518
  %v640 = vmul.f32 %v362, %v523
  %v641 = vmul.f32 %v364, %v528
  %v642 = vmul.f32 %v366, %v533
  %v643 = vmul.f32 %v368, %v538
  %v644 = vmul.f32 %v370, %v543
  %v645 = vmul.f32 %v372, %v548
  %v646 = vmul.f32 %v374, %v553
  %v647 = vmul.f32 %v376, %v558
  %v648 = vmul.f32 %v378, %v563
  %v649 = vmul.f32 %v380, %v568
  %v650 = vmul.f32 %v382, %v573
  %v651 = vmul.f32 %v384, %v578
  %v652 = vmul.f32 %v386, %v583
  %v653 = vmul.f32 %v388, %v588
  %v654 = vmul.f32 %v390, %v593
  %v655 = vmul.f32 %v392, %v598
  %v656 = vmul.f32 %v394, %v603
  %v657 = vmul.f32 %v396, %v608
  %v658 = vmul.f32 %v398, %v613
  %v659 = vmul.f32 %v400, %v618
  %v660 = vmul.f32 %v402, %v623
  %v661 = vmul.f32 %v404, %v628
  %vm662 = vcmask 1046528
  %v663 = vrot.slane %v278, 1
  %v664 = vrot.slane %v279, 1
  %v665 = vsel %vm662, %v663, %v664
  %v666 = vrot.slane %v280, 1
  %v667 = vsel %vm662, %v664, %v666
  %v668 = vrot.slane %v281, 1
  %v669 = vsel %vm662, %v666, %v668
  %v670 = vrot.slane %v282, 1
  %v671 = vsel %vm662, %v668, %v670
  %v672 = vrot.slane %v283, 1
  %v673 = vsel %vm662, %v670, %v672
  %v674 = vrot.slane %v284, 1
  %v675 = vsel %vm662, %v672, %v674
  %v676 = vrot.slane %v285, 1
  %v677 = vsel %vm662, %v674, %v676
  %v678 = vrot.slane %v286, 1
  %v679 = vsel %vm662, %v676, %v678
  %v680 = vrot.slane %v287, 1
  %v681 = vsel %vm662, %v678, %v680
  %v682 = vrot.slane %v288, 1
  %v683 = vsel %vm662, %v680, %v682
  %v684 = vrot.slane %v289, 1
  %v685 = vsel %vm662, %v682, %v684
  %v686 = vrot.slane %v290, 1
  %v687 = vsel %vm662, %v684, %v686
  %v688 = vrot.slane %v291, 1
  %v689 = vsel %vm662, %v686, %v688
  %v690 = vrot.slane %v292, 1
  %v691 = vsel %vm662, %v688, %v690
  %v692 = vrot.slane %v293, 1
  %v693 = vsel %vm662, %v690, %v692
  %v694 = vrot.slane %v294, 1
  %v695 = vsel %vm662, %v692, %v694
  %v696 = vrot.slane %v295, 1
  %v697 = vsel %vm662, %v694, %v696
  %v698 = vrot.slane %v296, 1
  %v699 = vsel %vm662, %v696, %v698
  %v700 = vrot.slane %v297, 1
  %v701 = vsel %vm662, %v698, %v700
  %v702 = vrot.slane %v298, 1
  %v703 = vsel %vm662, %v700, %v702
  %v704 = vrot.slane %v299, 1
  %v705 = vsel %vm662, %v702, %v704
  %v706 = vrot.slane %v300, 1
  %v707 = vsel %vm662, %v704, %v706
  %v708 = vrot.slane %v301, 1
  %v709 = vsel %vm662, %v706, %v708
  %v710 = vrot.slane %v302, 1
  %v711 = vsel %vm662, %v708, %v710
  %v712 = vrot.slane %v303, 1
  %v713 = vsel %vm662, %v710, %v712
  %v714 = vrot.slane %v304, 1
  %v715 = vsel %vm662, %v712, %v714
  %v716 = vrot.slane %v305, 1
  %v717 = vsel %vm662, %v714, %v716
  %v718 = vrot.slane %v306, 1
  %v719 = vsel %vm662, %v716, %v718
  %v720 = vrot.slane %v307, 1
  %v721 = vsel %vm662, %v718, %v720
  %v722 = vrot.slane %v308, 1
  %v723 = vsel %vm662, %v720, %v722
  %v724 = vrot.slane %v309, 1
  %v725 = vsel %vm662, %v722, %v724
  %v758 = vsel %vm662, %v724, 0.0
  %759 = vset.pattern.permute.xlu0 1
  %760 = vperm.xlu0 %759, %v438
  %v761 = vpop.permute.xlu0 %760
  %763 = vset.pattern.permute.xlu0 1
  %764 = vperm.xlu0 %763, %v439
  %v765 = vpop.permute.xlu0 %764
  %767 = vset.pattern.permute.xlu0 1
  %768 = vperm.xlu0 %767, %v440
  %v769 = vpop.permute.xlu0 %768
  %771 = vset.pattern.permute.xlu0 1
  %772 = vperm.xlu0 %771, %v441
  %v773 = vpop.permute.xlu0 %772
  %775 = vset.pattern.permute.xlu0 1
  %776 = vperm.xlu0 %775, %v442
  %v777 = vpop.permute.xlu0 %776
  %779 = vset.pattern.permute.xlu0 1
  %780 = vperm.xlu0 %779, %v443
  %v781 = vpop.permute.xlu0 %780
  %783 = vset.pattern.permute.xlu0 1
  %784 = vperm.xlu0 %783, %v444
  %v785 = vpop.permute.xlu0 %784
  %787 = vset.pattern.permute.xlu0 1
  %788 = vperm.xlu0 %787, %v445
  %v789 = vpop.permute.xlu0 %788
  %791 = vset.pattern.permute.xlu0 1
  %792 = vperm.xlu0 %791, %v446
  %v793 = vpop.permute.xlu0 %792
  %795 = vset.pattern.permute.xlu0 1
  %796 = vperm.xlu0 %795, %v447
  %v797 = vpop.permute.xlu0 %796
  %799 = vset.pattern.permute.xlu0 1
  %800 = vperm.xlu0 %799, %v448
  %v801 = vpop.permute.xlu0 %800
  %803 = vset.pattern.permute.xlu0 1
  %804 = vperm.xlu0 %803, %v449
  %v805 = vpop.permute.xlu0 %804
  %807 = vset.pattern.permute.xlu0 1
  %808 = vperm.xlu0 %807, %v450
  %v809 = vpop.permute.xlu0 %808
  %811 = vset.pattern.permute.xlu0 1
  %812 = vperm.xlu0 %811, %v451
  %v813 = vpop.permute.xlu0 %812
  %815 = vset.pattern.permute.xlu0 1
  %816 = vperm.xlu0 %815, %v452
  %v817 = vpop.permute.xlu0 %816
  %819 = vset.pattern.permute.xlu0 1
  %820 = vperm.xlu0 %819, %v453
  %v821 = vpop.permute.xlu0 %820
  %823 = vset.pattern.permute.xlu0 1
  %824 = vperm.xlu0 %823, %v454
  %v825 = vpop.permute.xlu0 %824
  %827 = vset.pattern.permute.xlu0 1
  %828 = vperm.xlu0 %827, %v455
  %v829 = vpop.permute.xlu0 %828
  %831 = vset.pattern.permute.xlu0 1
  %832 = vperm.xlu0 %831, %v456
  %v833 = vpop.permute.xlu0 %832
  %835 = vset.pattern.permute.xlu0 1
  %836 = vperm.xlu0 %835, %v457
  %v837 = vpop.permute.xlu0 %836
  %839 = vset.pattern.permute.xlu0 1
  %840 = vperm.xlu0 %839, %v458
  %v841 = vpop.permute.xlu0 %840
  %843 = vset.pattern.permute.xlu0 1
  %844 = vperm.xlu0 %843, %v459
  %v845 = vpop.permute.xlu0 %844
  %847 = vset.pattern.permute.xlu0 1
  %848 = vperm.xlu0 %847, %v460
  %v849 = vpop.permute.xlu0 %848
  %851 = vset.pattern.permute.xlu0 1
  %852 = vperm.xlu0 %851, %v461
  %v853 = vpop.permute.xlu0 %852
  %855 = vset.pattern.permute.xlu0 1
  %856 = vperm.xlu0 %855, %v462
  %v857 = vpop.permute.xlu0 %856
  %859 = vset.pattern.permute.xlu0 1
  %860 = vperm.xlu0 %859, %v463
  %v861 = vpop.permute.xlu0 %860
  %863 = vset.pattern.permute.xlu0 1
  %864 = vperm.xlu0 %863, %v464
  %v865 = vpop.permute.xlu0 %864
  %867 = vset.pattern.permute.xlu0 1
  %868 = vperm.xlu0 %867, %v465
  %v869 = vpop.permute.xlu0 %868
  %871 = vset.pattern.permute.xlu0 1
  %872 = vperm.xlu0 %871, %v466
  %v873 = vpop.permute.xlu0 %872
  %875 = vset.pattern.permute.xlu0 1
  %876 = vperm.xlu0 %875, %v467
  %v877 = vpop.permute.xlu0 %876
  %879 = vset.pattern.permute.xlu0 1
  %880 = vperm.xlu0 %879, %v468
  %v881 = vpop.permute.xlu0 %880
  %883 = vset.pattern.permute.xlu0 1
  %884 = vperm.xlu0 %883, %v469
  %v885 = vpop.permute.xlu0 %884
  %v887 = vmul.f32 %v665, %v761
  %v888 = vmul.f32 %v667, %v765
  %v889 = vmul.f32 %v669, %v769
  %v890 = vmul.f32 %v671, %v773
  %v891 = vmul.f32 %v673, %v777
  %v892 = vmul.f32 %v675, %v781
  %v893 = vmul.f32 %v677, %v785
  %v894 = vmul.f32 %v679, %v789
  %v895 = vmul.f32 %v681, %v793
  %v896 = vmul.f32 %v683, %v797
  %v897 = vmul.f32 %v685, %v801
  %v898 = vmul.f32 %v687, %v805
  %v899 = vmul.f32 %v689, %v809
  %v900 = vmul.f32 %v691, %v813
  %v901 = vmul.f32 %v693, %v817
  %v902 = vmul.f32 %v695, %v821
  %v903 = vmul.f32 %v697, %v825
  %v904 = vmul.f32 %v699, %v829
  %v905 = vmul.f32 %v701, %v833
  %v906 = vmul.f32 %v703, %v837
  %v907 = vmul.f32 %v705, %v841
  %v908 = vmul.f32 %v707, %v845
  %v909 = vmul.f32 %v709, %v849
  %v910 = vmul.f32 %v711, %v853
  %v911 = vmul.f32 %v713, %v857
  %v912 = vmul.f32 %v715, %v861
  %v913 = vmul.f32 %v717, %v865
  %v914 = vmul.f32 %v719, %v869
  %v915 = vmul.f32 %v721, %v873
  %v916 = vmul.f32 %v723, %v877
  %v917 = vmul.f32 %v725, %v881
  %v918 = vmul.f32 %v758, %v885
  %919 = vrot.lane.b32.xlu0 %v278, 16
  %v920 = vpop.permute.xlu0 %919
  %921 = vrot.lane.b32.xlu0 %v279, 16
  %v922 = vpop.permute.xlu0 %921
  %923 = vrot.lane.b32.xlu0 %v280, 16
  %v924 = vpop.permute.xlu0 %923
  %925 = vrot.lane.b32.xlu0 %v281, 16
  %v926 = vpop.permute.xlu0 %925
  %927 = vrot.lane.b32.xlu0 %v282, 16
  %v928 = vpop.permute.xlu0 %927
  %929 = vrot.lane.b32.xlu0 %v283, 16
  %v930 = vpop.permute.xlu0 %929
  %931 = vrot.lane.b32.xlu0 %v284, 16
  %v932 = vpop.permute.xlu0 %931
  %933 = vrot.lane.b32.xlu0 %v285, 16
  %v934 = vpop.permute.xlu0 %933
  %935 = vrot.lane.b32.xlu0 %v286, 16
  %v936 = vpop.permute.xlu0 %935
  %937 = vrot.lane.b32.xlu0 %v287, 16
  %v938 = vpop.permute.xlu0 %937
  %939 = vrot.lane.b32.xlu0 %v288, 16
  %v940 = vpop.permute.xlu0 %939
  %941 = vrot.lane.b32.xlu0 %v289, 16
  %v942 = vpop.permute.xlu0 %941
  %943 = vrot.lane.b32.xlu0 %v290, 16
  %v944 = vpop.permute.xlu0 %943
  %945 = vrot.lane.b32.xlu0 %v291, 16
  %v946 = vpop.permute.xlu0 %945
  %947 = vrot.lane.b32.xlu0 %v292, 16
  %v948 = vpop.permute.xlu0 %947
  %949 = vrot.lane.b32.xlu0 %v293, 16
  %v950 = vpop.permute.xlu0 %949
  %951 = vrot.lane.b32.xlu0 %v294, 16
  %v952 = vpop.permute.xlu0 %951
  %953 = vrot.lane.b32.xlu0 %v295, 16
  %v954 = vpop.permute.xlu0 %953
  %955 = vrot.lane.b32.xlu0 %v296, 16
  %v956 = vpop.permute.xlu0 %955
  %957 = vrot.lane.b32.xlu0 %v297, 16
  %v958 = vpop.permute.xlu0 %957
  %959 = vrot.lane.b32.xlu0 %v298, 16
  %v960 = vpop.permute.xlu0 %959
  %961 = vrot.lane.b32.xlu0 %v299, 16
  %v962 = vpop.permute.xlu0 %961
  %963 = vrot.lane.b32.xlu0 %v300, 16
  %v964 = vpop.permute.xlu0 %963
  %965 = vrot.lane.b32.xlu0 %v301, 16
  %v966 = vpop.permute.xlu0 %965
  %967 = vrot.lane.b32.xlu0 %v302, 16
  %v968 = vpop.permute.xlu0 %967
  %969 = vrot.lane.b32.xlu0 %v303, 16
  %v970 = vpop.permute.xlu0 %969
  %971 = vrot.lane.b32.xlu0 %v304, 16
  %v972 = vpop.permute.xlu0 %971
  %973 = vrot.lane.b32.xlu0 %v305, 16
  %v974 = vpop.permute.xlu0 %973
  %975 = vrot.lane.b32.xlu0 %v306, 16
  %v976 = vpop.permute.xlu0 %975
  %977 = vrot.lane.b32.xlu0 %v307, 16
  %v978 = vpop.permute.xlu0 %977
  %979 = vrot.lane.b32.xlu0 %v308, 16
  %v980 = vpop.permute.xlu0 %979
  %981 = vrot.lane.b32.xlu0 %v309, 16
  %v982 = vpop.permute.xlu0 %981
  %1047 = vrot.lane.b32.xlu0 %v887, 32
  %v1048 = vpop.permute.xlu0 %1047
  %1049 = vrot.lane.b32.xlu0 %v888, 32
  %v1050 = vpop.permute.xlu0 %1049
  %1051 = vrot.lane.b32.xlu0 %v889, 32
  %v1052 = vpop.permute.xlu0 %1051
  %1053 = vrot.lane.b32.xlu0 %v890, 32
  %v1054 = vpop.permute.xlu0 %1053
  %1055 = vrot.lane.b32.xlu0 %v891, 32
  %v1056 = vpop.permute.xlu0 %1055
  %1057 = vrot.lane.b32.xlu0 %v892, 32
  %v1058 = vpop.permute.xlu0 %1057
  %1059 = vrot.lane.b32.xlu0 %v893, 32
  %v1060 = vpop.permute.xlu0 %1059
  %1061 = vrot.lane.b32.xlu0 %v894, 32
  %v1062 = vpop.permute.xlu0 %1061
  %1063 = vrot.lane.b32.xlu0 %v895, 32
  %v1064 = vpop.permute.xlu0 %1063
  %1065 = vrot.lane.b32.xlu0 %v896, 32
  %v1066 = vpop.permute.xlu0 %1065
  %1067 = vrot.lane.b32.xlu0 %v897, 32
  %v1068 = vpop.permute.xlu0 %1067
  %1069 = vrot.lane.b32.xlu0 %v898, 32
  %v1070 = vpop.permute.xlu0 %1069
  %1071 = vrot.lane.b32.xlu0 %v899, 32
  %v1072 = vpop.permute.xlu0 %1071
  %1073 = vrot.lane.b32.xlu0 %v900, 32
  %v1074 = vpop.permute.xlu0 %1073
  %1075 = vrot.lane.b32.xlu0 %v901, 32
  %v1076 = vpop.permute.xlu0 %1075
  %1077 = vrot.lane.b32.xlu0 %v902, 32
  %v1078 = vpop.permute.xlu0 %1077
  %1079 = vrot.lane.b32.xlu0 %v903, 32
  %v1080 = vpop.permute.xlu0 %1079
  %1081 = vrot.lane.b32.xlu0 %v904, 32
  %v1082 = vpop.permute.xlu0 %1081
  %1083 = vrot.lane.b32.xlu0 %v905, 32
  %v1084 = vpop.permute.xlu0 %1083
  %1085 = vrot.lane.b32.xlu0 %v906, 32
  %v1086 = vpop.permute.xlu0 %1085
  %1087 = vrot.lane.b32.xlu0 %v907, 32
  %v1088 = vpop.permute.xlu0 %1087
  %1089 = vrot.lane.b32.xlu0 %v908, 32
  %v1090 = vpop.permute.xlu0 %1089
  %1091 = vrot.lane.b32.xlu0 %v909, 32
  %v1092 = vpop.permute.xlu0 %1091
  %1093 = vrot.lane.b32.xlu0 %v910, 32
  %v1094 = vpop.permute.xlu0 %1093
  %1095 = vrot.lane.b32.xlu0 %v911, 32
  %v1096 = vpop.permute.xlu0 %1095
  %1097 = vrot.lane.b32.xlu0 %v912, 32
  %v1098 = vpop.permute.xlu0 %1097
  %1099 = vrot.lane.b32.xlu0 %v913, 32
  %v1100 = vpop.permute.xlu0 %1099
  %1101 = vrot.lane.b32.xlu0 %v914, 32
  %v1102 = vpop.permute.xlu0 %1101
  %1103 = vrot.lane.b32.xlu0 %v915, 32
  %v1104 = vpop.permute.xlu0 %1103
  %1105 = vrot.lane.b32.xlu0 %v916, 32
  %v1106 = vpop.permute.xlu0 %1105
  %1107 = vrot.lane.b32.xlu0 %v917, 32
  %v1108 = vpop.permute.xlu0 %1107
  %1109 = vrot.lane.b32.xlu0 %v918, 32
  %v1110 = vpop.permute.xlu0 %1109
  %vm1143 = vcmask 130048
  %v1144 = vsel %vm1143, %v630, %v920
  %v1145 = vsel %vm1143, %v631, %v922
  %v1146 = vsel %vm1143, %v632, %v924
  %v1147 = vsel %vm1143, %v633, %v926
  %v1148 = vsel %vm1143, %v634, %v928
  %v1149 = vsel %vm1143, %v635, %v930
  %v1150 = vsel %vm1143, %v636, %v932
  %v1151 = vsel %vm1143, %v637, %v934
  %v1152 = vsel %vm1143, %v638, %v936
  %v1153 = vsel %vm1143, %v639, %v938
  %v1154 = vsel %vm1143, %v640, %v940
  %v1155 = vsel %vm1143, %v641, %v942
  %v1156 = vsel %vm1143, %v642, %v944
  %v1157 = vsel %vm1143, %v643, %v946
  %v1158 = vsel %vm1143, %v644, %v948
  %v1159 = vsel %vm1143, %v645, %v950
  %v1160 = vsel %vm1143, %v646, %v952
  %v1161 = vsel %vm1143, %v647, %v954
  %v1162 = vsel %vm1143, %v648, %v956
  %v1163 = vsel %vm1143, %v649, %v958
  %v1164 = vsel %vm1143, %v650, %v960
  %v1165 = vsel %vm1143, %v651, %v962
  %v1166 = vsel %vm1143, %v652, %v964
  %v1167 = vsel %vm1143, %v653, %v966
  %v1168 = vsel %vm1143, %v654, %v968
  %v1169 = vsel %vm1143, %v655, %v970
  %v1170 = vsel %vm1143, %v656, %v972
  %v1171 = vsel %vm1143, %v657, %v974
  %v1172 = vsel %vm1143, %v658, %v976
  %v1173 = vsel %vm1143, %v659, %v978
  %v1174 = vsel %vm1143, %v660, %v980
  %v1175 = vsel %vm1143, %v661, %v982
  %vm1176 = vcmask 261120
  %v1177 = vsel %vm1176, %v1144, %v1048
  %v1178 = vsel %vm1176, %v1145, %v1050
  %v1179 = vsel %vm1176, %v1146, %v1052
  %v1180 = vsel %vm1176, %v1147, %v1054
  %v1181 = vsel %vm1176, %v1148, %v1056
  %v1182 = vsel %vm1176, %v1149, %v1058
  %v1183 = vsel %vm1176, %v1150, %v1060
  %v1184 = vsel %vm1176, %v1151, %v1062
  %v1185 = vsel %vm1176, %v1152, %v1064
  %v1186 = vsel %vm1176, %v1153, %v1066
  %v1187 = vsel %vm1176, %v1154, %v1068
  %v1188 = vsel %vm1176, %v1155, %v1070
  %v1189 = vsel %vm1176, %v1156, %v1072
  %v1190 = vsel %vm1176, %v1157, %v1074
  %v1191 = vsel %vm1176, %v1158, %v1076
  %v1192 = vsel %vm1176, %v1159, %v1078
  %v1193 = vsel %vm1176, %v1160, %v1080
  %v1194 = vsel %vm1176, %v1161, %v1082
  %v1195 = vsel %vm1176, %v1162, %v1084
  %v1196 = vsel %vm1176, %v1163, %v1086
  %v1197 = vsel %vm1176, %v1164, %v1088
  %v1198 = vsel %vm1176, %v1165, %v1090
  %v1199 = vsel %vm1176, %v1166, %v1092
  %v1200 = vsel %vm1176, %v1167, %v1094
  %v1201 = vsel %vm1176, %v1168, %v1096
  %v1202 = vsel %vm1176, %v1169, %v1098
  %v1203 = vsel %vm1176, %v1170, %v1100
  %v1204 = vsel %vm1176, %v1171, %v1102
  %v1205 = vsel %vm1176, %v1172, %v1104
  %v1206 = vsel %vm1176, %v1173, %v1106
  %v1207 = vsel %vm1176, %v1174, %v1108
  %v1208 = vsel %vm1176, %v1175, %v1110
  %v1209 = vpack.c.bf16 %v1178, %v1177
  %v1210 = vpack.c.bf16 %v1180, %v1179
  %v1211 = vpack.c.bf16 %v1182, %v1181
  %v1212 = vpack.c.bf16 %v1184, %v1183
  %v1213 = vpack.c.bf16 %v1186, %v1185
  %v1214 = vpack.c.bf16 %v1188, %v1187
  %v1215 = vpack.c.bf16 %v1190, %v1189
  %v1216 = vpack.c.bf16 %v1192, %v1191
  %v1217 = vpack.c.bf16 %v1194, %v1193
  %v1218 = vpack.c.bf16 %v1196, %v1195
  %v1219 = vpack.c.bf16 %v1198, %v1197
  %v1220 = vpack.c.bf16 %v1200, %v1199
  %v1221 = vpack.c.bf16 %v1202, %v1201
  %v1222 = vpack.c.bf16 %v1204, %v1203
  %v1223 = vpack.c.bf16 %v1206, %v1205
  %v1224 = vpack.c.bf16 %v1208, %v1207
  %v1225 = vld [vmem:[%s1 + $0x8] sm:$0xf]
  %v1226 = vld [vmem:[%s1 + $0xc] sm:$0xf]
  %v1227 = vld [vmem:[%s1 + $0x10] sm:$0xf]
  %v1228 = vld [vmem:[%s1 + $0x14] sm:$0xf]
  %v1229 = vld [vmem:[%s1 + $0x18] sm:$0xf]
  %v1230 = vld [vmem:[%s1 + $0x1c] sm:$0xf]
  %v1231 = vld [vmem:[%s2 + $0x1] sm:$0x1]
  %v1232 = vperm.slane %v1231, 0
  %v1239 = vunpack.c.l.b16 %v1225
  %v1240 = vunpack.c.l.b16 %v1226
  %v1241 = vunpack.c.l.b16 %v1227
  %v1242 = vunpack.c.l.b16 %v1228
  %v1243 = vunpack.c.l.b16 %v1229
  %v1244 = vunpack.c.l.b16 %v1230
  %v1245 = vpack.c.b16 %v1240, %v1239
  %v1246 = vpack.c.b16 %v1242, %v1241
  %v1247 = vpack.c.b16 %v1244, %v1243
  %vm1251 = vcmask 392192
  %v1253 = vsel %vm1251, %v1209, 0
  %v1256 = vsel %vm1251, %v1210, 0
  %v1259 = vsel %vm1251, %v1211, 0
  %v1262 = vsel %vm1251, %v1212, 0
  %v1265 = vsel %vm1251, %v1213, 0
  %v1268 = vsel %vm1251, %v1214, 0
  %v1271 = vsel %vm1251, %v1215, 0
  %v1274 = vsel %vm1251, %v1216, 0
  %v1277 = vsel %vm1251, %v1217, 0
  %v1280 = vsel %vm1251, %v1218, 0
  %v1283 = vsel %vm1251, %v1219, 0
  %v1286 = vsel %vm1251, %v1220, 0
  %v1289 = vsel %vm1251, %v1221, 0
  %v1292 = vsel %vm1251, %v1222, 0
  %v1295 = vsel %vm1251, %v1223, 0
  %v1298 = vsel %vm1251, %v1224, 0
  %1300 = vmatpush.bf16.msra.mxu0 0
  %1301 = vmatpush.bf16.msra.mxu0 0
  %1302 = vmatpush.bf16.msra.mxu0 0
  %1303 = vmatpush.bf16.msra.mxu0 0
  %1304 = vmatpush.bf16.msra.mxu0 0
  %1305 = vmatpush.bf16.msra.mxu0 %v1247
  %1306 = vmatpush.bf16.msra.mxu0 %v1246
  %1307 = vmatpush.bf16.msra.mxu0 %v1245
  %1308 = vmatmul.bf16.gmra.mxu0 %v1253
  %v1309 = vpop.f32.mrf.mxu0
  %v1310 = vadd.f32 %v1232, %v1309
  %v1311 = vpop.f32.mrf.mxu0
  %v1312 = vadd.f32 %v1232, %v1311
  %1313 = vmatmul.bf16.gmra.mxu0 %v1256
  %v1314 = vpop.f32.mrf.mxu0
  %v1315 = vadd.f32 %v1232, %v1314
  %v1316 = vpop.f32.mrf.mxu0
  %v1317 = vadd.f32 %v1232, %v1316
  %1318 = vmatmul.bf16.gmra.mxu0 %v1259
  %v1319 = vpop.f32.mrf.mxu0
  %v1320 = vadd.f32 %v1232, %v1319
  %v1321 = vpop.f32.mrf.mxu0
  %v1322 = vadd.f32 %v1232, %v1321
  %1323 = vmatmul.bf16.gmra.mxu0 %v1262
  %v1324 = vpop.f32.mrf.mxu0
  %v1325 = vadd.f32 %v1232, %v1324
  %v1326 = vpop.f32.mrf.mxu0
  %v1327 = vadd.f32 %v1232, %v1326
  %1328 = vmatmul.bf16.gmra.mxu0 %v1265
  %v1329 = vpop.f32.mrf.mxu0
  %v1330 = vadd.f32 %v1232, %v1329
  %v1331 = vpop.f32.mrf.mxu0
  %v1332 = vadd.f32 %v1232, %v1331
  %1333 = vmatmul.bf16.gmra.mxu0 %v1268
  %v1334 = vpop.f32.mrf.mxu0
  %v1335 = vadd.f32 %v1232, %v1334
  %v1336 = vpop.f32.mrf.mxu0
  %v1337 = vadd.f32 %v1232, %v1336
  %1338 = vmatmul.bf16.gmra.mxu0 %v1271
  %v1339 = vpop.f32.mrf.mxu0
  %v1340 = vadd.f32 %v1232, %v1339
  %v1341 = vpop.f32.mrf.mxu0
  %v1342 = vadd.f32 %v1232, %v1341
  %1343 = vmatmul.bf16.gmra.mxu0 %v1274
  %v1344 = vpop.f32.mrf.mxu0
  %v1345 = vadd.f32 %v1232, %v1344
  %v1346 = vpop.f32.mrf.mxu0
  %v1347 = vadd.f32 %v1232, %v1346
  %1348 = vmatmul.bf16.gmra.mxu0 %v1277
  %v1349 = vpop.f32.mrf.mxu0
  %v1350 = vadd.f32 %v1232, %v1349
  %v1351 = vpop.f32.mrf.mxu0
  %v1352 = vadd.f32 %v1232, %v1351
  %1353 = vmatmul.bf16.gmra.mxu0 %v1280
  %v1354 = vpop.f32.mrf.mxu0
  %v1355 = vadd.f32 %v1232, %v1354
  %v1356 = vpop.f32.mrf.mxu0
  %v1357 = vadd.f32 %v1232, %v1356
  %1358 = vmatmul.bf16.gmra.mxu0 %v1283
  %v1359 = vpop.f32.mrf.mxu0
  %v1360 = vadd.f32 %v1232, %v1359
  %v1361 = vpop.f32.mrf.mxu0
  %v1362 = vadd.f32 %v1232, %v1361
  %1363 = vmatmul.bf16.gmra.mxu0 %v1286
  %v1364 = vpop.f32.mrf.mxu0
  %v1365 = vadd.f32 %v1232, %v1364
  %v1366 = vpop.f32.mrf.mxu0
  %v1367 = vadd.f32 %v1232, %v1366
  %1368 = vmatmul.bf16.gmra.mxu0 %v1289
  %v1369 = vpop.f32.mrf.mxu0
  %v1370 = vadd.f32 %v1232, %v1369
  %v1371 = vpop.f32.mrf.mxu0
  %v1372 = vadd.f32 %v1232, %v1371
  %1373 = vmatmul.bf16.gmra.mxu0 %v1292
  %v1374 = vpop.f32.mrf.mxu0
  %v1375 = vadd.f32 %v1232, %v1374
  %v1376 = vpop.f32.mrf.mxu0
  %v1377 = vadd.f32 %v1232, %v1376
  %1378 = vmatmul.bf16.gmra.mxu0 %v1295
  %v1379 = vpop.f32.mrf.mxu0
  %v1380 = vadd.f32 %v1232, %v1379
  %v1381 = vpop.f32.mrf.mxu0
  %v1382 = vadd.f32 %v1232, %v1381
  %1383 = vmatmul.bf16.gmra.mxu0 %v1298
  %v1384 = vpop.f32.mrf.mxu0
  %v1385 = vadd.f32 %v1232, %v1384
  %v1386 = vpop.f32.mrf.mxu0
  %v1387 = vadd.f32 %v1232, %v1386
  %1388 = vdwg.mxu0
  %v1389 = vmax.f32 %v1310, 0.0
  %v1390 = vmax.f32 %v1312, 0.0
  %v1391 = vmax.f32 %v1315, 0.0
  %v1392 = vmax.f32 %v1317, 0.0
  %v1393 = vmax.f32 %v1320, 0.0
  %v1394 = vmax.f32 %v1322, 0.0
  %v1395 = vmax.f32 %v1325, 0.0
  %v1396 = vmax.f32 %v1327, 0.0
  %v1397 = vmax.f32 %v1330, 0.0
  %v1398 = vmax.f32 %v1332, 0.0
  %v1399 = vmax.f32 %v1335, 0.0
  %v1400 = vmax.f32 %v1337, 0.0
  %v1401 = vmax.f32 %v1340, 0.0
  %v1402 = vmax.f32 %v1342, 0.0
  %v1403 = vmax.f32 %v1345, 0.0
  %v1404 = vmax.f32 %v1347, 0.0
  %v1405 = vmax.f32 %v1350, 0.0
  %v1406 = vmax.f32 %v1352, 0.0
  %v1407 = vmax.f32 %v1355, 0.0
  %v1408 = vmax.f32 %v1357, 0.0
  %v1409 = vmax.f32 %v1360, 0.0
  %v1410 = vmax.f32 %v1362, 0.0
  %v1411 = vmax.f32 %v1365, 0.0
  %v1412 = vmax.f32 %v1367, 0.0
  %v1413 = vmax.f32 %v1370, 0.0
  %v1414 = vmax.f32 %v1372, 0.0
  %v1415 = vmax.f32 %v1375, 0.0
  %v1416 = vmax.f32 %v1377, 0.0
  %v1417 = vmax.f32 %v1380, 0.0
  %v1418 = vmax.f32 %v1382, 0.0
  %v1419 = vmax.f32 %v1385, 0.0
  %v1420 = vmax.f32 %v1387, 0.0
  %v1453 = vrot.slane %v1389, 7
  %v1454 = vrot.slane %v1390, 7
  %v1455 = vsel %vm182, %v1453, %v1454
  %v1456 = vrot.slane %v1391, 7
  %v1457 = vsel %vm182, %v1454, %v1456
  %v1458 = vrot.slane %v1392, 7
  %v1459 = vsel %vm182, %v1456, %v1458
  %v1460 = vrot.slane %v1393, 7
  %v1461 = vsel %vm182, %v1458, %v1460
  %v1462 = vrot.slane %v1394, 7
  %v1463 = vsel %vm182, %v1460, %v1462
  %v1464 = vrot.slane %v1395, 7
  %v1465 = vsel %vm182, %v1462, %v1464
  %v1466 = vrot.slane %v1396, 7
  %v1467 = vsel %vm182, %v1464, %v1466
  %v1468 = vrot.slane %v1397, 7
  %v1469 = vsel %vm182, %v1466, %v1468
  %v1470 = vrot.slane %v1398, 7
  %v1471 = vsel %vm182, %v1468, %v1470
  %v1472 = vrot.slane %v1399, 7
  %v1473 = vsel %vm182, %v1470, %v1472
  %v1474 = vrot.slane %v1400, 7
  %v1475 = vsel %vm182, %v1472, %v1474
  %v1476 = vrot.slane %v1401, 7
  %v1477 = vsel %vm182, %v1474, %v1476
  %v1478 = vrot.slane %v1402, 7
  %v1479 = vsel %vm182, %v1476, %v1478
  %v1480 = vrot.slane %v1403, 7
  %v1481 = vsel %vm182, %v1478, %v1480
  %v1482 = vrot.slane %v1404, 7
  %v1483 = vsel %vm182, %v1480, %v1482
  %v1484 = vrot.slane %v1405, 7
  %v1485 = vsel %vm182, %v1482, %v1484
  %v1486 = vrot.slane %v1406, 7
  %v1487 = vsel %vm182, %v1484, %v1486
  %v1488 = vrot.slane %v1407, 7
  %v1489 = vsel %vm182, %v1486, %v1488
  %v1490 = vrot.slane %v1408, 7
  %v1491 = vsel %vm182, %v1488, %v1490
  %v1492 = vrot.slane %v1409, 7
  %v1493 = vsel %vm182, %v1490, %v1492
  %v1494 = vrot.slane %v1410, 7
  %v1495 = vsel %vm182, %v1492, %v1494
  %v1496 = vrot.slane %v1411, 7
  %v1497 = vsel %vm182, %v1494, %v1496
  %v1498 = vrot.slane %v1412, 7
  %v1499 = vsel %vm182, %v1496, %v1498
  %v1500 = vrot.slane %v1413, 7
  %v1501 = vsel %vm182, %v1498, %v1500
  %v1502 = vrot.slane %v1414, 7
  %v1503 = vsel %vm182, %v1500, %v1502
  %v1504 = vrot.slane %v1415, 7
  %v1505 = vsel %vm182, %v1502, %v1504
  %v1506 = vrot.slane %v1416, 7
  %v1507 = vsel %vm182, %v1504, %v1506
  %v1508 = vrot.slane %v1417, 7
  %v1509 = vsel %vm182, %v1506, %v1508
  %v1510 = vrot.slane %v1418, 7
  %v1511 = vsel %vm182, %v1508, %v1510
  %v1512 = vrot.slane %v1419, 7
  %v1513 = vsel %vm182, %v1510, %v1512
  %v1514 = vrot.slane %v1420, 7
  %v1515 = vsel %vm182, %v1512, %v1514
  %v1548 = vsel %vm182, 0.0, %v1453
  %v1549 = vmul.f32 %v1548, %v473
  %v1550 = vmul.f32 %v1455, %v478
  %v1551 = vmul.f32 %v1457, %v483
  %v1552 = vmul.f32 %v1459, %v488
  %v1553 = vmul.f32 %v1461, %v493
  %v1554 = vmul.f32 %v1463, %v498
  %v1555 = vmul.f32 %v1465, %v503
  %v1556 = vmul.f32 %v1467, %v508
  %v1557 = vmul.f32 %v1469, %v513
  %v1558 = vmul.f32 %v1471, %v518
  %v1559 = vmul.f32 %v1473, %v523
  %v1560 = vmul.f32 %v1475, %v528
  %v1561 = vmul.f32 %v1477, %v533
  %v1562 = vmul.f32 %v1479, %v538
  %v1563 = vmul.f32 %v1481, %v543
  %v1564 = vmul.f32 %v1483, %v548
  %v1565 = vmul.f32 %v1485, %v553
  %v1566 = vmul.f32 %v1487, %v558
  %v1567 = vmul.f32 %v1489, %v563
  %v1568 = vmul.f32 %v1491, %v568
  %v1569 = vmul.f32 %v1493, %v573
  %v1570 = vmul.f32 %v1495, %v578
  %v1571 = vmul.f32 %v1497, %v583
  %v1572 = vmul.f32 %v1499, %v588
  %v1573 = vmul.f32 %v1501, %v593
  %v1574 = vmul.f32 %v1503, %v598
  %v1575 = vmul.f32 %v1505, %v603
  %v1576 = vmul.f32 %v1507, %v608
  %v1577 = vmul.f32 %v1509, %v613
  %v1578 = vmul.f32 %v1511, %v618
  %v1579 = vmul.f32 %v1513, %v623
  %v1580 = vmul.f32 %v1515, %v628
  %v1581 = vrot.slane %v1389, 1
  %v1582 = vrot.slane %v1390, 1
  %v1583 = vsel %vm662, %v1581, %v1582
  %v1584 = vrot.slane %v1391, 1
  %v1585 = vsel %vm662, %v1582, %v1584
  %v1586 = vrot.slane %v1392, 1
  %v1587 = vsel %vm662, %v1584, %v1586
  %v1588 = vrot.slane %v1393, 1
  %v1589 = vsel %vm662, %v1586, %v1588
  %v1590 = vrot.slane %v1394, 1
  %v1591 = vsel %vm662, %v1588, %v1590
  %v1592 = vrot.slane %v1395, 1
  %v1593 = vsel %vm662, %v1590, %v1592
  %v1594 = vrot.slane %v1396, 1
  %v1595 = vsel %vm662, %v1592, %v1594
  %v1596 = vrot.slane %v1397, 1
  %v1597 = vsel %vm662, %v1594, %v1596
  %v1598 = vrot.slane %v1398, 1
  %v1599 = vsel %vm662, %v1596, %v1598
  %v1600 = vrot.slane %v1399, 1
  %v1601 = vsel %vm662, %v1598, %v1600
  %v1602 = vrot.slane %v1400, 1
  %v1603 = vsel %vm662, %v1600, %v1602
  %v1604 = vrot.slane %v1401, 1
  %v1605 = vsel %vm662, %v1602, %v1604
  %v1606 = vrot.slane %v1402, 1
  %v1607 = vsel %vm662, %v1604, %v1606
  %v1608 = vrot.slane %v1403, 1
  %v1609 = vsel %vm662, %v1606, %v1608
  %v1610 = vrot.slane %v1404, 1
  %v1611 = vsel %vm662, %v1608, %v1610
  %v1612 = vrot.slane %v1405, 1
  %v1613 = vsel %vm662, %v1610, %v1612
  %v1614 = vrot.slane %v1406, 1
  %v1615 = vsel %vm662, %v1612, %v1614
  %v1616 = vrot.slane %v1407, 1
  %v1617 = vsel %vm662, %v1614, %v1616
  %v1618 = vrot.slane %v1408, 1
  %v1619 = vsel %vm662, %v1616, %v1618
  %v1620 = vrot.slane %v1409, 1
  %v1621 = vsel %vm662, %v1618, %v1620
  %v1622 = vrot.slane %v1410, 1
  %v1623 = vsel %vm662, %v1620, %v1622
  %v1624 = vrot.slane %v1411, 1
  %v1625 = vsel %vm662, %v1622, %v1624
  %v1626 = vrot.slane %v1412, 1
  %v1627 = vsel %vm662, %v1624, %v1626
  %v1628 = vrot.slane %v1413, 1
  %v1629 = vsel %vm662, %v1626, %v1628
  %v1630 = vrot.slane %v1414, 1
  %v1631 = vsel %vm662, %v1628, %v1630
  %v1632 = vrot.slane %v1415, 1
  %v1633 = vsel %vm662, %v1630, %v1632
  %v1634 = vrot.slane %v1416, 1
  %v1635 = vsel %vm662, %v1632, %v1634
  %v1636 = vrot.slane %v1417, 1
  %v1637 = vsel %vm662, %v1634, %v1636
  %v1638 = vrot.slane %v1418, 1
  %v1639 = vsel %vm662, %v1636, %v1638
  %v1640 = vrot.slane %v1419, 1
  %v1641 = vsel %vm662, %v1638, %v1640
  %v1642 = vrot.slane %v1420, 1
  %v1643 = vsel %vm662, %v1640, %v1642
  %v1676 = vsel %vm662, %v1642, 0.0
  %v1677 = vmul.f32 %v1583, %v761
  %v1678 = vmul.f32 %v1585, %v765
  %v1679 = vmul.f32 %v1587, %v769
  %v1680 = vmul.f32 %v1589, %v773
  %v1681 = vmul.f32 %v1591, %v777
  %v1682 = vmul.f32 %v1593, %v781
  %v1683 = vmul.f32 %v1595, %v785
  %v1684 = vmul.f32 %v1597, %v789
  %v1685 = vmul.f32 %v1599, %v793
  %v1686 = vmul.f32 %v1601, %v797
  %v1687 = vmul.f32 %v1603, %v801
  %v1688 = vmul.f32 %v1605, %v805
  %v1689 = vmul.f32 %v1607, %v809
  %v1690 = vmul.f32 %v1609, %v813
  %v1691 = vmul.f32 %v1611, %v817
  %v1692 = vmul.f32 %v1613, %v821
  %v1693 = vmul.f32 %v1615, %v825
  %v1694 = vmul.f32 %v1617, %v829
  %v1695 = vmul.f32 %v1619, %v833
  %v1696 = vmul.f32 %v1621, %v837
  %v1697 = vmul.f32 %v1623, %v841
  %v1698 = vmul.f32 %v1625, %v845
  %v1699 = vmul.f32 %v1627, %v849
  %v1700 = vmul.f32 %v1629, %v853
  %v1701 = vmul.f32 %v1631, %v857
  %v1702 = vmul.f32 %v1633, %v861
  %v1703 = vmul.f32 %v1635, %v865
  %v1704 = vmul.f32 %v1637, %v869
  %v1705 = vmul.f32 %v1639, %v873
  %v1706 = vmul.f32 %v1641, %v877
  %v1707 = vmul.f32 %v1643, %v881
  %v1708 = vmul.f32 %v1676, %v885
  %1709 = vrot.lane.b32.xlu0 %v1389, 16
  %v1710 = vpop.permute.xlu0 %1709
  %1711 = vrot.lane.b32.xlu0 %v1390, 16
  %v1712 = vpop.permute.xlu0 %1711
  %1713 = vrot.lane.b32.xlu0 %v1391, 16
  %v1714 = vpop.permute.xlu0 %1713
  %1715 = vrot.lane.b32.xlu0 %v1392, 16
  %v1716 = vpop.permute.xlu0 %1715
  %1717 = vrot.lane.b32.xlu0 %v1393, 16
  %v1718 = vpop.permute.xlu0 %1717
  %1719 = vrot.lane.b32.xlu0 %v1394, 16
  %v1720 = vpop.permute.xlu0 %1719
  %1721 = vrot.lane.b32.xlu0 %v1395, 16
  %v1722 = vpop.permute.xlu0 %1721
  %1723 = vrot.lane.b32.xlu0 %v1396, 16
  %v1724 = vpop.permute.xlu0 %1723
  %1725 = vrot.lane.b32.xlu0 %v1397, 16
  %v1726 = vpop.permute.xlu0 %1725
  %1727 = vrot.lane.b32.xlu0 %v1398, 16
  %v1728 = vpop.permute.xlu0 %1727
  %1729 = vrot.lane.b32.xlu0 %v1399, 16
  %v1730 = vpop.permute.xlu0 %1729
  %1731 = vrot.lane.b32.xlu0 %v1400, 16
  %v1732 = vpop.permute.xlu0 %1731
  %1733 = vrot.lane.b32.xlu0 %v1401, 16
  %v1734 = vpop.permute.xlu0 %1733
  %1735 = vrot.lane.b32.xlu0 %v1402, 16
  %v1736 = vpop.permute.xlu0 %1735
  %1737 = vrot.lane.b32.xlu0 %v1403, 16
  %v1738 = vpop.permute.xlu0 %1737
  %1739 = vrot.lane.b32.xlu0 %v1404, 16
  %v1740 = vpop.permute.xlu0 %1739
  %1741 = vrot.lane.b32.xlu0 %v1405, 16
  %v1742 = vpop.permute.xlu0 %1741
  %1743 = vrot.lane.b32.xlu0 %v1406, 16
  %v1744 = vpop.permute.xlu0 %1743
  %1745 = vrot.lane.b32.xlu0 %v1407, 16
  %v1746 = vpop.permute.xlu0 %1745
  %1747 = vrot.lane.b32.xlu0 %v1408, 16
  %v1748 = vpop.permute.xlu0 %1747
  %1749 = vrot.lane.b32.xlu0 %v1409, 16
  %v1750 = vpop.permute.xlu0 %1749
  %1751 = vrot.lane.b32.xlu0 %v1410, 16
  %v1752 = vpop.permute.xlu0 %1751
  %1753 = vrot.lane.b32.xlu0 %v1411, 16
  %v1754 = vpop.permute.xlu0 %1753
  %1755 = vrot.lane.b32.xlu0 %v1412, 16
  %v1756 = vpop.permute.xlu0 %1755
  %1757 = vrot.lane.b32.xlu0 %v1413, 16
  %v1758 = vpop.permute.xlu0 %1757
  %1759 = vrot.lane.b32.xlu0 %v1414, 16
  %v1760 = vpop.permute.xlu0 %1759
  %1761 = vrot.lane.b32.xlu0 %v1415, 16
  %v1762 = vpop.permute.xlu0 %1761
  %1763 = vrot.lane.b32.xlu0 %v1416, 16
  %v1764 = vpop.permute.xlu0 %1763
  %1765 = vrot.lane.b32.xlu0 %v1417, 16
  %v1766 = vpop.permute.xlu0 %1765
  %1767 = vrot.lane.b32.xlu0 %v1418, 16
  %v1768 = vpop.permute.xlu0 %1767
  %1769 = vrot.lane.b32.xlu0 %v1419, 16
  %v1770 = vpop.permute.xlu0 %1769
  %1771 = vrot.lane.b32.xlu0 %v1420, 16
  %v1772 = vpop.permute.xlu0 %1771
  %1837 = vrot.lane.b32.xlu0 %v1677, 32
  %v1838 = vpop.permute.xlu0 %1837
  %1839 = vrot.lane.b32.xlu0 %v1678, 32
  %v1840 = vpop.permute.xlu0 %1839
  %1841 = vrot.lane.b32.xlu0 %v1679, 32
  %v1842 = vpop.permute.xlu0 %1841
  %1843 = vrot.lane.b32.xlu0 %v1680, 32
  %v1844 = vpop.permute.xlu0 %1843
  %1845 = vrot.lane.b32.xlu0 %v1681, 32
  %v1846 = vpop.permute.xlu0 %1845
  %1847 = vrot.lane.b32.xlu0 %v1682, 32
  %v1848 = vpop.permute.xlu0 %1847
  %1849 = vrot.lane.b32.xlu0 %v1683, 32
  %v1850 = vpop.permute.xlu0 %1849
  %1851 = vrot.lane.b32.xlu0 %v1684, 32
  %v1852 = vpop.permute.xlu0 %1851
  %1853 = vrot.lane.b32.xlu0 %v1685, 32
  %v1854 = vpop.permute.xlu0 %1853
  %1855 = vrot.lane.b32.xlu0 %v1686, 32
  %v1856 = vpop.permute.xlu0 %1855
  %1857 = vrot.lane.b32.xlu0 %v1687, 32
  %v1858 = vpop.permute.xlu0 %1857
  %1859 = vrot.lane.b32.xlu0 %v1688, 32
  %v1860 = vpop.permute.xlu0 %1859
  %1861 = vrot.lane.b32.xlu0 %v1689, 32
  %v1862 = vpop.permute.xlu0 %1861
  %1863 = vrot.lane.b32.xlu0 %v1690, 32
  %v1864 = vpop.permute.xlu0 %1863
  %1865 = vrot.lane.b32.xlu0 %v1691, 32
  %v1866 = vpop.permute.xlu0 %1865
  %1867 = vrot.lane.b32.xlu0 %v1692, 32
  %v1868 = vpop.permute.xlu0 %1867
  %1869 = vrot.lane.b32.xlu0 %v1693, 32
  %v1870 = vpop.permute.xlu0 %1869
  %1871 = vrot.lane.b32.xlu0 %v1694, 32
  %v1872 = vpop.permute.xlu0 %1871
  %1873 = vrot.lane.b32.xlu0 %v1695, 32
  %v1874 = vpop.permute.xlu0 %1873
  %1875 = vrot.lane.b32.xlu0 %v1696, 32
  %v1876 = vpop.permute.xlu0 %1875
  %1877 = vrot.lane.b32.xlu0 %v1697, 32
  %v1878 = vpop.permute.xlu0 %1877
  %1879 = vrot.lane.b32.xlu0 %v1698, 32
  %v1880 = vpop.permute.xlu0 %1879
  %1881 = vrot.lane.b32.xlu0 %v1699, 32
  %v1882 = vpop.permute.xlu0 %1881
  %1883 = vrot.lane.b32.xlu0 %v1700, 32
  %v1884 = vpop.permute.xlu0 %1883
  %1885 = vrot.lane.b32.xlu0 %v1701, 32
  %v1886 = vpop.permute.xlu0 %1885
  %1887 = vrot.lane.b32.xlu0 %v1702, 32
  %v1888 = vpop.permute.xlu0 %1887
  %1889 = vrot.lane.b32.xlu0 %v1703, 32
  %v1890 = vpop.permute.xlu0 %1889
  %1891 = vrot.lane.b32.xlu0 %v1704, 32
  %v1892 = vpop.permute.xlu0 %1891
  %1893 = vrot.lane.b32.xlu0 %v1705, 32
  %v1894 = vpop.permute.xlu0 %1893
  %1895 = vrot.lane.b32.xlu0 %v1706, 32
  %v1896 = vpop.permute.xlu0 %1895
  %1897 = vrot.lane.b32.xlu0 %v1707, 32
  %v1898 = vpop.permute.xlu0 %1897
  %1899 = vrot.lane.b32.xlu0 %v1708, 32
  %v1900 = vpop.permute.xlu0 %1899
  %v1933 = vsel %vm1143, %v1549, %v1710
  %v1934 = vsel %vm1143, %v1550, %v1712
  %v1935 = vsel %vm1143, %v1551, %v1714
  %v1936 = vsel %vm1143, %v1552, %v1716
  %v1937 = vsel %vm1143, %v1553, %v1718
  %v1938 = vsel %vm1143, %v1554, %v1720
  %v1939 = vsel %vm1143, %v1555, %v1722
  %v1940 = vsel %vm1143, %v1556, %v1724
  %v1941 = vsel %vm1143, %v1557, %v1726
  %v1942 = vsel %vm1143, %v1558, %v1728
  %v1943 = vsel %vm1143, %v1559, %v1730
  %v1944 = vsel %vm1143, %v1560, %v1732
  %v1945 = vsel %vm1143, %v1561, %v1734
  %v1946 = vsel %vm1143, %v1562, %v1736
  %v1947 = vsel %vm1143, %v1563, %v1738
  %v1948 = vsel %vm1143, %v1564, %v1740
  %v1949 = vsel %vm1143, %v1565, %v1742
  %v1950 = vsel %vm1143, %v1566, %v1744
  %v1951 = vsel %vm1143, %v1567, %v1746
  %v1952 = vsel %vm1143, %v1568, %v1748
  %v1953 = vsel %vm1143, %v1569, %v1750
  %v1954 = vsel %vm1143, %v1570, %v1752
  %v1955 = vsel %vm1143, %v1571, %v1754
  %v1956 = vsel %vm1143, %v1572, %v1756
  %v1957 = vsel %vm1143, %v1573, %v1758
  %v1958 = vsel %vm1143, %v1574, %v1760
  %v1959 = vsel %vm1143, %v1575, %v1762
  %v1960 = vsel %vm1143, %v1576, %v1764
  %v1961 = vsel %vm1143, %v1577, %v1766
  %v1962 = vsel %vm1143, %v1578, %v1768
  %v1963 = vsel %vm1143, %v1579, %v1770
  %v1964 = vsel %vm1143, %v1580, %v1772
  %v1965 = vsel %vm1176, %v1933, %v1838
  %v1966 = vsel %vm1176, %v1934, %v1840
  %v1967 = vsel %vm1176, %v1935, %v1842
  %v1968 = vsel %vm1176, %v1936, %v1844
  %v1969 = vsel %vm1176, %v1937, %v1846
  %v1970 = vsel %vm1176, %v1938, %v1848
  %v1971 = vsel %vm1176, %v1939, %v1850
  %v1972 = vsel %vm1176, %v1940, %v1852
  %v1973 = vsel %vm1176, %v1941, %v1854
  %v1974 = vsel %vm1176, %v1942, %v1856
  %v1975 = vsel %vm1176, %v1943, %v1858
  %v1976 = vsel %vm1176, %v1944, %v1860
  %v1977 = vsel %vm1176, %v1945, %v1862
  %v1978 = vsel %vm1176, %v1946, %v1864
  %v1979 = vsel %vm1176, %v1947, %v1866
  %v1980 = vsel %vm1176, %v1948, %v1868
  %v1981 = vsel %vm1176, %v1949, %v1870
  %v1982 = vsel %vm1176, %v1950, %v1872
  %v1983 = vsel %vm1176, %v1951, %v1874
  %v1984 = vsel %vm1176, %v1952, %v1876
  %v1985 = vsel %vm1176, %v1953, %v1878
  %v1986 = vsel %vm1176, %v1954, %v1880
  %v1987 = vsel %vm1176, %v1955, %v1882
  %v1988 = vsel %vm1176, %v1956, %v1884
  %v1989 = vsel %vm1176, %v1957, %v1886
  %v1990 = vsel %vm1176, %v1958, %v1888
  %v1991 = vsel %vm1176, %v1959, %v1890
  %v1992 = vsel %vm1176, %v1960, %v1892
  %v1993 = vsel %vm1176, %v1961, %v1894
  %v1994 = vsel %vm1176, %v1962, %v1896
  %v1995 = vsel %vm1176, %v1963, %v1898
  %v1996 = vsel %vm1176, %v1964, %v1900
  %v1997 = vpack.c.bf16 %v1966, %v1965
  %v1998 = vpack.c.bf16 %v1968, %v1967
  %v1999 = vpack.c.bf16 %v1970, %v1969
  %v2000 = vpack.c.bf16 %v1972, %v1971
  %v2001 = vpack.c.bf16 %v1974, %v1973
  %v2002 = vpack.c.bf16 %v1976, %v1975
  %v2003 = vpack.c.bf16 %v1978, %v1977
  %v2004 = vpack.c.bf16 %v1980, %v1979
  %v2005 = vpack.c.bf16 %v1982, %v1981
  %v2006 = vpack.c.bf16 %v1984, %v1983
  %v2007 = vpack.c.bf16 %v1986, %v1985
  %v2008 = vpack.c.bf16 %v1988, %v1987
  %v2009 = vpack.c.bf16 %v1990, %v1989
  %v2010 = vpack.c.bf16 %v1992, %v1991
  %v2011 = vpack.c.bf16 %v1994, %v1993
  %v2012 = vpack.c.bf16 %v1996, %v1995
  %v2013 = vld [vmem:[%s1 + $0x20] sm:$0xf]
  %v2014 = vld [vmem:[%s1 + $0x24] sm:$0xf]
  %v2015 = vld [vmem:[%s1 + $0x28] sm:$0xf]
  %v2016 = vld [vmem:[%s1 + $0x2c] sm:$0xf]
  %v2017 = vld [vmem:[%s1 + $0x30] sm:$0xf]
  %v2018 = vld [vmem:[%s1 + $0x34] sm:$0xf]
  %v2019 = vld [vmem:[%s2 + $0x2] sm:$0x1]
  %v2020 = vperm.slane %v2019, 0
  %v2027 = vunpack.c.l.b16 %v2013
  %v2028 = vunpack.c.l.b16 %v2014
  %v2029 = vunpack.c.l.b16 %v2015
  %v2030 = vunpack.c.l.b16 %v2016
  %v2031 = vunpack.c.l.b16 %v2017
  %v2032 = vunpack.c.l.b16 %v2018
  %v2033 = vpack.c.b16 %v2028, %v2027
  %v2034 = vpack.c.b16 %v2030, %v2029
  %v2035 = vpack.c.b16 %v2032, %v2031
  %v2040 = vsel %vm1251, %v1997, 0
  %v2043 = vsel %vm1251, %v1998, 0
  %v2046 = vsel %vm1251, %v1999, 0
  %v2049 = vsel %vm1251, %v2000, 0
  %v2052 = vsel %vm1251, %v2001, 0
  %v2055 = vsel %vm1251, %v2002, 0
  %v2058 = vsel %vm1251, %v2003, 0
  %v2061 = vsel %vm1251, %v2004, 0
  %v2064 = vsel %vm1251, %v2005, 0
  %v2067 = vsel %vm1251, %v2006, 0
  %v2070 = vsel %vm1251, %v2007, 0
  %v2073 = vsel %vm1251, %v2008, 0
  %v2076 = vsel %vm1251, %v2009, 0
  %v2079 = vsel %vm1251, %v2010, 0
  %v2082 = vsel %vm1251, %v2011, 0
  %v2085 = vsel %vm1251, %v2012, 0
  %2087 = vmatpush.bf16.msra.mxu0 0
  %2088 = vmatpush.bf16.msra.mxu0 0
  %2089 = vmatpush.bf16.msra.mxu0 0
  %2090 = vmatpush.bf16.msra.mxu0 0
  %2091 = vmatpush.bf16.msra.mxu0 0
  %2092 = vmatpush.bf16.msra.mxu0 %v2035
  %2093 = vmatpush.bf16.msra.mxu0 %v2034
  %2094 = vmatpush.bf16.msra.mxu0 %v2033
  %2095 = vmatmul.bf16.gmra.mxu0 %v2040
  %v2096 = vpop.f32.mrf.mxu0
  %v2097 = vadd.f32 %v2020, %v2096
  %v2098 = vpop.f32.mrf.mxu0
  %v2099 = vadd.f32 %v2020, %v2098
  %2100 = vmatmul.bf16.gmra.mxu0 %v2043
  %v2101 = vpop.f32.mrf.mxu0
  %v2102 = vadd.f32 %v2020, %v2101
  %v2103 = vpop.f32.mrf.mxu0
  %v2104 = vadd.f32 %v2020, %v2103
  %2105 = vmatmul.bf16.gmra.mxu0 %v2046
  %v2106 = vpop.f32.mrf.mxu0
  %v2107 = vadd.f32 %v2020, %v2106
  %v2108 = vpop.f32.mrf.mxu0
  %v2109 = vadd.f32 %v2020, %v2108
  %2110 = vmatmul.bf16.gmra.mxu0 %v2049
  %v2111 = vpop.f32.mrf.mxu0
  %v2112 = vadd.f32 %v2020, %v2111
  %v2113 = vpop.f32.mrf.mxu0
  %v2114 = vadd.f32 %v2020, %v2113
  %2115 = vmatmul.bf16.gmra.mxu0 %v2052
  %v2116 = vpop.f32.mrf.mxu0
  %v2117 = vadd.f32 %v2020, %v2116
  %v2118 = vpop.f32.mrf.mxu0
  %v2119 = vadd.f32 %v2020, %v2118
  %2120 = vmatmul.bf16.gmra.mxu0 %v2055
  %v2121 = vpop.f32.mrf.mxu0
  %v2122 = vadd.f32 %v2020, %v2121
  %v2123 = vpop.f32.mrf.mxu0
  %v2124 = vadd.f32 %v2020, %v2123
  %2125 = vmatmul.bf16.gmra.mxu0 %v2058
  %v2126 = vpop.f32.mrf.mxu0
  %v2127 = vadd.f32 %v2020, %v2126
  %v2128 = vpop.f32.mrf.mxu0
  %v2129 = vadd.f32 %v2020, %v2128
  %2130 = vmatmul.bf16.gmra.mxu0 %v2061
  %v2131 = vpop.f32.mrf.mxu0
  %v2132 = vadd.f32 %v2020, %v2131
  %v2133 = vpop.f32.mrf.mxu0
  %v2134 = vadd.f32 %v2020, %v2133
  %2135 = vmatmul.bf16.gmra.mxu0 %v2064
  %v2136 = vpop.f32.mrf.mxu0
  %v2137 = vadd.f32 %v2020, %v2136
  %v2138 = vpop.f32.mrf.mxu0
  %v2139 = vadd.f32 %v2020, %v2138
  %2140 = vmatmul.bf16.gmra.mxu0 %v2067
  %v2141 = vpop.f32.mrf.mxu0
  %v2142 = vadd.f32 %v2020, %v2141
  %v2143 = vpop.f32.mrf.mxu0
  %v2144 = vadd.f32 %v2020, %v2143
  %2145 = vmatmul.bf16.gmra.mxu0 %v2070
  %v2146 = vpop.f32.mrf.mxu0
  %v2147 = vadd.f32 %v2020, %v2146
  %v2148 = vpop.f32.mrf.mxu0
  %v2149 = vadd.f32 %v2020, %v2148
  %2150 = vmatmul.bf16.gmra.mxu0 %v2073
  %v2151 = vpop.f32.mrf.mxu0
  %v2152 = vadd.f32 %v2020, %v2151
  %v2153 = vpop.f32.mrf.mxu0
  %v2154 = vadd.f32 %v2020, %v2153
  %2155 = vmatmul.bf16.gmra.mxu0 %v2076
  %v2156 = vpop.f32.mrf.mxu0
  %v2157 = vadd.f32 %v2020, %v2156
  %v2158 = vpop.f32.mrf.mxu0
  %v2159 = vadd.f32 %v2020, %v2158
  %2160 = vmatmul.bf16.gmra.mxu0 %v2079
  %v2161 = vpop.f32.mrf.mxu0
  %v2162 = vadd.f32 %v2020, %v2161
  %v2163 = vpop.f32.mrf.mxu0
  %v2164 = vadd.f32 %v2020, %v2163
  %2165 = vmatmul.bf16.gmra.mxu0 %v2082
  %v2166 = vpop.f32.mrf.mxu0
  %v2167 = vadd.f32 %v2020, %v2166
  %v2168 = vpop.f32.mrf.mxu0
  %v2169 = vadd.f32 %v2020, %v2168
  %2170 = vmatmul.bf16.gmra.mxu0 %v2085
  %v2171 = vpop.f32.mrf.mxu0
  %v2172 = vadd.f32 %v2020, %v2171
  %v2173 = vpop.f32.mrf.mxu0
  %v2174 = vadd.f32 %v2020, %v2173
  %2175 = vdwg.mxu0
  %v2176 = vadd.f32 %v2097, %v278
  %v2177 = vadd.f32 %v2099, %v279
  %v2178 = vadd.f32 %v2102, %v280
  %v2179 = vadd.f32 %v2104, %v281
  %v2180 = vadd.f32 %v2107, %v282
  %v2181 = vadd.f32 %v2109, %v283
  %v2182 = vadd.f32 %v2112, %v284
  %v2183 = vadd.f32 %v2114, %v285
  %v2184 = vadd.f32 %v2117, %v286
  %v2185 = vadd.f32 %v2119, %v287
  %v2186 = vadd.f32 %v2122, %v288
  %v2187 = vadd.f32 %v2124, %v289
  %v2188 = vadd.f32 %v2127, %v290
  %v2189 = vadd.f32 %v2129, %v291
  %v2190 = vadd.f32 %v2132, %v292
  %v2191 = vadd.f32 %v2134, %v293
  %v2192 = vadd.f32 %v2137, %v294
  %v2193 = vadd.f32 %v2139, %v295
  %v2194 = vadd.f32 %v2142, %v296
  %v2195 = vadd.f32 %v2144, %v297
  %v2196 = vadd.f32 %v2147, %v298
  %v2197 = vadd.f32 %v2149, %v299
  %v2198 = vadd.f32 %v2152, %v300
  %v2199 = vadd.f32 %v2154, %v301
  %v2200 = vadd.f32 %v2157, %v302
  %v2201 = vadd.f32 %v2159, %v303
  %v2202 = vadd.f32 %v2162, %v304
  %v2203 = vadd.f32 %v2164, %v305
  %v2204 = vadd.f32 %v2167, %v306
  %v2205 = vadd.f32 %v2169, %v307
  %v2206 = vadd.f32 %v2172, %v308
  %v2207 = vadd.f32 %v2174, %v309
  %v2208 = vmax.f32 %v2176, 0.0
  %v2209 = vmax.f32 %v2177, 0.0
  %v2210 = vmax.f32 %v2178, 0.0
  %v2211 = vmax.f32 %v2179, 0.0
  %v2212 = vmax.f32 %v2180, 0.0
  %v2213 = vmax.f32 %v2181, 0.0
  %v2214 = vmax.f32 %v2182, 0.0
  %v2215 = vmax.f32 %v2183, 0.0
  %v2216 = vmax.f32 %v2184, 0.0
  %v2217 = vmax.f32 %v2185, 0.0
  %v2218 = vmax.f32 %v2186, 0.0
  %v2219 = vmax.f32 %v2187, 0.0
  %v2220 = vmax.f32 %v2188, 0.0
  %v2221 = vmax.f32 %v2189, 0.0
  %v2222 = vmax.f32 %v2190, 0.0
  %v2223 = vmax.f32 %v2191, 0.0
  %v2224 = vmax.f32 %v2192, 0.0
  %v2225 = vmax.f32 %v2193, 0.0
  %v2226 = vmax.f32 %v2194, 0.0
  %v2227 = vmax.f32 %v2195, 0.0
  %v2228 = vmax.f32 %v2196, 0.0
  %v2229 = vmax.f32 %v2197, 0.0
  %v2230 = vmax.f32 %v2198, 0.0
  %v2231 = vmax.f32 %v2199, 0.0
  %v2232 = vmax.f32 %v2200, 0.0
  %v2233 = vmax.f32 %v2201, 0.0
  %v2234 = vmax.f32 %v2202, 0.0
  %v2235 = vmax.f32 %v2203, 0.0
  %v2236 = vmax.f32 %v2204, 0.0
  %v2237 = vmax.f32 %v2205, 0.0
  %v2238 = vmax.f32 %v2206, 0.0
  %v2239 = vmax.f32 %v2207, 0.0
  %2240 = vst.msk [vmem:[#allocation2] sm:$0xff] %vm1143, %v2208
  %2241 = vst.msk [vmem:[#allocation2 + $0x8] sm:$0xff] %vm1143, %v2209
  %2242 = vst.msk [vmem:[#allocation2 + $0x10] sm:$0xff] %vm1143, %v2210
  %2243 = vst.msk [vmem:[#allocation2 + $0x18] sm:$0xff] %vm1143, %v2211
  %2244 = vst.msk [vmem:[#allocation2 + $0x20] sm:$0xff] %vm1143, %v2212
  %2245 = vst.msk [vmem:[#allocation2 + $0x28] sm:$0xff] %vm1143, %v2213
  %2246 = vst.msk [vmem:[#allocation2 + $0x30] sm:$0xff] %vm1143, %v2214
  %2247 = vst.msk [vmem:[#allocation2 + $0x38] sm:$0xff] %vm1143, %v2215
  %2248 = vst.msk [vmem:[#allocation2 + $0x40] sm:$0xff] %vm1143, %v2216
  %2249 = vst.msk [vmem:[#allocation2 + $0x48] sm:$0xff] %vm1143, %v2217
  %2250 = vst.msk [vmem:[#allocation2 + $0x50] sm:$0xff] %vm1143, %v2218
  %2251 = vst.msk [vmem:[#allocation2 + $0x58] sm:$0xff] %vm1143, %v2219
  %2252 = vst.msk [vmem:[#allocation2 + $0x60] sm:$0xff] %vm1143, %v2220
  %2253 = vst.msk [vmem:[#allocation2 + $0x68] sm:$0xff] %vm1143, %v2221
  %2254 = vst.msk [vmem:[#allocation2 + $0x70] sm:$0xff] %vm1143, %v2222
  %2255 = vst.msk [vmem:[#allocation2 + $0x78] sm:$0xff] %vm1143, %v2223
  %2256 = vst.msk [vmem:[#allocation2 + $0x80] sm:$0xff] %vm1143, %v2224
  %2257 = vst.msk [vmem:[#allocation2 + $0x88] sm:$0xff] %vm1143, %v2225
  %2258 = vst.msk [vmem:[#allocation2 + $0x90] sm:$0xff] %vm1143, %v2226
  %2259 = vst.msk [vmem:[#allocation2 + $0x98] sm:$0xff] %vm1143, %v2227
  %2260 = vst.msk [vmem:[#allocation2 + $0xa0] sm:$0xff] %vm1143, %v2228
  %2261 = vst.msk [vmem:[#allocation2 + $0xa8] sm:$0xff] %vm1143, %v2229
  %2262 = vst.msk [vmem:[#allocation2 + $0xb0] sm:$0xff] %vm1143, %v2230
  %2263 = vst.msk [vmem:[#allocation2 + $0xb8] sm:$0xff] %vm1143, %v2231
  %2264 = vst.msk [vmem:[#allocation2 + $0xc0] sm:$0xff] %vm1143, %v2232
  %2265 = vst.msk [vmem:[#allocation2 + $0xc8] sm:$0xff] %vm1143, %v2233
  %2266 = vst.msk [vmem:[#allocation2 + $0xd0] sm:$0xff] %vm1143, %v2234
  %2267 = vst.msk [vmem:[#allocation2 + $0xd8] sm:$0xff] %vm1143, %v2235
  %2268 = vst.msk [vmem:[#allocation2 + $0xe0] sm:$0xff] %vm1143, %v2236
  %2269 = vst.msk [vmem:[#allocation2 + $0xe8] sm:$0xff] %vm1143, %v2237
  %2270 = vst.msk [vmem:[#allocation2 + $0xf0] sm:$0xff] %vm1143, %v2238
  %2271 = vst.msk [vmem:[#allocation2 + $0xf8] sm:$0xff] %vm1143, %v2239
  %v2272 = vld [vmem:[#allocation2] ss:$2 sm:$0xff]
  %s2273 = scalar_lea.vmem [#allocation2], 16
  %v2274 = vld [vmem:[%s2273] ss:$2 sm:$0xff]
  %s2275 = scalar_lea.vmem [#allocation2], 32
  %v2276 = vld [vmem:[%s2275] ss:$2 sm:$0xff]
  %s2277 = scalar_lea.vmem [#allocation2], 48
  %v2278 = vld [vmem:[%s2277] ss:$2 sm:$0xff]
  %s2279 = scalar_lea.vmem [#allocation2], 64
  %v2280 = vld [vmem:[%s2279] ss:$2 sm:$0xff]
  %s2281 = scalar_lea.vmem [#allocation2], 80
  %v2282 = vld [vmem:[%s2281] ss:$2 sm:$0xff]
  %s2283 = scalar_lea.vmem [#allocation2], 96
  %v2284 = vld [vmem:[%s2283] ss:$2 sm:$0xff]
  %s2285 = scalar_lea.vmem [#allocation2], 112
  %v2286 = vld [vmem:[%s2285] ss:$2 sm:$0xff]
  %s2287 = scalar_lea.vmem [#allocation2], 128
  %v2288 = vld [vmem:[%s2287] ss:$2 sm:$0xff]
  %s2289 = scalar_lea.vmem [#allocation2], 144
  %v2290 = vld [vmem:[%s2289] ss:$2 sm:$0xff]
  %s2291 = scalar_lea.vmem [#allocation2], 160
  %v2292 = vld [vmem:[%s2291] ss:$2 sm:$0xff]
  %s2293 = scalar_lea.vmem [#allocation2], 176
  %v2294 = vld [vmem:[%s2293] ss:$2 sm:$0xff]
  %s2295 = scalar_lea.vmem [#allocation2], 192
  %v2296 = vld [vmem:[%s2295] ss:$2 sm:$0xff]
  %s2297 = scalar_lea.vmem [#allocation2], 208
  %v2298 = vld [vmem:[%s2297] ss:$2 sm:$0xff]
  %s2299 = scalar_lea.vmem [#allocation2], 224
  %v2300 = vld [vmem:[%s2299] ss:$2 sm:$0xff]
  %s2301 = scalar_lea.vmem [#allocation2], 240
  %v2302 = vld [vmem:[%s2301] ss:$2 sm:$0xff]
  %s2303 = scalar_lea.vmem [#allocation2], 1
  %v2304 = vld [vmem:[%s2303] ss:$2 sm:$0xff]
  %s2305 = scalar_lea.vmem [#allocation2], 17
  %v2306 = vld [vmem:[%s2305] ss:$2 sm:$0xff]
  %s2307 = scalar_lea.vmem [#allocation2], 33
  %v2308 = vld [vmem:[%s2307] ss:$2 sm:$0xff]
  %s2309 = scalar_lea.vmem [#allocation2], 49
  %v2310 = vld [vmem:[%s2309] ss:$2 sm:$0xff]
  %s2311 = scalar_lea.vmem [#allocation2], 65
  %v2312 = vld [vmem:[%s2311] ss:$2 sm:$0xff]
  %s2313 = scalar_lea.vmem [#allocation2], 81
  %v2314 = vld [vmem:[%s2313] ss:$2 sm:$0xff]
  %s2315 = scalar_lea.vmem [#allocation2], 97
  %v2316 = vld [vmem:[%s2315] ss:$2 sm:$0xff]
  %s2317 = scalar_lea.vmem [#allocation2], 113
  %v2318 = vld [vmem:[%s2317] ss:$2 sm:$0xff]
  %s2319 = scalar_lea.vmem [#allocation2], 129
  %v2320 = vld [vmem:[%s2319] ss:$2 sm:$0xff]
  %s2321 = scalar_lea.vmem [#allocation2], 145
  %v2322 = vld [vmem:[%s2321] ss:$2 sm:$0xff]
  %s2323 = scalar_lea.vmem [#allocation2], 161
  %v2324 = vld [vmem:[%s2323] ss:$2 sm:$0xff]
  %s2325 = scalar_lea.vmem [#allocation2], 177
  %v2326 = vld [vmem:[%s2325] ss:$2 sm:$0xff]
  %s2327 = scalar_lea.vmem [#allocation2], 193
  %v2328 = vld [vmem:[%s2327] ss:$2 sm:$0xff]
  %s2329 = scalar_lea.vmem [#allocation2], 209
  %v2330 = vld [vmem:[%s2329] ss:$2 sm:$0xff]
  %s2331 = scalar_lea.vmem [#allocation2], 225
  %v2332 = vld [vmem:[%s2331] ss:$2 sm:$0xff]
  %s2333 = scalar_lea.vmem [#allocation2], 241
  %v2334 = vld [vmem:[%s2333] ss:$2 sm:$0xff]
  %v2351 = vrot.slane %v2304, 7
  %v2352 = vrot.slane %v2306, 7
  %v2353 = vsel %vm182, %v2351, %v2352
  %v2354 = vrot.slane %v2308, 7
  %v2355 = vsel %vm182, %v2352, %v2354
  %v2356 = vrot.slane %v2310, 7
  %v2357 = vsel %vm182, %v2354, %v2356
  %v2358 = vrot.slane %v2312, 7
  %v2359 = vsel %vm182, %v2356, %v2358
  %v2360 = vrot.slane %v2314, 7
  %v2361 = vsel %vm182, %v2358, %v2360
  %v2362 = vrot.slane %v2316, 7
  %v2363 = vsel %vm182, %v2360, %v2362
  %v2364 = vrot.slane %v2318, 7
  %v2365 = vsel %vm182, %v2362, %v2364
  %v2366 = vrot.slane %v2320, 7
  %v2367 = vsel %vm182, %v2364, %v2366
  %v2368 = vrot.slane %v2322, 7
  %v2369 = vsel %vm182, %v2366, %v2368
  %v2370 = vrot.slane %v2324, 7
  %v2371 = vsel %vm182, %v2368, %v2370
  %v2372 = vrot.slane %v2326, 7
  %v2373 = vsel %vm182, %v2370, %v2372
  %v2374 = vrot.slane %v2328, 7
  %v2375 = vsel %vm182, %v2372, %v2374
  %v2376 = vrot.slane %v2330, 7
  %v2377 = vsel %vm182, %v2374, %v2376
  %v2378 = vrot.slane %v2332, 7
  %v2379 = vsel %vm182, %v2376, %v2378
  %v2380 = vrot.slane %v2334, 7
  %v2381 = vsel %vm182, %v2378, %v2380
  %v2398 = vsel %vm182, 0.0, %v2351
  %v2399 = vld [vmem:[%s3] sm:$0xff]
  %v2400 = vld [vmem:[%s3 + $0x8] sm:$0xff]
  %v2401 = vld [vmem:[%s3 + $0x10] sm:$0xff]
  %v2402 = vld [vmem:[%s3 + $0x18] sm:$0xff]
  %v2403 = vld [vmem:[%s3 + $0x20] sm:$0xff]
  %v2404 = vld [vmem:[%s3 + $0x28] sm:$0xff]
  %v2405 = vld [vmem:[%s3 + $0x30] sm:$0xff]
  %v2406 = vld [vmem:[%s3 + $0x38] sm:$0xff]
  %v2407 = vld [vmem:[%s3 + $0x40] sm:$0xff]
  %v2408 = vld [vmem:[%s3 + $0x48] sm:$0xff]
  %v2409 = vld [vmem:[%s3 + $0x50] sm:$0xff]
  %v2410 = vld [vmem:[%s3 + $0x58] sm:$0xff]
  %v2411 = vld [vmem:[%s3 + $0x60] sm:$0xff]
  %v2412 = vld [vmem:[%s3 + $0x68] sm:$0xff]
  %v2413 = vld [vmem:[%s3 + $0x70] sm:$0xff]
  %v2414 = vld [vmem:[%s3 + $0x78] sm:$0xff]
  %2416 = vset.pattern.permute.xlu0 2
  %2417 = vperm.xlu0 %2416, %v2399
  %v2418 = vpop.permute.xlu0 %2417
  %2421 = vset.pattern.permute.xlu0 2
  %2422 = vperm.xlu0 %2421, %v2400
  %v2423 = vpop.permute.xlu0 %2422
  %2426 = vset.pattern.permute.xlu0 2
  %2427 = vperm.xlu0 %2426, %v2401
  %v2428 = vpop.permute.xlu0 %2427
  %2431 = vset.pattern.permute.xlu0 2
  %2432 = vperm.xlu0 %2431, %v2402
  %v2433 = vpop.permute.xlu0 %2432
  %2436 = vset.pattern.permute.xlu0 2
  %2437 = vperm.xlu0 %2436, %v2403
  %v2438 = vpop.permute.xlu0 %2437
  %2441 = vset.pattern.permute.xlu0 2
  %2442 = vperm.xlu0 %2441, %v2404
  %v2443 = vpop.permute.xlu0 %2442
  %2446 = vset.pattern.permute.xlu0 2
  %2447 = vperm.xlu0 %2446, %v2405
  %v2448 = vpop.permute.xlu0 %2447
  %2451 = vset.pattern.permute.xlu0 2
  %2452 = vperm.xlu0 %2451, %v2406
  %v2453 = vpop.permute.xlu0 %2452
  %2456 = vset.pattern.permute.xlu0 2
  %2457 = vperm.xlu0 %2456, %v2407
  %v2458 = vpop.permute.xlu0 %2457
  %2461 = vset.pattern.permute.xlu0 2
  %2462 = vperm.xlu0 %2461, %v2408
  %v2463 = vpop.permute.xlu0 %2462
  %2466 = vset.pattern.permute.xlu0 2
  %2467 = vperm.xlu0 %2466, %v2409
  %v2468 = vpop.permute.xlu0 %2467
  %2471 = vset.pattern.permute.xlu0 2
  %2472 = vperm.xlu0 %2471, %v2410
  %v2473 = vpop.permute.xlu0 %2472
  %2476 = vset.pattern.permute.xlu0 2
  %2477 = vperm.xlu0 %2476, %v2411
  %v2478 = vpop.permute.xlu0 %2477
  %2481 = vset.pattern.permute.xlu0 2
  %2482 = vperm.xlu0 %2481, %v2412
  %v2483 = vpop.permute.xlu0 %2482
  %2486 = vset.pattern.permute.xlu0 2
  %2487 = vperm.xlu0 %2486, %v2413
  %v2488 = vpop.permute.xlu0 %2487
  %2491 = vset.pattern.permute.xlu0 2
  %2492 = vperm.xlu0 %2491, %v2414
  %v2493 = vpop.permute.xlu0 %2492
  %v2495 = vmul.f32 %v2398, %v2418
  %v2496 = vmul.f32 %v2353, %v2423
  %v2497 = vmul.f32 %v2355, %v2428
  %v2498 = vmul.f32 %v2357, %v2433
  %v2499 = vmul.f32 %v2359, %v2438
  %v2500 = vmul.f32 %v2361, %v2443
  %v2501 = vmul.f32 %v2363, %v2448
  %v2502 = vmul.f32 %v2365, %v2453
  %v2503 = vmul.f32 %v2367, %v2458
  %v2504 = vmul.f32 %v2369, %v2463
  %v2505 = vmul.f32 %v2371, %v2468
  %v2506 = vmul.f32 %v2373, %v2473
  %v2507 = vmul.f32 %v2375, %v2478
  %v2508 = vmul.f32 %v2377, %v2483
  %v2509 = vmul.f32 %v2379, %v2488
  %v2510 = vmul.f32 %v2381, %v2493
  %2527 = vrot.lane.b32.xlu0 %v2272, 16
  %v2528 = vpop.permute.xlu0 %2527
  %2529 = vrot.lane.b32.xlu0 %v2274, 16
  %v2530 = vpop.permute.xlu0 %2529
  %2531 = vrot.lane.b32.xlu0 %v2276, 16
  %v2532 = vpop.permute.xlu0 %2531
  %2533 = vrot.lane.b32.xlu0 %v2278, 16
  %v2534 = vpop.permute.xlu0 %2533
  %2535 = vrot.lane.b32.xlu0 %v2280, 16
  %v2536 = vpop.permute.xlu0 %2535
  %2537 = vrot.lane.b32.xlu0 %v2282, 16
  %v2538 = vpop.permute.xlu0 %2537
  %2539 = vrot.lane.b32.xlu0 %v2284, 16
  %v2540 = vpop.permute.xlu0 %2539
  %2541 = vrot.lane.b32.xlu0 %v2286, 16
  %v2542 = vpop.permute.xlu0 %2541
  %2543 = vrot.lane.b32.xlu0 %v2288, 16
  %v2544 = vpop.permute.xlu0 %2543
  %2545 = vrot.lane.b32.xlu0 %v2290, 16
  %v2546 = vpop.permute.xlu0 %2545
  %2547 = vrot.lane.b32.xlu0 %v2292, 16
  %v2548 = vpop.permute.xlu0 %2547
  %2549 = vrot.lane.b32.xlu0 %v2294, 16
  %v2550 = vpop.permute.xlu0 %2549
  %2551 = vrot.lane.b32.xlu0 %v2296, 16
  %v2552 = vpop.permute.xlu0 %2551
  %2553 = vrot.lane.b32.xlu0 %v2298, 16
  %v2554 = vpop.permute.xlu0 %2553
  %2555 = vrot.lane.b32.xlu0 %v2300, 16
  %v2556 = vpop.permute.xlu0 %2555
  %2557 = vrot.lane.b32.xlu0 %v2302, 16
  %v2558 = vpop.permute.xlu0 %2557
  %2575 = vrot.lane.b32.xlu0 %v2304, 32
  %v2576 = vpop.permute.xlu0 %2575
  %2577 = vrot.lane.b32.xlu0 %v2306, 32
  %v2578 = vpop.permute.xlu0 %2577
  %2579 = vrot.lane.b32.xlu0 %v2308, 32
  %v2580 = vpop.permute.xlu0 %2579
  %2581 = vrot.lane.b32.xlu0 %v2310, 32
  %v2582 = vpop.permute.xlu0 %2581
  %2583 = vrot.lane.b32.xlu0 %v2312, 32
  %v2584 = vpop.permute.xlu0 %2583
  %2585 = vrot.lane.b32.xlu0 %v2314, 32
  %v2586 = vpop.permute.xlu0 %2585
  %2587 = vrot.lane.b32.xlu0 %v2316, 32
  %v2588 = vpop.permute.xlu0 %2587
  %2589 = vrot.lane.b32.xlu0 %v2318, 32
  %v2590 = vpop.permute.xlu0 %2589
  %2591 = vrot.lane.b32.xlu0 %v2320, 32
  %v2592 = vpop.permute.xlu0 %2591
  %2593 = vrot.lane.b32.xlu0 %v2322, 32
  %v2594 = vpop.permute.xlu0 %2593
  %2595 = vrot.lane.b32.xlu0 %v2324, 32
  %v2596 = vpop.permute.xlu0 %2595
  %2597 = vrot.lane.b32.xlu0 %v2326, 32
  %v2598 = vpop.permute.xlu0 %2597
  %2599 = vrot.lane.b32.xlu0 %v2328, 32
  %v2600 = vpop.permute.xlu0 %2599
  %2601 = vrot.lane.b32.xlu0 %v2330, 32
  %v2602 = vpop.permute.xlu0 %2601
  %2603 = vrot.lane.b32.xlu0 %v2332, 32
  %v2604 = vpop.permute.xlu0 %2603
  %2605 = vrot.lane.b32.xlu0 %v2334, 32
  %v2606 = vpop.permute.xlu0 %2605
  %v2623 = vsel %vm1143, %v2495, %v2528
  %v2624 = vsel %vm1143, %v2496, %v2530
  %v2625 = vsel %vm1143, %v2497, %v2532
  %v2626 = vsel %vm1143, %v2498, %v2534
  %v2627 = vsel %vm1143, %v2499, %v2536
  %v2628 = vsel %vm1143, %v2500, %v2538
  %v2629 = vsel %vm1143, %v2501, %v2540
  %v2630 = vsel %vm1143, %v2502, %v2542
  %v2631 = vsel %vm1143, %v2503, %v2544
  %v2632 = vsel %vm1143, %v2504, %v2546
  %v2633 = vsel %vm1143, %v2505, %v2548
  %v2634 = vsel %vm1143, %v2506, %v2550
  %v2635 = vsel %vm1143, %v2507, %v2552
  %v2636 = vsel %vm1143, %v2508, %v2554
  %v2637 = vsel %vm1143, %v2509, %v2556
  %v2638 = vsel %vm1143, %v2510, %v2558
  %v2639 = vsel %vm1176, %v2623, %v2576
  %v2640 = vsel %vm1176, %v2624, %v2578
  %v2641 = vsel %vm1176, %v2625, %v2580
  %v2642 = vsel %vm1176, %v2626, %v2582
  %v2643 = vsel %vm1176, %v2627, %v2584
  %v2644 = vsel %vm1176, %v2628, %v2586
  %v2645 = vsel %vm1176, %v2629, %v2588
  %v2646 = vsel %vm1176, %v2630, %v2590
  %v2647 = vsel %vm1176, %v2631, %v2592
  %v2648 = vsel %vm1176, %v2632, %v2594
  %v2649 = vsel %vm1176, %v2633, %v2596
  %v2650 = vsel %vm1176, %v2634, %v2598
  %v2651 = vsel %vm1176, %v2635, %v2600
  %v2652 = vsel %vm1176, %v2636, %v2602
  %v2653 = vsel %vm1176, %v2637, %v2604
  %v2654 = vsel %vm1176, %v2638, %v2606
  %v2655 = vpack.c.bf16 %v2640, %v2639
  %v2656 = vpack.c.bf16 %v2642, %v2641
  %v2657 = vpack.c.bf16 %v2644, %v2643
  %v2658 = vpack.c.bf16 %v2646, %v2645
  %v2659 = vpack.c.bf16 %v2648, %v2647
  %v2660 = vpack.c.bf16 %v2650, %v2649
  %v2661 = vpack.c.bf16 %v2652, %v2651
  %v2662 = vpack.c.bf16 %v2654, %v2653
  %v2663 = vld [vmem:[%s1 + $0x38] sm:$0xf]
  %v2664 = vld [vmem:[%s1 + $0x3c] sm:$0xf]
  %v2665 = vld [vmem:[%s1 + $0x40] sm:$0xf]
  %v2666 = vld [vmem:[%s1 + $0x44] sm:$0xf]
  %v2667 = vld [vmem:[%s1 + $0x48] sm:$0xf]
  %v2668 = vld [vmem:[%s1 + $0x4c] sm:$0xf]
  %v2669 = vld [vmem:[%s2 + $0x3] sm:$0x1]
  %v2670 = vperm.slane %v2669, 0
  %v2677 = vunpack.c.l.b16 %v2663
  %v2678 = vunpack.c.l.b16 %v2664
  %v2679 = vunpack.c.l.b16 %v2665
  %v2680 = vunpack.c.l.b16 %v2666
  %v2681 = vunpack.c.l.b16 %v2667
  %v2682 = vunpack.c.l.b16 %v2668
  %v2683 = vpack.c.b16 %v2678, %v2677
  %v2684 = vpack.c.b16 %v2680, %v2679
  %v2685 = vpack.c.b16 %v2682, %v2681
  %v2690 = vsel %vm1251, %v2655, 0
  %v2693 = vsel %vm1251, %v2656, 0
  %v2696 = vsel %vm1251, %v2657, 0
  %v2699 = vsel %vm1251, %v2658, 0
  %v2702 = vsel %vm1251, %v2659, 0
  %v2705 = vsel %vm1251, %v2660, 0
  %v2708 = vsel %vm1251, %v2661, 0
  %v2711 = vsel %vm1251, %v2662, 0
  %2713 = vmatpush.bf16.msra.mxu0 0
  %2714 = vmatpush.bf16.msra.mxu0 0
  %2715 = vmatpush.bf16.msra.mxu0 0
  %2716 = vmatpush.bf16.msra.mxu0 0
  %2717 = vmatpush.bf16.msra.mxu0 0
  %2718 = vmatpush.bf16.msra.mxu0 %v2685
  %2719 = vmatpush.bf16.msra.mxu0 %v2684
  %2720 = vmatpush.bf16.msra.mxu0 %v2683
  %2721 = vmatmul.bf16.gmra.mxu0 %v2690
  %v2722 = vpop.f32.mrf.mxu0
  %v2723 = vadd.f32 %v2670, %v2722
  %v2724 = vpop.f32.mrf.mxu0
  %v2725 = vadd.f32 %v2670, %v2724
  %2726 = vmatmul.bf16.gmra.mxu0 %v2693
  %v2727 = vpop.f32.mrf.mxu0
  %v2728 = vadd.f32 %v2670, %v2727
  %v2729 = vpop.f32.mrf.mxu0
  %v2730 = vadd.f32 %v2670, %v2729
  %2731 = vmatmul.bf16.gmra.mxu0 %v2696
  %v2732 = vpop.f32.mrf.mxu0
  %v2733 = vadd.f32 %v2670, %v2732
  %v2734 = vpop.f32.mrf.mxu0
  %v2735 = vadd.f32 %v2670, %v2734
  %2736 = vmatmul.bf16.gmra.mxu0 %v2699
  %v2737 = vpop.f32.mrf.mxu0
  %v2738 = vadd.f32 %v2670, %v2737
  %v2739 = vpop.f32.mrf.mxu0
  %v2740 = vadd.f32 %v2670, %v2739
  %2741 = vmatmul.bf16.gmra.mxu0 %v2702
  %v2742 = vpop.f32.mrf.mxu0
  %v2743 = vadd.f32 %v2670, %v2742
  %v2744 = vpop.f32.mrf.mxu0
  %v2745 = vadd.f32 %v2670, %v2744
  %2746 = vmatmul.bf16.gmra.mxu0 %v2705
  %v2747 = vpop.f32.mrf.mxu0
  %v2748 = vadd.f32 %v2670, %v2747
  %v2749 = vpop.f32.mrf.mxu0
  %v2750 = vadd.f32 %v2670, %v2749
  %2751 = vmatmul.bf16.gmra.mxu0 %v2708
  %v2752 = vpop.f32.mrf.mxu0
  %v2753 = vadd.f32 %v2670, %v2752
  %v2754 = vpop.f32.mrf.mxu0
  %v2755 = vadd.f32 %v2670, %v2754
  %2756 = vmatmul.bf16.gmra.mxu0 %v2711
  %v2757 = vpop.f32.mrf.mxu0
  %v2758 = vadd.f32 %v2670, %v2757
  %v2759 = vpop.f32.mrf.mxu0
  %v2760 = vadd.f32 %v2670, %v2759
  %2761 = vdwg.mxu0
  %v2762 = vmax.f32 %v2723, 0.0
  %v2763 = vmax.f32 %v2725, 0.0
  %v2764 = vmax.f32 %v2728, 0.0
  %v2765 = vmax.f32 %v2730, 0.0
  %v2766 = vmax.f32 %v2733, 0.0
  %v2767 = vmax.f32 %v2735, 0.0
  %v2768 = vmax.f32 %v2738, 0.0
  %v2769 = vmax.f32 %v2740, 0.0
  %v2770 = vmax.f32 %v2743, 0.0
  %v2771 = vmax.f32 %v2745, 0.0
  %v2772 = vmax.f32 %v2748, 0.0
  %v2773 = vmax.f32 %v2750, 0.0
  %v2774 = vmax.f32 %v2753, 0.0
  %v2775 = vmax.f32 %v2755, 0.0
  %v2776 = vmax.f32 %v2758, 0.0
  %v2777 = vmax.f32 %v2760, 0.0
  %v2778 = vpack.c.bf16 %v2274, %v2272
  %v2779 = vpack.c.bf16 %v2278, %v2276
  %v2780 = vpack.c.bf16 %v2282, %v2280
  %v2781 = vpack.c.bf16 %v2286, %v2284
  %v2782 = vpack.c.bf16 %v2290, %v2288
  %v2783 = vpack.c.bf16 %v2294, %v2292
  %v2784 = vpack.c.bf16 %v2298, %v2296
  %v2785 = vpack.c.bf16 %v2302, %v2300
  %v2786 = vld [vmem:[%s1 + $0x80] sm:$0xf]
  %v2787 = vld [vmem:[%s1 + $0x84] sm:$0xf]
  %v2788 = vld [vmem:[%s2 + $0x5] sm:$0x1]
  %v2789 = vperm.slane %v2788, 0
  %v2792 = vunpack.c.l.b16 %v2786
  %v2793 = vunpack.c.l.b16 %v2787
  %v2794 = vpack.c.b16 %v2793, %v2792
  %v2797 = vsel %vm1143, %v2778, 0
  %v2800 = vsel %vm1143, %v2779, 0
  %v2803 = vsel %vm1143, %v2780, 0
  %v2806 = vsel %vm1143, %v2781, 0
  %v2809 = vsel %vm1143, %v2782, 0
  %v2812 = vsel %vm1143, %v2783, 0
  %v2815 = vsel %vm1143, %v2784, 0
  %v2818 = vsel %vm1143, %v2785, 0
  %2820 = vmatpush.bf16.msra.mxu0 0
  %2821 = vmatpush.bf16.msra.mxu0 0
  %2822 = vmatpush.bf16.msra.mxu0 0
  %2823 = vmatpush.bf16.msra.mxu0 0
  %2824 = vmatpush.bf16.msra.mxu0 0
  %2825 = vmatpush.bf16.msra.mxu0 0
  %2826 = vmatpush.bf16.msra.mxu0 0
  %2827 = vmatpush.bf16.msra.mxu0 %v2794
  %2828 = vmatmul.bf16.gmra.mxu0 %v2797
  %v2829 = vpop.f32.mrf.mxu0
  %v2830 = vadd.f32 %v2789, %v2829
  %v2831 = vpop.f32.mrf.mxu0
  %v2832 = vadd.f32 %v2789, %v2831
  %2833 = vmatmul.bf16.gmra.mxu0 %v2800
  %v2834 = vpop.f32.mrf.mxu0
  %v2835 = vadd.f32 %v2789, %v2834
  %v2836 = vpop.f32.mrf.mxu0
  %v2837 = vadd.f32 %v2789, %v2836
  %2838 = vmatmul.bf16.gmra.mxu0 %v2803
  %v2839 = vpop.f32.mrf.mxu0
  %v2840 = vadd.f32 %v2789, %v2839
  %v2841 = vpop.f32.mrf.mxu0
  %v2842 = vadd.f32 %v2789, %v2841
  %2843 = vmatmul.bf16.gmra.mxu0 %v2806
  %v2844 = vpop.f32.mrf.mxu0
  %v2845 = vadd.f32 %v2789, %v2844
  %v2846 = vpop.f32.mrf.mxu0
  %v2847 = vadd.f32 %v2789, %v2846
  %2848 = vmatmul.bf16.gmra.mxu0 %v2809
  %v2849 = vpop.f32.mrf.mxu0
  %v2850 = vadd.f32 %v2789, %v2849
  %v2851 = vpop.f32.mrf.mxu0
  %v2852 = vadd.f32 %v2789, %v2851
  %2853 = vmatmul.bf16.gmra.mxu0 %v2812
  %v2854 = vpop.f32.mrf.mxu0
  %v2855 = vadd.f32 %v2789, %v2854
  %v2856 = vpop.f32.mrf.mxu0
  %v2857 = vadd.f32 %v2789, %v2856
  %2858 = vmatmul.bf16.gmra.mxu0 %v2815
  %v2859 = vpop.f32.mrf.mxu0
  %v2860 = vadd.f32 %v2789, %v2859
  %v2861 = vpop.f32.mrf.mxu0
  %v2862 = vadd.f32 %v2789, %v2861
  %2863 = vmatmul.bf16.gmra.mxu0 %v2818
  %v2864 = vpop.f32.mrf.mxu0
  %v2865 = vadd.f32 %v2789, %v2864
  %v2866 = vpop.f32.mrf.mxu0
  %v2867 = vadd.f32 %v2789, %v2866
  %2868 = vdwg.mxu0
  %v2885 = vrot.slane %v2762, 7
  %v2886 = vrot.slane %v2763, 7
  %v2887 = vsel %vm182, %v2885, %v2886
  %v2888 = vrot.slane %v2764, 7
  %v2889 = vsel %vm182, %v2886, %v2888
  %v2890 = vrot.slane %v2765, 7
  %v2891 = vsel %vm182, %v2888, %v2890
  %v2892 = vrot.slane %v2766, 7
  %v2893 = vsel %vm182, %v2890, %v2892
  %v2894 = vrot.slane %v2767, 7
  %v2895 = vsel %vm182, %v2892, %v2894
  %v2896 = vrot.slane %v2768, 7
  %v2897 = vsel %vm182, %v2894, %v2896
  %v2898 = vrot.slane %v2769, 7
  %v2899 = vsel %vm182, %v2896, %v2898
  %v2900 = vrot.slane %v2770, 7
  %v2901 = vsel %vm182, %v2898, %v2900
  %v2902 = vrot.slane %v2771, 7
  %v2903 = vsel %vm182, %v2900, %v2902
  %v2904 = vrot.slane %v2772, 7
  %v2905 = vsel %vm182, %v2902, %v2904
  %v2906 = vrot.slane %v2773, 7
  %v2907 = vsel %vm182, %v2904, %v2906
  %v2908 = vrot.slane %v2774, 7
  %v2909 = vsel %vm182, %v2906, %v2908
  %v2910 = vrot.slane %v2775, 7
  %v2911 = vsel %vm182, %v2908, %v2910
  %v2912 = vrot.slane %v2776, 7
  %v2913 = vsel %vm182, %v2910, %v2912
  %v2914 = vrot.slane %v2777, 7
  %v2915 = vsel %vm182, %v2912, %v2914
  %v2932 = vsel %vm182, 0.0, %v2885
  %v2933 = vmul.f32 %v2932, %v2418
  %v2934 = vmul.f32 %v2887, %v2423
  %v2935 = vmul.f32 %v2889, %v2428
  %v2936 = vmul.f32 %v2891, %v2433
  %v2937 = vmul.f32 %v2893, %v2438
  %v2938 = vmul.f32 %v2895, %v2443
  %v2939 = vmul.f32 %v2897, %v2448
  %v2940 = vmul.f32 %v2899, %v2453
  %v2941 = vmul.f32 %v2901, %v2458
  %v2942 = vmul.f32 %v2903, %v2463
  %v2943 = vmul.f32 %v2905, %v2468
  %v2944 = vmul.f32 %v2907, %v2473
  %v2945 = vmul.f32 %v2909, %v2478
  %v2946 = vmul.f32 %v2911, %v2483
  %v2947 = vmul.f32 %v2913, %v2488
  %v2948 = vmul.f32 %v2915, %v2493
  %v2949 = vrot.slane %v2762, 1
  %v2950 = vrot.slane %v2763, 1
  %v2951 = vsel %vm662, %v2949, %v2950
  %v2952 = vrot.slane %v2764, 1
  %v2953 = vsel %vm662, %v2950, %v2952
  %v2954 = vrot.slane %v2765, 1
  %v2955 = vsel %vm662, %v2952, %v2954
  %v2956 = vrot.slane %v2766, 1
  %v2957 = vsel %vm662, %v2954, %v2956
  %v2958 = vrot.slane %v2767, 1
  %v2959 = vsel %vm662, %v2956, %v2958
  %v2960 = vrot.slane %v2768, 1
  %v2961 = vsel %vm662, %v2958, %v2960
  %v2962 = vrot.slane %v2769, 1
  %v2963 = vsel %vm662, %v2960, %v2962
  %v2964 = vrot.slane %v2770, 1
  %v2965 = vsel %vm662, %v2962, %v2964
  %v2966 = vrot.slane %v2771, 1
  %v2967 = vsel %vm662, %v2964, %v2966
  %v2968 = vrot.slane %v2772, 1
  %v2969 = vsel %vm662, %v2966, %v2968
  %v2970 = vrot.slane %v2773, 1
  %v2971 = vsel %vm662, %v2968, %v2970
  %v2972 = vrot.slane %v2774, 1
  %v2973 = vsel %vm662, %v2970, %v2972
  %v2974 = vrot.slane %v2775, 1
  %v2975 = vsel %vm662, %v2972, %v2974
  %v2976 = vrot.slane %v2776, 1
  %v2977 = vsel %vm662, %v2974, %v2976
  %v2978 = vrot.slane %v2777, 1
  %v2979 = vsel %vm662, %v2976, %v2978
  %v2996 = vsel %vm662, %v2978, 0.0
  %2997 = vset.pattern.permute.xlu0 3
  %2998 = vperm.xlu0 %2997, %v2399
  %v2999 = vpop.permute.xlu0 %2998
  %3001 = vset.pattern.permute.xlu0 3
  %3002 = vperm.xlu0 %3001, %v2400
  %v3003 = vpop.permute.xlu0 %3002
  %3005 = vset.pattern.permute.xlu0 3
  %3006 = vperm.xlu0 %3005, %v2401
  %v3007 = vpop.permute.xlu0 %3006
  %3009 = vset.pattern.permute.xlu0 3
  %3010 = vperm.xlu0 %3009, %v2402
  %v3011 = vpop.permute.xlu0 %3010
  %3013 = vset.pattern.permute.xlu0 3
  %3014 = vperm.xlu0 %3013, %v2403
  %v3015 = vpop.permute.xlu0 %3014
  %3017 = vset.pattern.permute.xlu0 3
  %3018 = vperm.xlu0 %3017, %v2404
  %v3019 = vpop.permute.xlu0 %3018
  %3021 = vset.pattern.permute.xlu0 3
  %3022 = vperm.xlu0 %3021, %v2405
  %v3023 = vpop.permute.xlu0 %3022
  %3025 = vset.pattern.permute.xlu0 3
  %3026 = vperm.xlu0 %3025, %v2406
  %v3027 = vpop.permute.xlu0 %3026
  %3029 = vset.pattern.permute.xlu0 3
  %3030 = vperm.xlu0 %3029, %v2407
  %v3031 = vpop.permute.xlu0 %3030
  %3033 = vset.pattern.permute.xlu0 3
  %3034 = vperm.xlu0 %3033, %v2408
  %v3035 = vpop.permute.xlu0 %3034
  %3037 = vset.pattern.permute.xlu0 3
  %3038 = vperm.xlu0 %3037, %v2409
  %v3039 = vpop.permute.xlu0 %3038
  %3041 = vset.pattern.permute.xlu0 3
  %3042 = vperm.xlu0 %3041, %v2410
  %v3043 = vpop.permute.xlu0 %3042
  %3045 = vset.pattern.permute.xlu0 3
  %3046 = vperm.xlu0 %3045, %v2411
  %v3047 = vpop.permute.xlu0 %3046
  %3049 = vset.pattern.permute.xlu0 3
  %3050 = vperm.xlu0 %3049, %v2412
  %v3051 = vpop.permute.xlu0 %3050
  %3053 = vset.pattern.permute.xlu0 3
  %3054 = vperm.xlu0 %3053, %v2413
  %v3055 = vpop.permute.xlu0 %3054
  %3057 = vset.pattern.permute.xlu0 3
  %3058 = vperm.xlu0 %3057, %v2414
  %v3059 = vpop.permute.xlu0 %3058
  %v3061 = vmul.f32 %v2951, %v2999
  %v3062 = vmul.f32 %v2953, %v3003
  %v3063 = vmul.f32 %v2955, %v3007
  %v3064 = vmul.f32 %v2957, %v3011
  %v3065 = vmul.f32 %v2959, %v3015
  %v3066 = vmul.f32 %v2961, %v3019
  %v3067 = vmul.f32 %v2963, %v3023
  %v3068 = vmul.f32 %v2965, %v3027
  %v3069 = vmul.f32 %v2967, %v3031
  %v3070 = vmul.f32 %v2969, %v3035
  %v3071 = vmul.f32 %v2971, %v3039
  %v3072 = vmul.f32 %v2973, %v3043
  %v3073 = vmul.f32 %v2975, %v3047
  %v3074 = vmul.f32 %v2977, %v3051
  %v3075 = vmul.f32 %v2979, %v3055
  %v3076 = vmul.f32 %v2996, %v3059
  %3077 = vrot.lane.b32.xlu0 %v2762, 32
  %v3078 = vpop.permute.xlu0 %3077
  %3079 = vrot.lane.b32.xlu0 %v2763, 32
  %v3080 = vpop.permute.xlu0 %3079
  %3081 = vrot.lane.b32.xlu0 %v2764, 32
  %v3082 = vpop.permute.xlu0 %3081
  %3083 = vrot.lane.b32.xlu0 %v2765, 32
  %v3084 = vpop.permute.xlu0 %3083
  %3085 = vrot.lane.b32.xlu0 %v2766, 32
  %v3086 = vpop.permute.xlu0 %3085
  %3087 = vrot.lane.b32.xlu0 %v2767, 32
  %v3088 = vpop.permute.xlu0 %3087
  %3089 = vrot.lane.b32.xlu0 %v2768, 32
  %v3090 = vpop.permute.xlu0 %3089
  %3091 = vrot.lane.b32.xlu0 %v2769, 32
  %v3092 = vpop.permute.xlu0 %3091
  %3093 = vrot.lane.b32.xlu0 %v2770, 32
  %v3094 = vpop.permute.xlu0 %3093
  %3095 = vrot.lane.b32.xlu0 %v2771, 32
  %v3096 = vpop.permute.xlu0 %3095
  %3097 = vrot.lane.b32.xlu0 %v2772, 32
  %v3098 = vpop.permute.xlu0 %3097
  %3099 = vrot.lane.b32.xlu0 %v2773, 32
  %v3100 = vpop.permute.xlu0 %3099
  %3101 = vrot.lane.b32.xlu0 %v2774, 32
  %v3102 = vpop.permute.xlu0 %3101
  %3103 = vrot.lane.b32.xlu0 %v2775, 32
  %v3104 = vpop.permute.xlu0 %3103
  %3105 = vrot.lane.b32.xlu0 %v2776, 32
  %v3106 = vpop.permute.xlu0 %3105
  %3107 = vrot.lane.b32.xlu0 %v2777, 32
  %v3108 = vpop.permute.xlu0 %3107
  %3141 = vrot.lane.b32.xlu0 %v3061, 64
  %v3142 = vpop.permute.xlu0 %3141
  %3143 = vrot.lane.b32.xlu0 %v3062, 64
  %v3144 = vpop.permute.xlu0 %3143
  %3145 = vrot.lane.b32.xlu0 %v3063, 64
  %v3146 = vpop.permute.xlu0 %3145
  %3147 = vrot.lane.b32.xlu0 %v3064, 64
  %v3148 = vpop.permute.xlu0 %3147
  %3149 = vrot.lane.b32.xlu0 %v3065, 64
  %v3150 = vpop.permute.xlu0 %3149
  %3151 = vrot.lane.b32.xlu0 %v3066, 64
  %v3152 = vpop.permute.xlu0 %3151
  %3153 = vrot.lane.b32.xlu0 %v3067, 64
  %v3154 = vpop.permute.xlu0 %3153
  %3155 = vrot.lane.b32.xlu0 %v3068, 64
  %v3156 = vpop.permute.xlu0 %3155
  %3157 = vrot.lane.b32.xlu0 %v3069, 64
  %v3158 = vpop.permute.xlu0 %3157
  %3159 = vrot.lane.b32.xlu0 %v3070, 64
  %v3160 = vpop.permute.xlu0 %3159
  %3161 = vrot.lane.b32.xlu0 %v3071, 64
  %v3162 = vpop.permute.xlu0 %3161
  %3163 = vrot.lane.b32.xlu0 %v3072, 64
  %v3164 = vpop.permute.xlu0 %3163
  %3165 = vrot.lane.b32.xlu0 %v3073, 64
  %v3166 = vpop.permute.xlu0 %3165
  %3167 = vrot.lane.b32.xlu0 %v3074, 64
  %v3168 = vpop.permute.xlu0 %3167
  %3169 = vrot.lane.b32.xlu0 %v3075, 64
  %v3170 = vpop.permute.xlu0 %3169
  %3171 = vrot.lane.b32.xlu0 %v3076, 64
  %v3172 = vpop.permute.xlu0 %3171
  %v3189 = vsel %vm1176, %v2933, %v3078
  %v3190 = vsel %vm1176, %v2934, %v3080
  %v3191 = vsel %vm1176, %v2935, %v3082
  %v3192 = vsel %vm1176, %v2936, %v3084
  %v3193 = vsel %vm1176, %v2937, %v3086
  %v3194 = vsel %vm1176, %v2938, %v3088
  %v3195 = vsel %vm1176, %v2939, %v3090
  %v3196 = vsel %vm1176, %v2940, %v3092
  %v3197 = vsel %vm1176, %v2941, %v3094
  %v3198 = vsel %vm1176, %v2942, %v3096
  %v3199 = vsel %vm1176, %v2943, %v3098
  %v3200 = vsel %vm1176, %v2944, %v3100
  %v3201 = vsel %vm1176, %v2945, %v3102
  %v3202 = vsel %vm1176, %v2946, %v3104
  %v3203 = vsel %vm1176, %v2947, %v3106
  %v3204 = vsel %vm1176, %v2948, %v3108
  %vm3205 = vcmask 523264
  %v3206 = vsel %vm3205, %v3189, %v3142
  %v3207 = vsel %vm3205, %v3190, %v3144
  %v3208 = vsel %vm3205, %v3191, %v3146
  %v3209 = vsel %vm3205, %v3192, %v3148
  %v3210 = vsel %vm3205, %v3193, %v3150
  %v3211 = vsel %vm3205, %v3194, %v3152
  %v3212 = vsel %vm3205, %v3195, %v3154
  %v3213 = vsel %vm3205, %v3196, %v3156
  %v3214 = vsel %vm3205, %v3197, %v3158
  %v3215 = vsel %vm3205, %v3198, %v3160
  %v3216 = vsel %vm3205, %v3199, %v3162
  %v3217 = vsel %vm3205, %v3200, %v3164
  %v3218 = vsel %vm3205, %v3201, %v3166
  %v3219 = vsel %vm3205, %v3202, %v3168
  %v3220 = vsel %vm3205, %v3203, %v3170
  %v3221 = vsel %vm3205, %v3204, %v3172
  %v3222 = vpack.c.bf16 %v3207, %v3206
  %v3223 = vpack.c.bf16 %v3209, %v3208
  %v3224 = vpack.c.bf16 %v3211, %v3210
  %v3225 = vpack.c.bf16 %v3213, %v3212
  %v3226 = vpack.c.bf16 %v3215, %v3214
  %v3227 = vpack.c.bf16 %v3217, %v3216
  %v3228 = vpack.c.bf16 %v3219, %v3218
  %v3229 = vpack.c.bf16 %v3221, %v3220
  %v3230 = vld [vmem:[%s1 + $0x50] sm:$0xf]
  %v3231 = vld [vmem:[%s1 + $0x54] sm:$0xf]
  %v3232 = vld [vmem:[%s1 + $0x58] sm:$0xf]
  %v3233 = vld [vmem:[%s1 + $0x5c] sm:$0xf]
  %v3234 = vld [vmem:[%s1 + $0x60] sm:$0xf]
  %v3235 = vld [vmem:[%s1 + $0x64] sm:$0xf]
  %v3236 = vld [vmem:[%s1 + $0x68] sm:$0xf]
  %v3237 = vld [vmem:[%s1 + $0x6c] sm:$0xf]
  %v3238 = vld [vmem:[%s1 + $0x70] sm:$0xf]
  %v3239 = vld [vmem:[%s1 + $0x74] sm:$0xf]
  %v3240 = vld [vmem:[%s1 + $0x78] sm:$0xf]
  %v3241 = vld [vmem:[%s1 + $0x7c] sm:$0xf]
  %v3242 = vld [vmem:[%s2 + $0x4] sm:$0x1]
  %v3243 = vperm.slane %v3242, 0
  %v3256 = vunpack.c.l.b16 %v3230
  %v3257 = vunpack.c.l.b16 %v3231
  %v3258 = vunpack.c.l.b16 %v3232
  %v3259 = vunpack.c.l.b16 %v3233
  %v3260 = vunpack.c.l.b16 %v3234
  %v3261 = vunpack.c.l.b16 %v3235
  %v3262 = vunpack.c.l.b16 %v3236
  %v3263 = vunpack.c.l.b16 %v3237
  %v3264 = vunpack.c.l.b16 %v3238
  %v3265 = vunpack.c.l.b16 %v3239
  %v3266 = vunpack.c.l.b16 %v3240
  %v3267 = vunpack.c.l.b16 %v3241
  %v3268 = vpack.c.b16 %v3257, %v3256
  %v3269 = vpack.c.b16 %v3259, %v3258
  %v3270 = vpack.c.b16 %v3261, %v3260
  %v3271 = vpack.c.b16 %v3263, %v3262
  %v3272 = vpack.c.b16 %v3265, %v3264
  %v3273 = vpack.c.b16 %v3267, %v3266
  %vm3280 = vcmask 785408
  %v3282 = vsel %vm3280, %v3222, 0
  %v3285 = vsel %vm3280, %v3223, 0
  %v3288 = vsel %vm3280, %v3224, 0
  %v3291 = vsel %vm3280, %v3225, 0
  %v3294 = vsel %vm3280, %v3226, 0
  %v3297 = vsel %vm3280, %v3227, 0
  %v3300 = vsel %vm3280, %v3228, 0
  %v3303 = vsel %vm3280, %v3229, 0
  %3305 = vmatpush.bf16.msra.mxu0 0
  %3306 = vmatpush.bf16.msra.mxu0 0
  %3307 = vmatpush.bf16.msra.mxu0 %v3273
  %3308 = vmatpush.bf16.msra.mxu0 %v3272
  %3309 = vmatpush.bf16.msra.mxu0 %v3271
  %3310 = vmatpush.bf16.msra.mxu0 %v3270
  %3311 = vmatpush.bf16.msra.mxu0 %v3269
  %3312 = vmatpush.bf16.msra.mxu0 %v3268
  %3313 = vmatmul.bf16.gmra.mxu0 %v3282
  %v3314 = vpop.f32.mrf.mxu0
  %v3315 = vadd.f32 %v3243, %v3314
  %v3316 = vpop.f32.mrf.mxu0
  %v3317 = vadd.f32 %v3243, %v3316
  %3318 = vmatmul.bf16.gmra.mxu0 %v3285
  %v3319 = vpop.f32.mrf.mxu0
  %v3320 = vadd.f32 %v3243, %v3319
  %v3321 = vpop.f32.mrf.mxu0
  %v3322 = vadd.f32 %v3243, %v3321
  %3323 = vmatmul.bf16.gmra.mxu0 %v3288
  %v3324 = vpop.f32.mrf.mxu0
  %v3325 = vadd.f32 %v3243, %v3324
  %v3326 = vpop.f32.mrf.mxu0
  %v3327 = vadd.f32 %v3243, %v3326
  %3328 = vmatmul.bf16.gmra.mxu0 %v3291
  %v3329 = vpop.f32.mrf.mxu0
  %v3330 = vadd.f32 %v3243, %v3329
  %v3331 = vpop.f32.mrf.mxu0
  %v3332 = vadd.f32 %v3243, %v3331
  %3333 = vmatmul.bf16.gmra.mxu0 %v3294
  %v3334 = vpop.f32.mrf.mxu0
  %v3335 = vadd.f32 %v3243, %v3334
  %v3336 = vpop.f32.mrf.mxu0
  %v3337 = vadd.f32 %v3243, %v3336
  %3338 = vmatmul.bf16.gmra.mxu0 %v3297
  %v3339 = vpop.f32.mrf.mxu0
  %v3340 = vadd.f32 %v3243, %v3339
  %v3341 = vpop.f32.mrf.mxu0
  %v3342 = vadd.f32 %v3243, %v3341
  %3343 = vmatmul.bf16.gmra.mxu0 %v3300
  %v3344 = vpop.f32.mrf.mxu0
  %v3345 = vadd.f32 %v3243, %v3344
  %v3346 = vpop.f32.mrf.mxu0
  %v3347 = vadd.f32 %v3243, %v3346
  %3348 = vmatmul.bf16.gmra.mxu0 %v3303
  %v3349 = vpop.f32.mrf.mxu0
  %v3350 = vadd.f32 %v3243, %v3349
  %v3351 = vpop.f32.mrf.mxu0
  %v3352 = vadd.f32 %v3243, %v3351
  %3353 = vdwg.mxu0
  %v3354 = vadd.f32 %v3315, %v2830
  %v3355 = vadd.f32 %v3317, %v2832
  %v3356 = vadd.f32 %v3320, %v2835
  %v3357 = vadd.f32 %v3322, %v2837
  %v3358 = vadd.f32 %v3325, %v2840
  %v3359 = vadd.f32 %v3327, %v2842
  %v3360 = vadd.f32 %v3330, %v2845
  %v3361 = vadd.f32 %v3332, %v2847
  %v3362 = vadd.f32 %v3335, %v2850
  %v3363 = vadd.f32 %v3337, %v2852
  %v3364 = vadd.f32 %v3340, %v2855
  %v3365 = vadd.f32 %v3342, %v2857
  %v3366 = vadd.f32 %v3345, %v2860
  %v3367 = vadd.f32 %v3347, %v2862
  %v3368 = vadd.f32 %v3350, %v2865
  %v3369 = vadd.f32 %v3352, %v2867
  %v3370 = vmax.f32 %v3354, 0.0
  %v3371 = vmax.f32 %v3355, 0.0
  %v3372 = vmax.f32 %v3356, 0.0
  %v3373 = vmax.f32 %v3357, 0.0
  %v3374 = vmax.f32 %v3358, 0.0
  %v3375 = vmax.f32 %v3359, 0.0
  %v3376 = vmax.f32 %v3360, 0.0
  %v3377 = vmax.f32 %v3361, 0.0
  %v3378 = vmax.f32 %v3362, 0.0
  %v3379 = vmax.f32 %v3363, 0.0
  %v3380 = vmax.f32 %v3364, 0.0
  %v3381 = vmax.f32 %v3365, 0.0
  %v3382 = vmax.f32 %v3366, 0.0
  %v3383 = vmax.f32 %v3367, 0.0
  %v3384 = vmax.f32 %v3368, 0.0
  %v3385 = vmax.f32 %v3369, 0.0
  %3386 = vst.msk [vmem:[#allocation3] sm:$0xff] %vm1176, %v3370
  %3387 = vst.msk [vmem:[#allocation3 + $0x8] sm:$0xff] %vm1176, %v3371
  %3388 = vst.msk [vmem:[#allocation3 + $0x10] sm:$0xff] %vm1176, %v3372
  %3389 = vst.msk [vmem:[#allocation3 + $0x18] sm:$0xff] %vm1176, %v3373
  %3390 = vst.msk [vmem:[#allocation3 + $0x20] sm:$0xff] %vm1176, %v3374
  %3391 = vst.msk [vmem:[#allocation3 + $0x28] sm:$0xff] %vm1176, %v3375
  %3392 = vst.msk [vmem:[#allocation3 + $0x30] sm:$0xff] %vm1176, %v3376
  %3393 = vst.msk [vmem:[#allocation3 + $0x38] sm:$0xff] %vm1176, %v3377
  %3394 = vst.msk [vmem:[#allocation3 + $0x40] sm:$0xff] %vm1176, %v3378
  %3395 = vst.msk [vmem:[#allocation3 + $0x48] sm:$0xff] %vm1176, %v3379
  %3396 = vst.msk [vmem:[#allocation3 + $0x50] sm:$0xff] %vm1176, %v3380
  %3397 = vst.msk [vmem:[#allocation3 + $0x58] sm:$0xff] %vm1176, %v3381
  %3398 = vst.msk [vmem:[#allocation3 + $0x60] sm:$0xff] %vm1176, %v3382
  %3399 = vst.msk [vmem:[#allocation3 + $0x68] sm:$0xff] %vm1176, %v3383
  %3400 = vst.msk [vmem:[#allocation3 + $0x70] sm:$0xff] %vm1176, %v3384
  %3401 = vst.msk [vmem:[#allocation3 + $0x78] sm:$0xff] %vm1176, %v3385
  %v3402 = vld [vmem:[#allocation3] ss:$2 sm:$0xff]
  %s3403 = scalar_lea.vmem [#allocation3], 16
  %v3404 = vld [vmem:[%s3403] ss:$2 sm:$0xff]
  %s3405 = scalar_lea.vmem [#allocation3], 32
  %v3406 = vld [vmem:[%s3405] ss:$2 sm:$0xff]
  %s3407 = scalar_lea.vmem [#allocation3], 48
  %v3408 = vld [vmem:[%s3407] ss:$2 sm:$0xff]
  %s3409 = scalar_lea.vmem [#allocation3], 64
  %v3410 = vld [vmem:[%s3409] ss:$2 sm:$0xff]
  %s3411 = scalar_lea.vmem [#allocation3], 80
  %v3412 = vld [vmem:[%s3411] ss:$2 sm:$0xff]
  %s3413 = scalar_lea.vmem [#allocation3], 96
  %v3414 = vld [vmem:[%s3413] ss:$2 sm:$0xff]
  %s3415 = scalar_lea.vmem [#allocation3], 112
  %v3416 = vld [vmem:[%s3415] ss:$2 sm:$0xff]
  %s3417 = scalar_lea.vmem [#allocation3], 1
  %v3418 = vld [vmem:[%s3417] ss:$2 sm:$0xff]
  %s3419 = scalar_lea.vmem [#allocation3], 17
  %v3420 = vld [vmem:[%s3419] ss:$2 sm:$0xff]
  %s3421 = scalar_lea.vmem [#allocation3], 33
  %v3422 = vld [vmem:[%s3421] ss:$2 sm:$0xff]
  %s3423 = scalar_lea.vmem [#allocation3], 49
  %v3424 = vld [vmem:[%s3423] ss:$2 sm:$0xff]
  %s3425 = scalar_lea.vmem [#allocation3], 65
  %v3426 = vld [vmem:[%s3425] ss:$2 sm:$0xff]
  %s3427 = scalar_lea.vmem [#allocation3], 81
  %v3428 = vld [vmem:[%s3427] ss:$2 sm:$0xff]
  %s3429 = scalar_lea.vmem [#allocation3], 97
  %v3430 = vld [vmem:[%s3429] ss:$2 sm:$0xff]
  %s3431 = scalar_lea.vmem [#allocation3], 113
  %v3432 = vld [vmem:[%s3431] ss:$2 sm:$0xff]
  %v3441 = vrot.slane %v3418, 7
  %v3442 = vrot.slane %v3420, 7
  %v3443 = vsel %vm182, %v3441, %v3442
  %v3444 = vrot.slane %v3422, 7
  %v3445 = vsel %vm182, %v3442, %v3444
  %v3446 = vrot.slane %v3424, 7
  %v3447 = vsel %vm182, %v3444, %v3446
  %v3448 = vrot.slane %v3426, 7
  %v3449 = vsel %vm182, %v3446, %v3448
  %v3450 = vrot.slane %v3428, 7
  %v3451 = vsel %vm182, %v3448, %v3450
  %v3452 = vrot.slane %v3430, 7
  %v3453 = vsel %vm182, %v3450, %v3452
  %v3454 = vrot.slane %v3432, 7
  %v3455 = vsel %vm182, %v3452, %v3454
  %v3464 = vsel %vm182, 0.0, %v3441
  %v3465 = vld [vmem:[%s3] sm:$0xff]
  %v3466 = vld [vmem:[%s3 + $0x8] sm:$0xff]
  %v3467 = vld [vmem:[%s3 + $0x10] sm:$0xff]
  %v3468 = vld [vmem:[%s3 + $0x18] sm:$0xff]
  %v3469 = vld [vmem:[%s3 + $0x20] sm:$0xff]
  %v3470 = vld [vmem:[%s3 + $0x28] sm:$0xff]
  %v3471 = vld [vmem:[%s3 + $0x30] sm:$0xff]
  %v3472 = vld [vmem:[%s3 + $0x38] sm:$0xff]
  %3474 = vset.pattern.permute.xlu0 4
  %3475 = vperm.xlu0 %3474, %v3465
  %v3476 = vpop.permute.xlu0 %3475
  %3479 = vset.pattern.permute.xlu0 4
  %3480 = vperm.xlu0 %3479, %v3466
  %v3481 = vpop.permute.xlu0 %3480
  %3484 = vset.pattern.permute.xlu0 4
  %3485 = vperm.xlu0 %3484, %v3467
  %v3486 = vpop.permute.xlu0 %3485
  %3489 = vset.pattern.permute.xlu0 4
  %3490 = vperm.xlu0 %3489, %v3468
  %v3491 = vpop.permute.xlu0 %3490
  %3494 = vset.pattern.permute.xlu0 4
  %3495 = vperm.xlu0 %3494, %v3469
  %v3496 = vpop.permute.xlu0 %3495
  %3499 = vset.pattern.permute.xlu0 4
  %3500 = vperm.xlu0 %3499, %v3470
  %v3501 = vpop.permute.xlu0 %3500
  %3504 = vset.pattern.permute.xlu0 4
  %3505 = vperm.xlu0 %3504, %v3471
  %v3506 = vpop.permute.xlu0 %3505
  %3509 = vset.pattern.permute.xlu0 4
  %3510 = vperm.xlu0 %3509, %v3472
  %v3511 = vpop.permute.xlu0 %3510
  %v3513 = vmul.f32 %v3464, %v3476
  %v3514 = vmul.f32 %v3443, %v3481
  %v3515 = vmul.f32 %v3445, %v3486
  %v3516 = vmul.f32 %v3447, %v3491
  %v3517 = vmul.f32 %v3449, %v3496
  %v3518 = vmul.f32 %v3451, %v3501
  %v3519 = vmul.f32 %v3453, %v3506
  %v3520 = vmul.f32 %v3455, %v3511
  %3529 = vrot.lane.b32.xlu0 %v3402, 32
  %v3530 = vpop.permute.xlu0 %3529
  %3531 = vrot.lane.b32.xlu0 %v3404, 32
  %v3532 = vpop.permute.xlu0 %3531
  %3533 = vrot.lane.b32.xlu0 %v3406, 32
  %v3534 = vpop.permute.xlu0 %3533
  %3535 = vrot.lane.b32.xlu0 %v3408, 32
  %v3536 = vpop.permute.xlu0 %3535
  %3537 = vrot.lane.b32.xlu0 %v3410, 32
  %v3538 = vpop.permute.xlu0 %3537
  %3539 = vrot.lane.b32.xlu0 %v3412, 32
  %v3540 = vpop.permute.xlu0 %3539
  %3541 = vrot.lane.b32.xlu0 %v3414, 32
  %v3542 = vpop.permute.xlu0 %3541
  %3543 = vrot.lane.b32.xlu0 %v3416, 32
  %v3544 = vpop.permute.xlu0 %3543
  %3553 = vrot.lane.b32.xlu0 %v3418, 64
  %v3554 = vpop.permute.xlu0 %3553
  %3555 = vrot.lane.b32.xlu0 %v3420, 64
  %v3556 = vpop.permute.xlu0 %3555
  %3557 = vrot.lane.b32.xlu0 %v3422, 64
  %v3558 = vpop.permute.xlu0 %3557
  %3559 = vrot.lane.b32.xlu0 %v3424, 64
  %v3560 = vpop.permute.xlu0 %3559
  %3561 = vrot.lane.b32.xlu0 %v3426, 64
  %v3562 = vpop.permute.xlu0 %3561
  %3563 = vrot.lane.b32.xlu0 %v3428, 64
  %v3564 = vpop.permute.xlu0 %3563
  %3565 = vrot.lane.b32.xlu0 %v3430, 64
  %v3566 = vpop.permute.xlu0 %3565
  %3567 = vrot.lane.b32.xlu0 %v3432, 64
  %v3568 = vpop.permute.xlu0 %3567
  %v3577 = vsel %vm1176, %v3513, %v3530
  %v3578 = vsel %vm1176, %v3514, %v3532
  %v3579 = vsel %vm1176, %v3515, %v3534
  %v3580 = vsel %vm1176, %v3516, %v3536
  %v3581 = vsel %vm1176, %v3517, %v3538
  %v3582 = vsel %vm1176, %v3518, %v3540
  %v3583 = vsel %vm1176, %v3519, %v3542
  %v3584 = vsel %vm1176, %v3520, %v3544
  %v3585 = vsel %vm3205, %v3577, %v3554
  %v3586 = vsel %vm3205, %v3578, %v3556
  %v3587 = vsel %vm3205, %v3579, %v3558
  %v3588 = vsel %vm3205, %v3580, %v3560
  %v3589 = vsel %vm3205, %v3581, %v3562
  %v3590 = vsel %vm3205, %v3582, %v3564
  %v3591 = vsel %vm3205, %v3583, %v3566
  %v3592 = vsel %vm3205, %v3584, %v3568
  %v3593 = vpack.c.bf16 %v3586, %v3585
  %v3594 = vpack.c.bf16 %v3588, %v3587
  %v3595 = vpack.c.bf16 %v3590, %v3589
  %v3596 = vpack.c.bf16 %v3592, %v3591
  %v3597 = vld [vmem:[%s1 + $0x88] sm:$0xf]
  %v3598 = vld [vmem:[%s1 + $0x8c] sm:$0xf]
  %v3599 = vld [vmem:[%s1 + $0x90] sm:$0xf]
  %v3600 = vld [vmem:[%s1 + $0x94] sm:$0xf]
  %v3601 = vld [vmem:[%s1 + $0x98] sm:$0xf]
  %v3602 = vld [vmem:[%s1 + $0x9c] sm:$0xf]
  %v3603 = vld [vmem:[%s1 + $0xa0] sm:$0xf]
  %v3604 = vld [vmem:[%s1 + $0xa4] sm:$0xf]
  %v3605 = vld [vmem:[%s1 + $0xa8] sm:$0xf]
  %v3606 = vld [vmem:[%s1 + $0xac] sm:$0xf]
  %v3607 = vld [vmem:[%s1 + $0xb0] sm:$0xf]
  %v3608 = vld [vmem:[%s1 + $0xb4] sm:$0xf]
  %v3609 = vld [vmem:[%s2 + $0x6] sm:$0x1]
  %v3610 = vperm.slane %v3609, 0
  %v3623 = vunpack.c.l.b16 %v3597
  %v3624 = vunpack.c.l.b16 %v3598
  %v3625 = vunpack.c.l.b16 %v3599
  %v3626 = vunpack.c.l.b16 %v3600
  %v3627 = vunpack.c.l.b16 %v3601
  %v3628 = vunpack.c.l.b16 %v3602
  %v3629 = vunpack.c.l.b16 %v3603
  %v3630 = vunpack.c.l.b16 %v3604
  %v3631 = vunpack.c.l.b16 %v3605
  %v3632 = vunpack.c.l.b16 %v3606
  %v3633 = vunpack.c.l.b16 %v3607
  %v3634 = vunpack.c.l.b16 %v3608
  %v3635 = vpack.c.b16 %v3624, %v3623
  %v3636 = vpack.c.b16 %v3626, %v3625
  %v3637 = vpack.c.b16 %v3628, %v3627
  %v3638 = vpack.c.b16 %v3630, %v3629
  %v3639 = vpack.c.b16 %v3632, %v3631
  %v3640 = vpack.c.b16 %v3634, %v3633
  %v3648 = vsel %vm3280, %v3593, 0
  %v3651 = vsel %vm3280, %v3594, 0
  %v3654 = vsel %vm3280, %v3595, 0
  %v3657 = vsel %vm3280, %v3596, 0
  %3659 = vmatpush.bf16.msra.mxu0 0
  %3660 = vmatpush.bf16.msra.mxu0 0
  %3661 = vmatpush.bf16.msra.mxu0 %v3640
  %3662 = vmatpush.bf16.msra.mxu0 %v3639
  %3663 = vmatpush.bf16.msra.mxu0 %v3638
  %3664 = vmatpush.bf16.msra.mxu0 %v3637
  %3665 = vmatpush.bf16.msra.mxu0 %v3636
  %3666 = vmatpush.bf16.msra.mxu0 %v3635
  %3667 = vmatmul.bf16.gmra.mxu0 %v3648
  %v3668 = vpop.f32.mrf.mxu0
  %v3669 = vadd.f32 %v3610, %v3668
  %v3670 = vpop.f32.mrf.mxu0
  %v3671 = vadd.f32 %v3610, %v3670
  %3672 = vmatmul.bf16.gmra.mxu0 %v3651
  %v3673 = vpop.f32.mrf.mxu0
  %v3674 = vadd.f32 %v3610, %v3673
  %v3675 = vpop.f32.mrf.mxu0
  %v3676 = vadd.f32 %v3610, %v3675
  %3677 = vmatmul.bf16.gmra.mxu0 %v3654
  %v3678 = vpop.f32.mrf.mxu0
  %v3679 = vadd.f32 %v3610, %v3678
  %v3680 = vpop.f32.mrf.mxu0
  %v3681 = vadd.f32 %v3610, %v3680
  %3682 = vmatmul.bf16.gmra.mxu0 %v3657
  %v3683 = vpop.f32.mrf.mxu0
  %v3684 = vadd.f32 %v3610, %v3683
  %v3685 = vpop.f32.mrf.mxu0
  %v3686 = vadd.f32 %v3610, %v3685
  %3687 = vdwg.mxu0
  %v3688 = vmax.f32 %v3669, 0.0
  %v3689 = vmax.f32 %v3671, 0.0
  %v3690 = vmax.f32 %v3674, 0.0
  %v3691 = vmax.f32 %v3676, 0.0
  %v3692 = vmax.f32 %v3679, 0.0
  %v3693 = vmax.f32 %v3681, 0.0
  %v3694 = vmax.f32 %v3684, 0.0
  %v3695 = vmax.f32 %v3686, 0.0
  %v3696 = vpack.c.bf16 %v3404, %v3402
  %v3697 = vpack.c.bf16 %v3408, %v3406
  %v3698 = vpack.c.bf16 %v3412, %v3410
  %v3699 = vpack.c.bf16 %v3416, %v3414
  %v3700 = vld [vmem:[%s1 + $0x118] sm:$0xf]
  %v3701 = vld [vmem:[%s1 + $0x11c] sm:$0xf]
  %v3702 = vld [vmem:[%s1 + $0x120] sm:$0xf]
  %v3703 = vld [vmem:[%s1 + $0x124] sm:$0xf]
  %v3704 = vld [vmem:[%s2 + $0x8] sm:$0x1]
  %v3705 = vperm.slane %v3704, 0
  %v3710 = vunpack.c.l.b16 %v3700
  %v3711 = vunpack.c.l.b16 %v3701
  %v3712 = vunpack.c.l.b16 %v3702
  %v3713 = vunpack.c.l.b16 %v3703
  %v3714 = vpack.c.b16 %v3711, %v3710
  %v3715 = vpack.c.b16 %v3713, %v3712
  %v3719 = vsel %vm1176, %v3696, 0
  %v3722 = vsel %vm1176, %v3697, 0
  %v3725 = vsel %vm1176, %v3698, 0
  %v3728 = vsel %vm1176, %v3699, 0
  %3730 = vmatpush.bf16.msra.mxu0 0
  %3731 = vmatpush.bf16.msra.mxu0 0
  %3732 = vmatpush.bf16.msra.mxu0 0
  %3733 = vmatpush.bf16.msra.mxu0 0
  %3734 = vmatpush.bf16.msra.mxu0 0
  %3735 = vmatpush.bf16.msra.mxu0 0
  %3736 = vmatpush.bf16.msra.mxu0 %v3715
  %3737 = vmatpush.bf16.msra.mxu0 %v3714
  %3738 = vmatmul.bf16.gmra.mxu0 %v3719
  %v3739 = vpop.f32.mrf.mxu0
  %v3740 = vadd.f32 %v3705, %v3739
  %v3741 = vpop.f32.mrf.mxu0
  %v3742 = vadd.f32 %v3705, %v3741
  %3743 = vmatmul.bf16.gmra.mxu0 %v3722
  %v3744 = vpop.f32.mrf.mxu0
  %v3745 = vadd.f32 %v3705, %v3744
  %v3746 = vpop.f32.mrf.mxu0
  %v3747 = vadd.f32 %v3705, %v3746
  %3748 = vmatmul.bf16.gmra.mxu0 %v3725
  %v3749 = vpop.f32.mrf.mxu0
  %v3750 = vadd.f32 %v3705, %v3749
  %v3751 = vpop.f32.mrf.mxu0
  %v3752 = vadd.f32 %v3705, %v3751
  %3753 = vmatmul.bf16.gmra.mxu0 %v3728
  %v3754 = vpop.f32.mrf.mxu0
  %v3755 = vadd.f32 %v3705, %v3754
  %v3756 = vpop.f32.mrf.mxu0
  %v3757 = vadd.f32 %v3705, %v3756
  %3758 = vdwg.mxu0
  %v3767 = vrot.slane %v3688, 7
  %v3768 = vrot.slane %v3689, 7
  %v3769 = vsel %vm182, %v3767, %v3768
  %v3770 = vrot.slane %v3690, 7
  %v3771 = vsel %vm182, %v3768, %v3770
  %v3772 = vrot.slane %v3691, 7
  %v3773 = vsel %vm182, %v3770, %v3772
  %v3774 = vrot.slane %v3692, 7
  %v3775 = vsel %vm182, %v3772, %v3774
  %v3776 = vrot.slane %v3693, 7
  %v3777 = vsel %vm182, %v3774, %v3776
  %v3778 = vrot.slane %v3694, 7
  %v3779 = vsel %vm182, %v3776, %v3778
  %v3780 = vrot.slane %v3695, 7
  %v3781 = vsel %vm182, %v3778, %v3780
  %v3790 = vsel %vm182, 0.0, %v3767
  %v3791 = vmul.f32 %v3790, %v3476
  %v3792 = vmul.f32 %v3769, %v3481
  %v3793 = vmul.f32 %v3771, %v3486
  %v3794 = vmul.f32 %v3773, %v3491
  %v3795 = vmul.f32 %v3775, %v3496
  %v3796 = vmul.f32 %v3777, %v3501
  %v3797 = vmul.f32 %v3779, %v3506
  %v3798 = vmul.f32 %v3781, %v3511
  %v3799 = vrot.slane %v3688, 1
  %v3800 = vrot.slane %v3689, 1
  %v3801 = vsel %vm662, %v3799, %v3800
  %v3802 = vrot.slane %v3690, 1
  %v3803 = vsel %vm662, %v3800, %v3802
  %v3804 = vrot.slane %v3691, 1
  %v3805 = vsel %vm662, %v3802, %v3804
  %v3806 = vrot.slane %v3692, 1
  %v3807 = vsel %vm662, %v3804, %v3806
  %v3808 = vrot.slane %v3693, 1
  %v3809 = vsel %vm662, %v3806, %v3808
  %v3810 = vrot.slane %v3694, 1
  %v3811 = vsel %vm662, %v3808, %v3810
  %v3812 = vrot.slane %v3695, 1
  %v3813 = vsel %vm662, %v3810, %v3812
  %v3822 = vsel %vm662, %v3812, 0.0
  %3823 = vset.pattern.permute.xlu0 5
  %3824 = vperm.xlu0 %3823, %v3465
  %v3825 = vpop.permute.xlu0 %3824
  %3827 = vset.pattern.permute.xlu0 5
  %3828 = vperm.xlu0 %3827, %v3466
  %v3829 = vpop.permute.xlu0 %3828
  %3831 = vset.pattern.permute.xlu0 5
  %3832 = vperm.xlu0 %3831, %v3467
  %v3833 = vpop.permute.xlu0 %3832
  %3835 = vset.pattern.permute.xlu0 5
  %3836 = vperm.xlu0 %3835, %v3468
  %v3837 = vpop.permute.xlu0 %3836
  %3839 = vset.pattern.permute.xlu0 5
  %3840 = vperm.xlu0 %3839, %v3469
  %v3841 = vpop.permute.xlu0 %3840
  %3843 = vset.pattern.permute.xlu0 5
  %3844 = vperm.xlu0 %3843, %v3470
  %v3845 = vpop.permute.xlu0 %3844
  %3847 = vset.pattern.permute.xlu0 5
  %3848 = vperm.xlu0 %3847, %v3471
  %v3849 = vpop.permute.xlu0 %3848
  %3851 = vset.pattern.permute.xlu0 5
  %3852 = vperm.xlu0 %3851, %v3472
  %v3853 = vpop.permute.xlu0 %3852
  %v3855 = vmul.f32 %v3801, %v3825
  %v3856 = vmul.f32 %v3803, %v3829
  %v3857 = vmul.f32 %v3805, %v3833
  %v3858 = vmul.f32 %v3807, %v3837
  %v3859 = vmul.f32 %v3809, %v3841
  %v3860 = vmul.f32 %v3811, %v3845
  %v3861 = vmul.f32 %v3813, %v3849
  %v3862 = vmul.f32 %v3822, %v3853
  %3863 = vrot.lane.b32.xlu0 %v3688, 64
  %v3864 = vpop.permute.xlu0 %3863
  %3865 = vrot.lane.b32.xlu0 %v3689, 64
  %v3866 = vpop.permute.xlu0 %3865
  %3867 = vrot.lane.b32.xlu0 %v3690, 64
  %v3868 = vpop.permute.xlu0 %3867
  %3869 = vrot.lane.b32.xlu0 %v3691, 64
  %v3870 = vpop.permute.xlu0 %3869
  %3871 = vrot.lane.b32.xlu0 %v3692, 64
  %v3872 = vpop.permute.xlu0 %3871
  %3873 = vrot.lane.b32.xlu0 %v3693, 64
  %v3874 = vpop.permute.xlu0 %3873
  %3875 = vrot.lane.b32.xlu0 %v3694, 64
  %v3876 = vpop.permute.xlu0 %3875
  %3877 = vrot.lane.b32.xlu0 %v3695, 64
  %v3878 = vpop.permute.xlu0 %3877
  %v3887 = vsel %vm3205, %v3791, %v3864
  %v3888 = vsel %vm3205, %v3792, %v3866
  %v3889 = vsel %vm3205, %v3793, %v3868
  %v3890 = vsel %vm3205, %v3794, %v3870
  %v3891 = vsel %vm3205, %v3795, %v3872
  %v3892 = vsel %vm3205, %v3796, %v3874
  %v3893 = vsel %vm3205, %v3797, %v3876
  %v3894 = vsel %vm3205, %v3798, %v3878
  %v3895 = vpack.c.bf16 %v3888, %v3887
  %v3896 = vpack.c.bf16 %v3856, %v3855
  %v3897 = vpack.c.bf16 %v3890, %v3889
  %v3898 = vpack.c.bf16 %v3858, %v3857
  %v3899 = vpack.c.bf16 %v3892, %v3891
  %v3900 = vpack.c.bf16 %v3860, %v3859
  %v3901 = vpack.c.bf16 %v3894, %v3893
  %v3902 = vpack.c.bf16 %v3862, %v3861
  %v3903 = vld [vmem:[%s1 + $0xb8] sm:$0xf]
  %v3904 = vld [vmem:[%s1 + $0xbc] sm:$0xf]
  %v3905 = vld [vmem:[%s1 + $0xc0] sm:$0xf]
  %v3906 = vld [vmem:[%s1 + $0xc4] sm:$0xf]
  %v3907 = vld [vmem:[%s1 + $0xc8] sm:$0xf]
  %v3908 = vld [vmem:[%s1 + $0xcc] sm:$0xf]
  %v3909 = vld [vmem:[%s1 + $0xd0] sm:$0xf]
  %v3910 = vld [vmem:[%s1 + $0xd4] sm:$0xf]
  %v3911 = vld [vmem:[%s1 + $0xd8] sm:$0xf]
  %v3912 = vld [vmem:[%s1 + $0xdc] sm:$0xf]
  %v3913 = vld [vmem:[%s1 + $0xe0] sm:$0xf]
  %v3914 = vld [vmem:[%s1 + $0xe4] sm:$0xf]
  %v3915 = vld [vmem:[%s1 + $0xe8] sm:$0xf]
  %v3916 = vld [vmem:[%s1 + $0xec] sm:$0xf]
  %v3917 = vld [vmem:[%s1 + $0xf0] sm:$0xf]
  %v3918 = vld [vmem:[%s1 + $0xf4] sm:$0xf]
  %v3919 = vld [vmem:[%s1 + $0xf8] sm:$0xf]
  %v3920 = vld [vmem:[%s1 + $0xfc] sm:$0xf]
  %v3921 = vld [vmem:[%s1 + $0x100] sm:$0xf]
  %v3922 = vld [vmem:[%s1 + $0x104] sm:$0xf]
  %v3923 = vld [vmem:[%s1 + $0x108] sm:$0xf]
  %v3924 = vld [vmem:[%s1 + $0x10c] sm:$0xf]
  %v3925 = vld [vmem:[%s1 + $0x110] sm:$0xf]
  %v3926 = vld [vmem:[%s1 + $0x114] sm:$0xf]
  %v3927 = vld [vmem:[%s2 + $0x7] sm:$0x1]
  %v3928 = vperm.slane %v3927, 0
  %v3953 = vunpack.c.l.b16 %v3903
  %v3954 = vunpack.c.l.b16 %v3904
  %v3955 = vunpack.c.l.b16 %v3905
  %v3956 = vunpack.c.l.b16 %v3906
  %v3957 = vunpack.c.l.b16 %v3907
  %v3958 = vunpack.c.l.b16 %v3908
  %v3959 = vunpack.c.l.b16 %v3909
  %v3960 = vunpack.c.l.b16 %v3910
  %v3961 = vunpack.c.l.b16 %v3911
  %v3962 = vunpack.c.l.b16 %v3912
  %v3963 = vunpack.c.l.b16 %v3913
  %v3964 = vunpack.c.l.b16 %v3914
  %v3965 = vunpack.c.l.b16 %v3915
  %v3966 = vunpack.c.l.b16 %v3916
  %v3967 = vunpack.c.l.b16 %v3917
  %v3968 = vunpack.c.l.b16 %v3918
  %v3969 = vunpack.c.l.b16 %v3919
  %v3970 = vunpack.c.l.b16 %v3920
  %v3971 = vunpack.c.l.b16 %v3921
  %v3972 = vunpack.c.l.b16 %v3922
  %v3973 = vunpack.c.l.b16 %v3923
  %v3974 = vunpack.c.l.b16 %v3924
  %v3975 = vunpack.c.l.b16 %v3925
  %v3976 = vunpack.c.l.b16 %v3926
  %v3977 = vpack.c.b16 %v3954, %v3953
  %v3978 = vpack.c.b16 %v3956, %v3955
  %v3979 = vpack.c.b16 %v3958, %v3957
  %v3980 = vpack.c.b16 %v3960, %v3959
  %v3981 = vpack.c.b16 %v3962, %v3961
  %v3982 = vpack.c.b16 %v3964, %v3963
  %v3983 = vpack.c.b16 %v3966, %v3965
  %v3984 = vpack.c.b16 %v3968, %v3967
  %v3985 = vpack.c.b16 %v3970, %v3969
  %v3986 = vpack.c.b16 %v3972, %v3971
  %v3987 = vpack.c.b16 %v3974, %v3973
  %v3988 = vpack.c.b16 %v3976, %v3975
  %v4002 = vsel %vm3205, %v3896, 0
  %v4005 = vsel %vm3205, %v3898, 0
  %v4008 = vsel %vm3205, %v3900, 0
  %v4011 = vsel %vm3205, %v3902, 0
  %4013 = vmatpush.bf16.msra.mxu0 %v3984
  %4014 = vmatpush.bf16.msra.mxu0 %v3983
  %4015 = vmatpush.bf16.msra.mxu0 %v3982
  %4016 = vmatpush.bf16.msra.mxu0 %v3981
  %4017 = vmatpush.bf16.msra.mxu0 %v3980
  %4018 = vmatpush.bf16.msra.mxu0 %v3979
  %4019 = vmatpush.bf16.msra.mxu0 %v3978
  %4020 = vmatpush.bf16.msra.mxu0 %v3977
  %4021 = vmatmul.bf16.gmra.mxu0 %v3895
  %v4022 = vpop.f32.mrf.mxu0
  %v4023 = vadd.f32 %v3928, %v4022
  %v4024 = vpop.f32.mrf.mxu0
  %v4025 = vadd.f32 %v3928, %v4024
  %4026 = vmatmul.bf16.gmra.mxu0 %v3897
  %v4027 = vpop.f32.mrf.mxu0
  %v4028 = vadd.f32 %v3928, %v4027
  %v4029 = vpop.f32.mrf.mxu0
  %v4030 = vadd.f32 %v3928, %v4029
  %4031 = vmatmul.bf16.gmra.mxu0 %v3899
  %v4032 = vpop.f32.mrf.mxu0
  %v4033 = vadd.f32 %v3928, %v4032
  %v4034 = vpop.f32.mrf.mxu0
  %v4035 = vadd.f32 %v3928, %v4034
  %4036 = vmatmul.bf16.gmra.mxu0 %v3901
  %v4037 = vpop.f32.mrf.mxu0
  %v4038 = vadd.f32 %v3928, %v4037
  %v4039 = vpop.f32.mrf.mxu0
  %v4040 = vadd.f32 %v3928, %v4039
  %4041 = vdwg.mxu0
  %4042 = vmatpush.bf16.msra.mxu0 0
  %4043 = vmatpush.bf16.msra.mxu0 0
  %4044 = vmatpush.bf16.msra.mxu0 0
  %4045 = vmatpush.bf16.msra.mxu0 0
  %4046 = vmatpush.bf16.msra.mxu0 %v3988
  %4047 = vmatpush.bf16.msra.mxu0 %v3987
  %4048 = vmatpush.bf16.msra.mxu0 %v3986
  %4049 = vmatpush.bf16.msra.mxu0 %v3985
  %4050 = vmatmul.bf16.gmra.mxu0 %v4002
  %v4051 = vpop.f32.mrf.mxu0
  %v4052 = vadd.f32 %v4023, %v4051
  %v4053 = vpop.f32.mrf.mxu0
  %v4054 = vadd.f32 %v4025, %v4053
  %4055 = vmatmul.bf16.gmra.mxu0 %v4005
  %v4056 = vpop.f32.mrf.mxu0
  %v4057 = vadd.f32 %v4028, %v4056
  %v4058 = vpop.f32.mrf.mxu0
  %v4059 = vadd.f32 %v4030, %v4058
  %4060 = vmatmul.bf16.gmra.mxu0 %v4008
  %v4061 = vpop.f32.mrf.mxu0
  %v4062 = vadd.f32 %v4033, %v4061
  %v4063 = vpop.f32.mrf.mxu0
  %v4064 = vadd.f32 %v4035, %v4063
  %4065 = vmatmul.bf16.gmra.mxu0 %v4011
  %v4066 = vpop.f32.mrf.mxu0
  %v4067 = vadd.f32 %v4038, %v4066
  %v4068 = vpop.f32.mrf.mxu0
  %v4069 = vadd.f32 %v4040, %v4068
  %4070 = vdwg.mxu0
  %v4071 = vadd.f32 %v4052, %v3740
  %v4072 = vadd.f32 %v4054, %v3742
  %v4073 = vadd.f32 %v4057, %v3745
  %v4074 = vadd.f32 %v4059, %v3747
  %v4075 = vadd.f32 %v4062, %v3750
  %v4076 = vadd.f32 %v4064, %v3752
  %v4077 = vadd.f32 %v4067, %v3755
  %v4078 = vadd.f32 %v4069, %v3757
  %v4079 = vmax.f32 %v4071, 0.0
  %v4080 = vmax.f32 %v4072, 0.0
  %v4081 = vmax.f32 %v4073, 0.0
  %v4082 = vmax.f32 %v4074, 0.0
  %v4083 = vmax.f32 %v4075, 0.0
  %v4084 = vmax.f32 %v4076, 0.0
  %v4085 = vmax.f32 %v4077, 0.0
  %v4086 = vmax.f32 %v4078, 0.0
  %v4087 = vpack.c.bf16 %v4080, %v4079
  %v4088 = vpack.c.bf16 %v4082, %v4081
  %v4089 = vpack.c.bf16 %v4084, %v4083
  %v4090 = vpack.c.bf16 %v4086, %v4085
  %v4091 = vld [vmem:[%s1 + $0x128] sm:$0xf]
  %v4092 = vld [vmem:[%s1 + $0x12c] sm:$0xf]
  %v4095 = vunpack.c.l.b16 %v4091
  %v4096 = vunpack.c.l.b16 %v4092
  %v4097 = vpack.c.b16 %v4096, %v4095
  %v4099 = vsel %vm3205, %v4097, 0
  %4101 = vmatpush.bf16.msra.mxu0 0
  %4102 = vmatpush.bf16.msra.mxu0 0
  %4103 = vmatpush.bf16.msra.mxu0 0
  %4104 = vmatpush.bf16.msra.mxu0 0
  %4105 = vmatpush.bf16.msra.mxu0 %v4090
  %4106 = vmatpush.bf16.msra.mxu0 %v4089
  %4107 = vmatpush.bf16.msra.mxu0 %v4088
  %4108 = vmatpush.bf16.msra.mxu0 %v4087
  %4109 = vmatmul.bf16.gmra.mxu0 %v4099
  %v4110 = vpop.f32.mrf.mxu0
  %v4111 = vadd.f32 0.0, %v4110
  %v4112 = vpop.f32.mrf.mxu0
  %v4113 = vadd.f32 0.0, %v4112
  %4114 = vdwg.mxu0
  %v4115 = vpack.c.bf16 %v4113, %v4111
  %v4116 = vld [vmem:[%s1 + $0x130] sm:$0xf]
  %v4117 = vld [vmem:[%s1 + $0x134] sm:$0xf]
  %v4118 = vld [vmem:[%s1 + $0x138] sm:$0xf]
  %v4119 = vld [vmem:[%s1 + $0x13c] sm:$0xf]
  %v4120 = vld [vmem:[%s1 + $0x140] sm:$0xf]
  %v4121 = vld [vmem:[%s1 + $0x144] sm:$0xf]
  %v4122 = vld [vmem:[%s1 + $0x148] sm:$0xf]
  %v4123 = vld [vmem:[%s1 + $0x14c] sm:$0xf]
  %v4124 = vld [vmem:[%s2 + $0x9] sm:$0x1]
  %v4125 = vperm.slane %v4124, 0
  %v4134 = vunpack.c.l.b16 %v4116
  %v4135 = vunpack.c.l.b16 %v4117
  %v4136 = vunpack.c.l.b16 %v4118
  %v4137 = vunpack.c.l.b16 %v4119
  %v4138 = vunpack.c.l.b16 %v4120
  %v4139 = vunpack.c.l.b16 %v4121
  %v4140 = vunpack.c.l.b16 %v4122
  %v4141 = vunpack.c.l.b16 %v4123
  %v4142 = vpack.c.b16 %v4135, %v4134
  %v4143 = vpack.c.b16 %v4137, %v4136
  %v4144 = vpack.c.b16 %v4139, %v4138
  %v4145 = vpack.c.b16 %v4141, %v4140
  %v4151 = vsel %vm3205, %v4115, 0
  %4153 = vmatpush.bf16.msra.mxu0 0
  %4154 = vmatpush.bf16.msra.mxu0 0
  %4155 = vmatpush.bf16.msra.mxu0 0
  %4156 = vmatpush.bf16.msra.mxu0 0
  %4157 = vmatpush.bf16.msra.mxu0 %v4145
  %4158 = vmatpush.bf16.msra.mxu0 %v4144
  %4159 = vmatpush.bf16.msra.mxu0 %v4143
  %4160 = vmatpush.bf16.msra.mxu0 %v4142
  %4161 = vmatmul.bf16.gmra.mxu0 %v4151
  %v4162 = vpop.f32.mrf.mxu0
  %v4163 = vadd.f32 %v4125, %v4162
  %v4164 = vpop.f32.mrf.mxu0
  %v4165 = vadd.f32 %v4125, %v4164
  %4166 = vdwg.mxu0
  %vm4167 = vcmask 31744
  %v4168 = vsel %vm4167, %v4163, -inf
  %4169 = vmax.xlane.f32.xlu0 %v4168
  %v4170 = vpop.xlane.xlu0 %4169
  %v4171 = vsel %vm4167, %v4165, -inf
  %4172 = vmax.xlane.f32.xlu0 %v4171
  %v4173 = vpop.xlane.xlu0 %4172
  %v4174 = vsub.f32 %v4163, %v4170
  %v4175 = vsub.f32 %v4165, %v4173
  %v4176 = vmul.f32 %v4174, 1.442695
  %v4177 = vpow.pop %v4176
  %v4178 = vmul.f32 %v4175, 1.442695
  %v4179 = vpow.pop %v4178
  %v4180 = vsel %vm4167, %v4177, 0.0
  %4181 = vadd.xlane.f32.xlu0 %v4180
  %v4182 = vpop.xlane.xlu0 %4181
  %v4183 = vsel %vm4167, %v4179, 0.0
  %4184 = vadd.xlane.f32.xlu0 %v4183
  %v4185 = vpop.xlane.xlu0 %4184
  %v4186 = vrcp.pop %v4182
  %v4187 = vmul.f32 %v4182, %v4186
  %v4188 = vsub.f32 1.0, %v4187
  %v4189 = vmul.f32 %v4186, %v4188
  %v4190 = vadd.f32 %v4186, %v4189
  %vm4191 = vweird.f32 %v4182
  %vm4192 = vweird.f32 %v4186
  %vm4193 = vmor %vm4191, %vm4192
  %v4194 = vsel %vm4193, %v4186, %v4190
  %v4195 = vand.u32 2147483647, %v4182
  %vm4196 = vcmp.eq.f32.partialorder %v4195, 8.507059e+37
  %v4197 = vand.u32 %v4182, 2147483648
  %v4198 = vor.u32 1.1754944e-38, %v4197
  %v4199 = vsel %vm4196, %v4198, %v4194
  %v4200 = vmul.f32 %v4177, %v4199
  %v4201 = vrcp.pop %v4185
  %v4202 = vmul.f32 %v4185, %v4201
  %v4203 = vsub.f32 1.0, %v4202
  %v4204 = vmul.f32 %v4201, %v4203
  %v4205 = vadd.f32 %v4201, %v4204
  %vm4206 = vweird.f32 %v4185
  %vm4207 = vweird.f32 %v4201
  %vm4208 = vmor %vm4206, %vm4207
  %v4209 = vsel %vm4208, %v4201, %v4205
  %v4210 = vand.u32 2147483647, %v4185
  %vm4211 = vcmp.eq.f32.partialorder %v4210, 8.507059e+37
  %v4212 = vand.u32 %v4185, 2147483648
  %v4213 = vor.u32 1.1754944e-38, %v4212
  %v4214 = vsel %vm4211, %v4213, %v4209
  %v4215 = vmul.f32 %v4179, %v4214
  %4216 = vst.msk [vmem:[%s4] sm:$0xff] %vm4167, %v4200
  %4217 = vst.msk [vmem:[%s4 + $0x8] sm:$0xff] %vm4167, %v4215
  // Predicated region
  $region18: #{tpu_custom_call.1} parent=0 // pred_check
    _
  $region19: #{tpu_custom_call.1} parent=0 // pred_check_branch
    %4219 = sbr.rel (0) target = $region21
  $region20: #{tpu_custom_call.1} parent=0 // pred_region
    _
  $region21: #{tpu_custom_call.1} parent=0 // pred_fallthru
    _
  // Predicated region
  $region22: #{tpu_custom_call.1} parent=0 // pred_check
    _
  $region23: #{tpu_custom_call.1} parent=0 // pred_check_branch
    %4221 = sbr.rel (0) target = $region25
  $region24: #{tpu_custom_call.1} parent=0 // pred_region
    _
  $region25: #{tpu_custom_call.1} parent=0 // pred_fallthru
    _

</llo_original>
